<compile_context>
chip_gen: v7x
topology: tpu7x:2x2x1
jax: 0.10.0
libtpu: 0.0.40
codegen_flags: <defaults>
</compile_context>

<pallas_src>
import functools

import jax
import jax.numpy as jnp
from jax.experimental import pallas as pl
from jax.experimental.pallas import tpu as pltpu


# ----------------------------------------------------------------------------
# One-time weight packing (outside the per-call graph)
# ----------------------------------------------------------------------------
def _conv_row_matrices(w_khwc, w_in, w_out):
    """Block-Toeplitz matrices for a 'valid' conv decomposed over kernel rows.

    w_khwc: (KH, KW, Cin_p, Cout_p), already zero-padded in the channel dims.
    Returns (KH, w_in*Cin_p, w_out*Cout_p) with
      M[kh, w*Cin_p + ci, ow*Cout_p + co] = w_khwc[kh, w - ow, ci, co]
    when 0 <= w - ow < KW, else 0.  Then
      conv_out[oh, ow*Cout_p + co] = sum_kh (x[oh+kh, :] @ M[kh])[ow*Cout_p + co].
    """
    kh_sz, kw_sz, cip, cop = w_khwc.shape
    w_idx = jnp.arange(w_in)[:, None]
    ow_idx = jnp.arange(w_out)[None, :]
    kw = w_idx - ow_idx
    valid = (kw >= 0) & (kw < kw_sz)
    kw_c = jnp.clip(kw, 0, kw_sz - 1)
    m = w_khwc[:, kw_c, :, :]                                  # (KH, w_in, w_out, Cip, Cop)
    m = jnp.where(valid[None, :, :, None, None], m, 0.0)
    m = jnp.transpose(m, (0, 1, 3, 2, 4))                      # (KH, w_in, Cip, w_out, Cop)
    return m.reshape(kh_sz, w_in * cip, w_out * cop).astype(jnp.float32)


def _bias_lanes(b, cout_p, w_out):
    """Bias replicated into the (ow, oc) lane layout, zero-padded channels."""
    bp = jnp.pad(b.astype(jnp.float32), (0, cout_p - b.shape[0]))
    return jnp.tile(bp, (w_out,)).reshape(1, w_out * cout_p)


def _pool_w_matrix(w_in, cp):
    """Right-multiplication matrix: averages W pairs, keeps channels."""
    w_out = w_in // 2
    w_idx = jnp.arange(w_in)[:, None]
    pw_idx = jnp.arange(w_out)[None, :]
    sel = ((w_idx == 2 * pw_idx) | (w_idx == 2 * pw_idx + 1)).astype(jnp.float32)
    eye = jnp.eye(cp, dtype=jnp.float32)
    m = 0.5 * sel[:, None, :, None] * eye[None, :, None, :]
    return m.reshape(w_in * cp, w_out * cp)


def _pool_h_matrix(h_in):
    """Left-multiplication matrix: averages H (row) pairs."""
    h_out = h_in // 2
    ph_idx = jnp.arange(h_out)[:, None]
    h_idx = jnp.arange(h_in)[None, :]
    sel = ((h_idx == 2 * ph_idx) | (h_idx == 2 * ph_idx + 1)).astype(jnp.float32)
    return 0.5 * sel


def pack_params(p):
    """Convert PyTorch-layout LeNet params into the kernel's padded matrices."""
    f32 = jnp.float32
    # conv1: 1 -> 6 channels (out padded to 8 lanes per pixel)
    w1 = jnp.transpose(p["w1"].astype(f32), (2, 3, 1, 0))      # (5,5,1,6)
    w1 = jnp.pad(w1, ((0, 0), (0, 0), (0, 0), (0, 2)))         # (5,5,1,8)
    # conv2: 6 -> 16 channels (in padded to 8)
    w2 = jnp.transpose(p["w2"].astype(f32), (2, 3, 1, 0))      # (5,5,6,16)
    w2 = jnp.pad(w2, ((0, 0), (0, 0), (0, 2), (0, 0)))         # (5,5,8,16)
    # conv3: 16 -> 120 channels (out padded to 128); OH = OW = 1
    w3 = jnp.transpose(p["w3"].astype(f32), (2, 3, 1, 0))      # (5,5,16,120)
    w3 = jnp.pad(w3, ((0, 0), (0, 0), (0, 0), (0, 8)))         # (5,5,16,128)
    return {
        "m1": _conv_row_matrices(w1, 32, 28),                  # (5, 32, 224)
        "b1": _bias_lanes(p["b1"], 8, 28),                     # (1, 224)
        "pw1": _pool_w_matrix(28, 8),                          # (224, 112)
        "ph1": _pool_h_matrix(28),                             # (14, 28)
        "m2": _conv_row_matrices(w2, 14, 10),                  # (5, 112, 160)
        "b2": _bias_lanes(p["b2"], 16, 10),                    # (1, 160)
        "pw2": _pool_w_matrix(10, 16),                         # (160, 80)
        "ph2": _pool_h_matrix(10),                             # (5, 10)
        "m3": _conv_row_matrices(w3, 5, 1),                    # (5, 80, 128)
        "b3": _bias_lanes(p["b3"], 128, 1),                    # (1, 128)
        "wfc1": jnp.pad(p["wfc1"].astype(f32), ((0, 8), (0, 44))),   # (128, 128)
        "bfc1": jnp.pad(p["bfc1"].astype(f32), (0, 44)).reshape(1, 128),
        "wfc2": jnp.pad(p["wfc2"].astype(f32), ((0, 44), (0, 0))),   # (128, 10)
        "bfc2": p["bfc2"].astype(f32).reshape(1, 10),
    }


# ----------------------------------------------------------------------------
# The fused Pallas kernel: one grid step == one sample, full forward pass
# ----------------------------------------------------------------------------
def _lenet_kernel(x_ref, m1_ref, b1_ref, pw1_ref, ph1_ref,
                  m2_ref, b2_ref, pw2_ref, ph2_ref,
                  m3_ref, b3_ref, wfc1_ref, bfc1_ref, wfc2_ref, bfc2_ref,
                  out_ref, p1_s, p2_s):
    f32 = jnp.float32
    dot = functools.partial(jnp.dot, preferred_element_type=f32)

    # conv1 + ReLU: out[oh, ow*8+oc], shape (28, 224)
    acc = jnp.zeros((28, 224), f32)
    for kh in range(5):
        acc = acc + dot(x_ref[0, kh:kh + 28, :], m1_ref[kh])
    a1 = jnp.maximum(acc + b1_ref[...], 0.0)

    # avgpool 2x2 (stride 2) as two matmuls: W-pool then H-pool -> (14, 112)
    p1_s[...] = dot(ph1_ref[...], dot(a1, pw1_ref[...]))

    # conv2 + ReLU: (10, 160)
    acc = jnp.zeros((10, 160), f32)
    for kh in range(5):
        acc = acc + dot(p1_s[kh:kh + 10, :], m2_ref[kh])
    a2 = jnp.maximum(acc + b2_ref[...], 0.0)

    # avgpool 2x2 -> (5, 80)
    p2_s[...] = dot(ph2_ref[...], dot(a2, pw2_ref[...]))

    # conv3 (5x5 over a 5x5 map == dense 400 -> 120), padded to 128 lanes
    acc = jnp.zeros((1, 128), f32)
    for kh in range(5):
        acc = acc + dot(p2_s[kh:kh + 1, :], m3_ref[kh])
    feat = acc + b3_ref[...]                                   # no ReLU after conv3

    # fc1 + ReLU, fc2
    h = jnp.maximum(dot(feat, wfc1_ref[...]) + bfc1_ref[...], 0.0)   # (1, 128)
    logits = dot(h, wfc2_ref[...]) + bfc2_ref[...]                    # (1, 10)
    out_ref[0] = logits


@jax.jit
def lenet_forward(x_nchw, packed):
    N, C, H, W = x_nchw.shape
    assert (C, H, W) == (1, 32, 32), "LeNet expects (N, 1, 32, 32) input"
    xs = x_nchw.astype(jnp.float32).reshape(N, 32, 32)          # squeeze C=1 (metadata only)

    ops = (xs, packed["m1"], packed["b1"], packed["pw1"], packed["ph1"],
           packed["m2"], packed["b2"], packed["pw2"], packed["ph2"],
           packed["m3"], packed["b3"], packed["wfc1"], packed["bfc1"],
           packed["wfc2"], packed["bfc2"])

    def full_spec(a):
        nd = a.ndim
        return pl.BlockSpec(a.shape, lambda i: (0,) * nd)       # resident across the batch grid

    in_specs = [pl.BlockSpec((1, 32, 32), lambda i: (i, 0, 0))]
    in_specs += [full_spec(a) for a in ops[1:]]

    # Advisory cost hint for XLA's scheduler.
    macs = N * (5 * 28 * 32 * 224 + 28 * 224 * 112 + 14 * 28 * 112
                + 5 * 10 * 112 * 160 + 10 * 160 * 80 + 5 * 10 * 80
                + 5 * 80 * 128 + 128 * 128 + 128 * 10)
    bytes_acc = int(sum(int(a.size) * 4 for a in ops) + N * 10 * 4)
    cost = pl.CostEstimate(flops=2 * macs, transcendentals=0, bytes_accessed=bytes_acc)

    out = pl.pallas_call(
        _lenet_kernel,
        out_shape=jax.ShapeDtypeStruct((N, 1, 10), jnp.float32),
        grid_spec=pltpu.PrefetchScalarGridSpec(
            num_scalar_prefetch=0,
            grid=(N,),
            in_specs=in_specs,
            out_specs=pl.BlockSpec((1, 1, 10), lambda i: (i, 0, 0)),
            scratch_shapes=[pltpu.VMEM((14, 112), jnp.float32),   # pool1 output
                            pltpu.VMEM((5, 80), jnp.float32)],    # pool2 output
        ),
        compiler_params=pltpu.CompilerParams(
            dimension_semantics=("parallel",),
            vmem_limit_bytes=32 * 1024 * 1024,
        ),
        cost_estimate=cost,
    )(*ops)
    return out.reshape(N, 10)


# ----------------------------------------------------------------------------
# Pure-JAX reference (mirrors the PyTorch module) and synthetic parameters
# ----------------------------------------------------------------------------
def lenet_reference(x_nchw, p):
    def conv(x, w, b):
        y = jax.lax.conv_general_dilated(
            x, w, (1, 1), "VALID", dimension_numbers=("NCHW", "OIHW", "NCHW")
        )
        return y + b.reshape(1, -1, 1, 1)

    def pool(x):
        N, C, H, W = x.shape
        return x.reshape(N, C, H // 2, 2, W // 2, 2).mean(axis=(3, 5))

    x = jax.nn.relu(conv(x_nchw, p["w1"], p["b1"]))
    x = pool(x)
    x = jax.nn.relu(conv(x, p["w2"], p["b2"]))
    x = pool(x)
    x = conv(x, p["w3"], p["b3"])
    x = x.reshape(x.shape[0], -1)
    x = jax.nn.relu(x @ p["wfc1"] + p["bfc1"])
    x = x @ p["wfc2"] + p["bfc2"]
    return x


def init_params(key):
    """Deterministic synthetic parameters matching the PyTorch module shapes."""
    ks = jax.random.split(key, 10)

    def w(k, shape, fan_in):
        return (jax.random.normal(k, shape, jnp.float32) / jnp.sqrt(fan_in)).astype(
            jnp.float32
        )

    return {
        # conv weights in PyTorch (OC, IC, KH, KW) layout
        "w1": w(ks[0], (6, 1, 5, 5), 1 * 5 * 5),
        "b1": w(ks[1], (6,), 1 * 5 * 5),
        "w2": w(ks[2], (16, 6, 5, 5), 6 * 5 * 5),
        "b2": w(ks[3], (16,), 6 * 5 * 5),
        "w3": w(ks[4], (120, 16, 5, 5), 16 * 5 * 5),
        "b3": w(ks[5], (120,), 16 * 5 * 5),
        # linear weights stored as (in, out)
        "wfc1": w(ks[6], (120, 84), 120),
        "bfc1": w(ks[7], (84,), 120),
        "wfc2": w(ks[8], (84, 10), 84),
        "bfc2": w(ks[9], (10,), 84),
    }


if __name__ == "__main__":
    key = jax.random.PRNGKey(0)
    k_x, k_p = jax.random.split(key)

    # Small batch; spatial/channel sizes are fixed by the LeNet architecture.
    x = jax.random.normal(k_x, (2, 1, 32, 32), jnp.float32)    # NCHW like PyTorch
    params = init_params(k_p)
    packed = pack_params(params)                               # one-time weight packing

    out = jax.block_until_ready(lenet_forward(x, packed))
    ref = jax.block_until_ready(lenet_reference(x, params))

    assert out.shape == (2, 10), out.shape
    assert jnp.allclose(out, ref, rtol=2e-3, atol=2e-3), float(
        jnp.max(jnp.abs(out - ref))
    )
    print("KERNEL_OK")
</pallas_src>

<mosaic_0001>
module attributes {stable_mosaic.version = 11 : i64} {
  func.func @_lenet_kernel(%arg0: i32, %arg1: memref<1x32x32xf32, #tpu.memory_space<vmem>>, %arg2: memref<5x32x224xf32, #tpu.memory_space<vmem>>, %arg3: memref<1x224xf32, #tpu.memory_space<vmem>>, %arg4: memref<224x112xf32, #tpu.memory_space<vmem>>, %arg5: memref<14x28xf32, #tpu.memory_space<vmem>>, %arg6: memref<5x112x160xf32, #tpu.memory_space<vmem>>, %arg7: memref<1x160xf32, #tpu.memory_space<vmem>>, %arg8: memref<160x80xf32, #tpu.memory_space<vmem>>, %arg9: memref<5x10xf32, #tpu.memory_space<vmem>>, %arg10: memref<5x80x128xf32, #tpu.memory_space<vmem>>, %arg11: memref<1x128xf32, #tpu.memory_space<vmem>>, %arg12: memref<128x128xf32, #tpu.memory_space<vmem>>, %arg13: memref<1x128xf32, #tpu.memory_space<vmem>>, %arg14: memref<128x10xf32, #tpu.memory_space<vmem>>, %arg15: memref<1x10xf32, #tpu.memory_space<vmem>>, %arg16: memref<1x1x10xf32, #tpu.memory_space<vmem>>, %arg17: memref<14x112xf32, #tpu.memory_space<vmem>>, %arg18: memref<5x80xf32, #tpu.memory_space<vmem>>) attributes {dimension_semantics = [#tpu.dimension_semantics<parallel>], iteration_bounds = array<i64: 2>, scalar_prefetch = 0 : i64, scratch_operands = 2 : i64, tpu.core_type = #tpu.core_type<tc>, window_params = [{transform_indices = @transform_0, window_bounds = array<i64: 1, 32, 32>}, {pipeline_mode = #tpu.pipeline_mode<synchronous>, transform_indices = @transform_1, window_bounds = array<i64: 5, 32, 224>}, {pipeline_mode = #tpu.pipeline_mode<synchronous>, transform_indices = @transform_2, window_bounds = array<i64: 1, 224>}, {pipeline_mode = #tpu.pipeline_mode<synchronous>, transform_indices = @transform_3, window_bounds = array<i64: 224, 112>}, {pipeline_mode = #tpu.pipeline_mode<synchronous>, transform_indices = @transform_4, window_bounds = array<i64: 14, 28>}, {pipeline_mode = #tpu.pipeline_mode<synchronous>, transform_indices = @transform_5, window_bounds = array<i64: 5, 112, 160>}, {pipeline_mode = #tpu.pipeline_mode<synchronous>, transform_indices = @transform_6, window_bounds = array<i64: 1, 160>}, {pipeline_mode = #tpu.pipeline_mode<synchronous>, transform_indices = @transform_7, window_bounds = array<i64: 160, 80>}, {pipeline_mode = #tpu.pipeline_mode<synchronous>, transform_indices = @transform_8, window_bounds = array<i64: 5, 10>}, {pipeline_mode = #tpu.pipeline_mode<synchronous>, transform_indices = @transform_9, window_bounds = array<i64: 5, 80, 128>}, {pipeline_mode = #tpu.pipeline_mode<synchronous>, transform_indices = @transform_10, window_bounds = array<i64: 1, 128>}, {pipeline_mode = #tpu.pipeline_mode<synchronous>, transform_indices = @transform_11, window_bounds = array<i64: 128, 128>}, {pipeline_mode = #tpu.pipeline_mode<synchronous>, transform_indices = @transform_12, window_bounds = array<i64: 1, 128>}, {pipeline_mode = #tpu.pipeline_mode<synchronous>, transform_indices = @transform_13, window_bounds = array<i64: 128, 10>}, {pipeline_mode = #tpu.pipeline_mode<synchronous>, transform_indices = @transform_14, window_bounds = array<i64: 1, 10>}, {transform_indices = @transform_15, window_bounds = array<i64: 1, 1, 10>}]} {
    %cst = arith.constant 0.000000e+00 : f32
    %0 = vector.broadcast %cst : f32 to vector<28x224xf32>
    %c0 = arith.constant 0 : index
    %c0_0 = arith.constant 0 : index
    %c0_1 = arith.constant 0 : index
    %1 = vector.load %arg1[%c0, %c0_0, %c0_1] : memref<1x32x32xf32, #tpu.memory_space<vmem>>, vector<1x28x32xf32>
    %2 = vector.shape_cast %1 : vector<1x28x32xf32> to vector<28x32xf32>
    %c0_2 = arith.constant 0 : index
    %c0_3 = arith.constant 0 : index
    %c0_4 = arith.constant 0 : index
    %3 = vector.load %arg2[%c0_2, %c0_3, %c0_4] : memref<5x32x224xf32, #tpu.memory_space<vmem>>, vector<1x32x224xf32>
    %4 = vector.shape_cast %3 : vector<1x32x224xf32> to vector<32x224xf32>
    %cst_5 = arith.constant dense<0.000000e+00> : vector<28x224xf32>
    %5 = tpu.matmul %2, %4, %cst_5 {dimension_numbers = #tpu.dot_dimension_numbers<[1], [0], [0], [1], [0, 0, 1, 1], [], []>} : vector<28x32xf32>, vector<32x224xf32>, vector<28x224xf32> -> vector<28x224xf32>
    %6 = arith.addf %0, %5 : vector<28x224xf32>
    %c0_6 = arith.constant 0 : index
    %c1 = arith.constant 1 : index
    %c0_7 = arith.constant 0 : index
    %7 = vector.load %arg1[%c0_6, %c1, %c0_7] : memref<1x32x32xf32, #tpu.memory_space<vmem>>, vector<1x28x32xf32>
    %8 = vector.shape_cast %7 : vector<1x28x32xf32> to vector<28x32xf32>
    %c1_8 = arith.constant 1 : index
    %c0_9 = arith.constant 0 : index
    %c0_10 = arith.constant 0 : index
    %9 = vector.load %arg2[%c1_8, %c0_9, %c0_10] : memref<5x32x224xf32, #tpu.memory_space<vmem>>, vector<1x32x224xf32>
    %10 = vector.shape_cast %9 : vector<1x32x224xf32> to vector<32x224xf32>
    %cst_11 = arith.constant dense<0.000000e+00> : vector<28x224xf32>
    %11 = tpu.matmul %8, %10, %cst_11 {dimension_numbers = #tpu.dot_dimension_numbers<[1], [0], [0], [1], [0, 0, 1, 1], [], []>} : vector<28x32xf32>, vector<32x224xf32>, vector<28x224xf32> -> vector<28x224xf32>
    %12 = arith.addf %6, %11 : vector<28x224xf32>
    %c0_12 = arith.constant 0 : index
    %c2 = arith.constant 2 : index
    %c0_13 = arith.constant 0 : index
    %13 = vector.load %arg1[%c0_12, %c2, %c0_13] : memref<1x32x32xf32, #tpu.memory_space<vmem>>, vector<1x28x32xf32>
    %14 = vector.shape_cast %13 : vector<1x28x32xf32> to vector<28x32xf32>
    %c2_14 = arith.constant 2 : index
    %c0_15 = arith.constant 0 : index
    %c0_16 = arith.constant 0 : index
    %15 = vector.load %arg2[%c2_14, %c0_15, %c0_16] : memref<5x32x224xf32, #tpu.memory_space<vmem>>, vector<1x32x224xf32>
    %16 = vector.shape_cast %15 : vector<1x32x224xf32> to vector<32x224xf32>
    %cst_17 = arith.constant dense<0.000000e+00> : vector<28x224xf32>
    %17 = tpu.matmul %14, %16, %cst_17 {dimension_numbers = #tpu.dot_dimension_numbers<[1], [0], [0], [1], [0, 0, 1, 1], [], []>} : vector<28x32xf32>, vector<32x224xf32>, vector<28x224xf32> -> vector<28x224xf32>
    %18 = arith.addf %12, %17 : vector<28x224xf32>
    %c0_18 = arith.constant 0 : index
    %c3 = arith.constant 3 : index
    %c0_19 = arith.constant 0 : index
    %19 = vector.load %arg1[%c0_18, %c3, %c0_19] : memref<1x32x32xf32, #tpu.memory_space<vmem>>, vector<1x28x32xf32>
    %20 = vector.shape_cast %19 : vector<1x28x32xf32> to vector<28x32xf32>
    %c3_20 = arith.constant 3 : index
    %c0_21 = arith.constant 0 : index
    %c0_22 = arith.constant 0 : index
    %21 = vector.load %arg2[%c3_20, %c0_21, %c0_22] : memref<5x32x224xf32, #tpu.memory_space<vmem>>, vector<1x32x224xf32>
    %22 = vector.shape_cast %21 : vector<1x32x224xf32> to vector<32x224xf32>
    %cst_23 = arith.constant dense<0.000000e+00> : vector<28x224xf32>
    %23 = tpu.matmul %20, %22, %cst_23 {dimension_numbers = #tpu.dot_dimension_numbers<[1], [0], [0], [1], [0, 0, 1, 1], [], []>} : vector<28x32xf32>, vector<32x224xf32>, vector<28x224xf32> -> vector<28x224xf32>
    %24 = arith.addf %18, %23 : vector<28x224xf32>
    %c0_24 = arith.constant 0 : index
    %c4 = arith.constant 4 : index
    %c0_25 = arith.constant 0 : index
    %25 = vector.load %arg1[%c0_24, %c4, %c0_25] : memref<1x32x32xf32, #tpu.memory_space<vmem>>, vector<1x28x32xf32>
    %26 = vector.shape_cast %25 : vector<1x28x32xf32> to vector<28x32xf32>
    %c4_26 = arith.constant 4 : index
    %c0_27 = arith.constant 0 : index
    %c0_28 = arith.constant 0 : index
    %27 = vector.load %arg2[%c4_26, %c0_27, %c0_28] : memref<5x32x224xf32, #tpu.memory_space<vmem>>, vector<1x32x224xf32>
    %28 = vector.shape_cast %27 : vector<1x32x224xf32> to vector<32x224xf32>
    %cst_29 = arith.constant dense<0.000000e+00> : vector<28x224xf32>
    %29 = tpu.matmul %26, %28, %cst_29 {dimension_numbers = #tpu.dot_dimension_numbers<[1], [0], [0], [1], [0, 0, 1, 1], [], []>} : vector<28x32xf32>, vector<32x224xf32>, vector<28x224xf32> -> vector<28x224xf32>
    %30 = arith.addf %24, %29 : vector<28x224xf32>
    %c0_30 = arith.constant 0 : index
    %c0_31 = arith.constant 0 : index
    %31 = vector.load %arg3[%c0_30, %c0_31] : memref<1x224xf32, #tpu.memory_space<vmem>>, vector<1x224xf32>
    %32 = vector.broadcast %31 : vector<1x224xf32> to vector<28x224xf32>
    %33 = arith.addf %30, %32 : vector<28x224xf32>
    %cst_32 = arith.constant 0.000000e+00 : f32
    %34 = vector.broadcast %cst_32 : f32 to vector<28x224xf32>
    %35 = arith.maximumf %33, %34 : vector<28x224xf32>
    %c0_33 = arith.constant 0 : index
    %c0_34 = arith.constant 0 : index
    %36 = vector.load %arg5[%c0_33, %c0_34] : memref<14x28xf32, #tpu.memory_space<vmem>>, vector<14x28xf32>
    %c0_35 = arith.constant 0 : index
    %c0_36 = arith.constant 0 : index
    %37 = vector.load %arg4[%c0_35, %c0_36] : memref<224x112xf32, #tpu.memory_space<vmem>>, vector<224x112xf32>
    %cst_37 = arith.constant dense<0.000000e+00> : vector<28x112xf32>
    %38 = tpu.matmul %35, %37, %cst_37 {dimension_numbers = #tpu.dot_dimension_numbers<[1], [0], [0], [1], [0, 0, 1, 1], [], []>} : vector<28x224xf32>, vector<224x112xf32>, vector<28x112xf32> -> vector<28x112xf32>
    %cst_38 = arith.constant dense<0.000000e+00> : vector<14x112xf32>
    %39 = tpu.matmul %36, %38, %cst_38 {dimension_numbers = #tpu.dot_dimension_numbers<[1], [0], [0], [1], [0, 0, 1, 1], [], []>} : vector<14x28xf32>, vector<28x112xf32>, vector<14x112xf32> -> vector<14x112xf32>
    %c0_39 = arith.constant 0 : index
    %c0_40 = arith.constant 0 : index
    %40 = vector.load %arg17[%c0_39, %c0_40] : memref<14x112xf32, #tpu.memory_space<vmem>>, vector<14x112xf32>
    tpu.vector_store %arg17[%c0_39, %c0_40], %39 {strides = array<i32>} : memref<14x112xf32, #tpu.memory_space<vmem>>, vector<14x112xf32>,
    %cst_41 = arith.constant 0.000000e+00 : f32
    %41 = vector.broadcast %cst_41 : f32 to vector<10x160xf32>
    %c0_42 = arith.constant 0 : index
    %c0_43 = arith.constant 0 : index
    %42 = vector.load %arg17[%c0_42, %c0_43] : memref<14x112xf32, #tpu.memory_space<vmem>>, vector<10x112xf32>
    %c0_44 = arith.constant 0 : index
    %c0_45 = arith.constant 0 : index
    %c0_46 = arith.constant 0 : index
    %43 = vector.load %arg6[%c0_44, %c0_45, %c0_46] : memref<5x112x160xf32, #tpu.memory_space<vmem>>, vector<1x112x160xf32>
    %44 = vector.shape_cast %43 : vector<1x112x160xf32> to vector<112x160xf32>
    %cst_47 = arith.constant dense<0.000000e+00> : vector<10x160xf32>
    %45 = tpu.matmul %42, %44, %cst_47 {dimension_numbers = #tpu.dot_dimension_numbers<[1], [0], [0], [1], [0, 0, 1, 1], [], []>} : vector<10x112xf32>, vector<112x160xf32>, vector<10x160xf32> -> vector<10x160xf32>
    %46 = arith.addf %41, %45 : vector<10x160xf32>
    %c1_48 = arith.constant 1 : index
    %c0_49 = arith.constant 0 : index
    %47 = vector.load %arg17[%c1_48, %c0_49] : memref<14x112xf32, #tpu.memory_space<vmem>>, vector<10x112xf32>
    %c1_50 = arith.constant 1 : index
    %c0_51 = arith.constant 0 : index
    %c0_52 = arith.constant 0 : index
    %48 = vector.load %arg6[%c1_50, %c0_51, %c0_52] : memref<5x112x160xf32, #tpu.memory_space<vmem>>, vector<1x112x160xf32>
    %49 = vector.shape_cast %48 : vector<1x112x160xf32> to vector<112x160xf32>
    %cst_53 = arith.constant dense<0.000000e+00> : vector<10x160xf32>
    %50 = tpu.matmul %47, %49, %cst_53 {dimension_numbers = #tpu.dot_dimension_numbers<[1], [0], [0], [1], [0, 0, 1, 1], [], []>} : vector<10x112xf32>, vector<112x160xf32>, vector<10x160xf32> -> vector<10x160xf32>
    %51 = arith.addf %46, %50 : vector<10x160xf32>
    %c2_54 = arith.constant 2 : index
    %c0_55 = arith.constant 0 : index
    %52 = vector.load %arg17[%c2_54, %c0_55] : memref<14x112xf32, #tpu.memory_space<vmem>>, vector<10x112xf32>
    %c2_56 = arith.constant 2 : index
    %c0_57 = arith.constant 0 : index
    %c0_58 = arith.constant 0 : index
    %53 = vector.load %arg6[%c2_56, %c0_57, %c0_58] : memref<5x112x160xf32, #tpu.memory_space<vmem>>, vector<1x112x160xf32>
    %54 = vector.shape_cast %53 : vector<1x112x160xf32> to vector<112x160xf32>
    %cst_59 = arith.constant dense<0.000000e+00> : vector<10x160xf32>
    %55 = tpu.matmul %52, %54, %cst_59 {dimension_numbers = #tpu.dot_dimension_numbers<[1], [0], [0], [1], [0, 0, 1, 1], [], []>} : vector<10x112xf32>, vector<112x160xf32>, vector<10x160xf32> -> vector<10x160xf32>
    %56 = arith.addf %51, %55 : vector<10x160xf32>
    %c3_60 = arith.constant 3 : index
    %c0_61 = arith.constant 0 : index
    %57 = vector.load %arg17[%c3_60, %c0_61] : memref<14x112xf32, #tpu.memory_space<vmem>>, vector<10x112xf32>
    %c3_62 = arith.constant 3 : index
    %c0_63 = arith.constant 0 : index
    %c0_64 = arith.constant 0 : index
    %58 = vector.load %arg6[%c3_62, %c0_63, %c0_64] : memref<5x112x160xf32, #tpu.memory_space<vmem>>, vector<1x112x160xf32>
    %59 = vector.shape_cast %58 : vector<1x112x160xf32> to vector<112x160xf32>
    %cst_65 = arith.constant dense<0.000000e+00> : vector<10x160xf32>
    %60 = tpu.matmul %57, %59, %cst_65 {dimension_numbers = #tpu.dot_dimension_numbers<[1], [0], [0], [1], [0, 0, 1, 1], [], []>} : vector<10x112xf32>, vector<112x160xf32>, vector<10x160xf32> -> vector<10x160xf32>
    %61 = arith.addf %56, %60 : vector<10x160xf32>
    %c4_66 = arith.constant 4 : index
    %c0_67 = arith.constant 0 : index
    %62 = vector.load %arg17[%c4_66, %c0_67] : memref<14x112xf32, #tpu.memory_space<vmem>>, vector<10x112xf32>
    %c4_68 = arith.constant 4 : index
    %c0_69 = arith.constant 0 : index
    %c0_70 = arith.constant 0 : index
    %63 = vector.load %arg6[%c4_68, %c0_69, %c0_70] : memref<5x112x160xf32, #tpu.memory_space<vmem>>, vector<1x112x160xf32>
    %64 = vector.shape_cast %63 : vector<1x112x160xf32> to vector<112x160xf32>
    %cst_71 = arith.constant dense<0.000000e+00> : vector<10x160xf32>
    %65 = tpu.matmul %62, %64, %cst_71 {dimension_numbers = #tpu.dot_dimension_numbers<[1], [0], [0], [1], [0, 0, 1, 1], [], []>} : vector<10x112xf32>, vector<112x160xf32>, vector<10x160xf32> -> vector<10x160xf32>
    %66 = arith.addf %61, %65 : vector<10x160xf32>
    %c0_72 = arith.constant 0 : index
    %c0_73 = arith.constant 0 : index
    %67 = vector.load %arg7[%c0_72, %c0_73] : memref<1x160xf32, #tpu.memory_space<vmem>>, vector<1x160xf32>
    %68 = vector.broadcast %67 : vector<1x160xf32> to vector<10x160xf32>
    %69 = arith.addf %66, %68 : vector<10x160xf32>
    %cst_74 = arith.constant 0.000000e+00 : f32
    %70 = vector.broadcast %cst_74 : f32 to vector<10x160xf32>
    %71 = arith.maximumf %69, %70 : vector<10x160xf32>
    %c0_75 = arith.constant 0 : index
    %c0_76 = arith.constant 0 : index
    %72 = vector.load %arg9[%c0_75, %c0_76] : memref<5x10xf32, #tpu.memory_space<vmem>>, vector<5x10xf32>
    %c0_77 = arith.constant 0 : index
    %c0_78 = arith.constant 0 : index
    %73 = vector.load %arg8[%c0_77, %c0_78] : memref<160x80xf32, #tpu.memory_space<vmem>>, vector<160x80xf32>
    %cst_79 = arith.constant dense<0.000000e+00> : vector<10x80xf32>
    %74 = tpu.matmul %71, %73, %cst_79 {dimension_numbers = #tpu.dot_dimension_numbers<[1], [0], [0], [1], [0, 0, 1, 1], [], []>} : vector<10x160xf32>, vector<160x80xf32>, vector<10x80xf32> -> vector<10x80xf32>
    %cst_80 = arith.constant dense<0.000000e+00> : vector<5x80xf32>
    %75 = tpu.matmul %72, %74, %cst_80 {dimension_numbers = #tpu.dot_dimension_numbers<[1], [0], [0], [1], [0, 0, 1, 1], [], []>} : vector<5x10xf32>, vector<10x80xf32>, vector<5x80xf32> -> vector<5x80xf32>
    %c0_81 = arith.constant 0 : index
    %c0_82 = arith.constant 0 : index
    %76 = vector.load %arg18[%c0_81, %c0_82] : memref<5x80xf32, #tpu.memory_space<vmem>>, vector<5x80xf32>
    tpu.vector_store %arg18[%c0_81, %c0_82], %75 {strides = array<i32>} : memref<5x80xf32, #tpu.memory_space<vmem>>, vector<5x80xf32>,
    %cst_83 = arith.constant 0.000000e+00 : f32
    %77 = vector.broadcast %cst_83 : f32 to vector<1x128xf32>
    %c0_84 = arith.constant 0 : index
    %c0_85 = arith.constant 0 : index
    %78 = vector.load %arg18[%c0_84, %c0_85] : memref<5x80xf32, #tpu.memory_space<vmem>>, vector<1x80xf32>
    %c0_86 = arith.constant 0 : index
    %c0_87 = arith.constant 0 : index
    %c0_88 = arith.constant 0 : index
    %79 = vector.load %arg10[%c0_86, %c0_87, %c0_88] : memref<5x80x128xf32, #tpu.memory_space<vmem>>, vector<1x80x128xf32>
    %80 = vector.shape_cast %79 : vector<1x80x128xf32> to vector<80x128xf32>
    %cst_89 = arith.constant dense<0.000000e+00> : vector<1x128xf32>
    %81 = tpu.matmul %78, %80, %cst_89 {dimension_numbers = #tpu.dot_dimension_numbers<[1], [0], [0], [1], [0, 0, 1, 1], [], []>} : vector<1x80xf32>, vector<80x128xf32>, vector<1x128xf32> -> vector<1x128xf32>
    %82 = arith.addf %77, %81 : vector<1x128xf32>
    %c1_90 = arith.constant 1 : index
    %c0_91 = arith.constant 0 : index
    %83 = vector.load %arg18[%c1_90, %c0_91] : memref<5x80xf32, #tpu.memory_space<vmem>>, vector<1x80xf32>
    %c1_92 = arith.constant 1 : index
    %c0_93 = arith.constant 0 : index
    %c0_94 = arith.constant 0 : index
    %84 = vector.load %arg10[%c1_92, %c0_93, %c0_94] : memref<5x80x128xf32, #tpu.memory_space<vmem>>, vector<1x80x128xf32>
    %85 = vector.shape_cast %84 : vector<1x80x128xf32> to vector<80x128xf32>
    %cst_95 = arith.constant dense<0.000000e+00> : vector<1x128xf32>
    %86 = tpu.matmul %83, %85, %cst_95 {dimension_numbers = #tpu.dot_dimension_numbers<[1], [0], [0], [1], [0, 0, 1, 1], [], []>} : vector<1x80xf32>, vector<80x128xf32>, vector<1x128xf32> -> vector<1x128xf32>
    %87 = arith.addf %82, %86 : vector<1x128xf32>
    %c2_96 = arith.constant 2 : index
    %c0_97 = arith.constant 0 : index
    %88 = vector.load %arg18[%c2_96, %c0_97] : memref<5x80xf32, #tpu.memory_space<vmem>>, vector<1x80xf32>
    %c2_98 = arith.constant 2 : index
    %c0_99 = arith.constant 0 : index
    %c0_100 = arith.constant 0 : index
    %89 = vector.load %arg10[%c2_98, %c0_99, %c0_100] : memref<5x80x128xf32, #tpu.memory_space<vmem>>, vector<1x80x128xf32>
    %90 = vector.shape_cast %89 : vector<1x80x128xf32> to vector<80x128xf32>
    %cst_101 = arith.constant dense<0.000000e+00> : vector<1x128xf32>
    %91 = tpu.matmul %88, %90, %cst_101 {dimension_numbers = #tpu.dot_dimension_numbers<[1], [0], [0], [1], [0, 0, 1, 1], [], []>} : vector<1x80xf32>, vector<80x128xf32>, vector<1x128xf32> -> vector<1x128xf32>
    %92 = arith.addf %87, %91 : vector<1x128xf32>
    %c3_102 = arith.constant 3 : index
    %c0_103 = arith.constant 0 : index
    %93 = vector.load %arg18[%c3_102, %c0_103] : memref<5x80xf32, #tpu.memory_space<vmem>>, vector<1x80xf32>
    %c3_104 = arith.constant 3 : index
    %c0_105 = arith.constant 0 : index
    %c0_106 = arith.constant 0 : index
    %94 = vector.load %arg10[%c3_104, %c0_105, %c0_106] : memref<5x80x128xf32, #tpu.memory_space<vmem>>, vector<1x80x128xf32>
    %95 = vector.shape_cast %94 : vector<1x80x128xf32> to vector<80x128xf32>
    %cst_107 = arith.constant dense<0.000000e+00> : vector<1x128xf32>
    %96 = tpu.matmul %93, %95, %cst_107 {dimension_numbers = #tpu.dot_dimension_numbers<[1], [0], [0], [1], [0, 0, 1, 1], [], []>} : vector<1x80xf32>, vector<80x128xf32>, vector<1x128xf32> -> vector<1x128xf32>
    %97 = arith.addf %92, %96 : vector<1x128xf32>
    %c4_108 = arith.constant 4 : index
    %c0_109 = arith.constant 0 : index
    %98 = vector.load %arg18[%c4_108, %c0_109] : memref<5x80xf32, #tpu.memory_space<vmem>>, vector<1x80xf32>
    %c4_110 = arith.constant 4 : index
    %c0_111 = arith.constant 0 : index
    %c0_112 = arith.constant 0 : index
    %99 = vector.load %arg10[%c4_110, %c0_111, %c0_112] : memref<5x80x128xf32, #tpu.memory_space<vmem>>, vector<1x80x128xf32>
    %100 = vector.shape_cast %99 : vector<1x80x128xf32> to vector<80x128xf32>
    %cst_113 = arith.constant dense<0.000000e+00> : vector<1x128xf32>
    %101 = tpu.matmul %98, %100, %cst_113 {dimension_numbers = #tpu.dot_dimension_numbers<[1], [0], [0], [1], [0, 0, 1, 1], [], []>} : vector<1x80xf32>, vector<80x128xf32>, vector<1x128xf32> -> vector<1x128xf32>
    %102 = arith.addf %97, %101 : vector<1x128xf32>
    %c0_114 = arith.constant 0 : index
    %c0_115 = arith.constant 0 : index
    %103 = vector.load %arg11[%c0_114, %c0_115] : memref<1x128xf32, #tpu.memory_space<vmem>>, vector<1x128xf32>
    %104 = arith.addf %102, %103 : vector<1x128xf32>
    %c0_116 = arith.constant 0 : index
    %c0_117 = arith.constant 0 : index
    %105 = vector.load %arg12[%c0_116, %c0_117] : memref<128x128xf32, #tpu.memory_space<vmem>>, vector<128x128xf32>
    %cst_118 = arith.constant dense<0.000000e+00> : vector<1x128xf32>
    %106 = tpu.matmul %104, %105, %cst_118 {dimension_numbers = #tpu.dot_dimension_numbers<[1], [0], [0], [1], [0, 0, 1, 1], [], []>} : vector<1x128xf32>, vector<128x128xf32>, vector<1x128xf32> -> vector<1x128xf32>
    %c0_119 = arith.constant 0 : index
    %c0_120 = arith.constant 0 : index
    %107 = vector.load %arg13[%c0_119, %c0_120] : memref<1x128xf32, #tpu.memory_space<vmem>>, vector<1x128xf32>
    %108 = arith.addf %106, %107 : vector<1x128xf32>
    %cst_121 = arith.constant 0.000000e+00 : f32
    %109 = vector.broadcast %cst_121 : f32 to vector<1x128xf32>
    %110 = arith.maximumf %108, %109 : vector<1x128xf32>
    %c0_122 = arith.constant 0 : index
    %c0_123 = arith.constant 0 : index
    %111 = vector.load %arg14[%c0_122, %c0_123] : memref<128x10xf32, #tpu.memory_space<vmem>>, vector<128x10xf32>
    %cst_124 = arith.constant dense<0.000000e+00> : vector<1x10xf32>
    %112 = tpu.matmul %110, %111, %cst_124 {dimension_numbers = #tpu.dot_dimension_numbers<[1], [0], [0], [1], [0, 0, 1, 1], [], []>} : vector<1x128xf32>, vector<128x10xf32>, vector<1x10xf32> -> vector<1x10xf32>
    %c0_125 = arith.constant 0 : index
    %c0_126 = arith.constant 0 : index
    %113 = vector.load %arg15[%c0_125, %c0_126] : memref<1x10xf32, #tpu.memory_space<vmem>>, vector<1x10xf32>
    %114 = arith.addf %112, %113 : vector<1x10xf32>
    %c0_127 = arith.constant 0 : index
    %c0_128 = arith.constant 0 : index
    %c0_129 = arith.constant 0 : index
    %115 = vector.load %arg16[%c0_127, %c0_128, %c0_129] : memref<1x1x10xf32, #tpu.memory_space<vmem>>, vector<1x1x10xf32>
    %116 = vector.shape_cast %115 : vector<1x1x10xf32> to vector<1x10xf32>
    %117 = vector.shape_cast %114 : vector<1x10xf32> to vector<1x1x10xf32>
    tpu.vector_store %arg16[%c0_127, %c0_128, %c0_129], %117 {strides = array<i32>} : memref<1x1x10xf32, #tpu.memory_space<vmem>>, vector<1x1x10xf32>,
    return
  }
  func.func @transform_0(%arg0: i32) -> (i32, i32, i32) {
    %c0_i32 = arith.constant 0 : i32
    %c0_i32_0 = arith.constant 0 : i32
    %c0_i32_1 = arith.constant 0 : i32
    return %arg0, %c0_i32, %c0_i32_0 : i32, i32, i32
  }
  func.func @transform_1(%arg0: i32) -> (i32, i32, i32) {
    %c0_i32 = arith.constant 0 : i32
    %c0_i32_0 = arith.constant 0 : i32
    %c0_i32_1 = arith.constant 0 : i32
    %c0_i32_2 = arith.constant 0 : i32
    return %c0_i32, %c0_i32_0, %c0_i32_1 : i32, i32, i32
  }
  func.func @transform_2(%arg0: i32) -> (i32, i32) {
    %c0_i32 = arith.constant 0 : i32
    %c0_i32_0 = arith.constant 0 : i32
    %c0_i32_1 = arith.constant 0 : i32
    return %c0_i32, %c0_i32_0 : i32, i32
  }
  func.func @transform_3(%arg0: i32) -> (i32, i32) {
    %c0_i32 = arith.constant 0 : i32
    %c0_i32_0 = arith.constant 0 : i32
    %c0_i32_1 = arith.constant 0 : i32
    return %c0_i32, %c0_i32_0 : i32, i32
  }
  func.func @transform_4(%arg0: i32) -> (i32, i32) {
    %c0_i32 = arith.constant 0 : i32
    %c0_i32_0 = arith.constant 0 : i32
    %c0_i32_1 = arith.constant 0 : i32
    return %c0_i32, %c0_i32_0 : i32, i32
  }
  func.func @transform_5(%arg0: i32) -> (i32, i32, i32) {
    %c0_i32 = arith.constant 0 : i32
    %c0_i32_0 = arith.constant 0 : i32
    %c0_i32_1 = arith.constant 0 : i32
    %c0_i32_2 = arith.constant 0 : i32
    return %c0_i32, %c0_i32_0, %c0_i32_1 : i32, i32, i32
  }
  func.func @transform_6(%arg0: i32) -> (i32, i32) {
    %c0_i32 = arith.constant 0 : i32
    %c0_i32_0 = arith.constant 0 : i32
    %c0_i32_1 = arith.constant 0 : i32
    return %c0_i32, %c0_i32_0 : i32, i32
  }
  func.func @transform_7(%arg0: i32) -> (i32, i32) {
    %c0_i32 = arith.constant 0 : i32
    %c0_i32_0 = arith.constant 0 : i32
    %c0_i32_1 = arith.constant 0 : i32
    return %c0_i32, %c0_i32_0 : i32, i32
  }
  func.func @transform_8(%arg0: i32) -> (i32, i32) {
    %c0_i32 = arith.constant 0 : i32
    %c0_i32_0 = arith.constant 0 : i32
    %c0_i32_1 = arith.constant 0 : i32
    return %c0_i32, %c0_i32_0 : i32, i32
  }
  func.func @transform_9(%arg0: i32) -> (i32, i32, i32) {
    %c0_i32 = arith.constant 0 : i32
    %c0_i32_0 = arith.constant 0 : i32
    %c0_i32_1 = arith.constant 0 : i32
    %c0_i32_2 = arith.constant 0 : i32
    return %c0_i32, %c0_i32_0, %c0_i32_1 : i32, i32, i32
  }
  func.func @transform_10(%arg0: i32) -> (i32, i32) {
    %c0_i32 = arith.constant 0 : i32
    %c0_i32_0 = arith.constant 0 : i32
    %c0_i32_1 = arith.constant 0 : i32
    return %c0_i32, %c0_i32_0 : i32, i32
  }
  func.func @transform_11(%arg0: i32) -> (i32, i32) {
    %c0_i32 = arith.constant 0 : i32
    %c0_i32_0 = arith.constant 0 : i32
    %c0_i32_1 = arith.constant 0 : i32
    return %c0_i32, %c0_i32_0 : i32, i32
  }
  func.func @transform_12(%arg0: i32) -> (i32, i32) {
    %c0_i32 = arith.constant 0 : i32
    %c0_i32_0 = arith.constant 0 : i32
    %c0_i32_1 = arith.constant 0 : i32
    return %c0_i32, %c0_i32_0 : i32, i32
  }
  func.func @transform_13(%arg0: i32) -> (i32, i32) {
    %c0_i32 = arith.constant 0 : i32
    %c0_i32_0 = arith.constant 0 : i32
    %c0_i32_1 = arith.constant 0 : i32
    return %c0_i32, %c0_i32_0 : i32, i32
  }
  func.func @transform_14(%arg0: i32) -> (i32, i32) {
    %c0_i32 = arith.constant 0 : i32
    %c0_i32_0 = arith.constant 0 : i32
    %c0_i32_1 = arith.constant 0 : i32
    return %c0_i32, %c0_i32_0 : i32, i32
  }
  func.func @transform_15(%arg0: i32) -> (i32, i32, i32) {
    %c0_i32 = arith.constant 0 : i32
    %c0_i32_0 = arith.constant 0 : i32
    %c0_i32_1 = arith.constant 0 : i32
    return %arg0, %c0_i32, %c0_i32_0 : i32, i32, i32
  }
}

</mosaic_0001>

<llo_original>
// kernel: lenet_forward.1
$region0: #{lenet_forward.1}
  #allocation0 [shape = 'u32[]', space=smem, size = 0x4, offset = 0x4, fixed_abs, tag = 'smem constant byte address 0x4 - core index']
  #allocation1 [shape = 'u32[144,128]{1,0:T(1,128)}', space=vmem, size = 0x12000, scoped, tag = 'internal scratch']
  #allocation2 [shape = 'f32[14,112]{1,0:T(8,128)}', space=vmem, size = 0x2000, scoped, tag = 'scratch operand']
  #allocation3 [shape = 'f32[5,80]{1,0:T(8,128)}', space=vmem, size = 0x1000, scoped, tag = 'scratch operand']
  %s0 = inlined_call_operand.vmem [shape: f32[2,32,32], index: 0, kind: input, shape index: {}]
  %s1 = inlined_call_operand.vmem [shape: f32[5,32,224], index: 1, kind: input, shape index: {}]
  %s2 = inlined_call_operand.vmem [shape: f32[1,224], index: 2, kind: input, shape index: {}]
  %s3 = inlined_call_operand.vmem [shape: f32[224,112], index: 3, kind: input, shape index: {}]
  %s4 = inlined_call_operand.vmem [shape: f32[14,28], index: 4, kind: input, shape index: {}]
  %s5 = inlined_call_operand.vmem [shape: f32[5,112,160], index: 5, kind: input, shape index: {}]
  %s6 = inlined_call_operand.vmem [shape: f32[1,160], index: 6, kind: input, shape index: {}]
  %s7 = inlined_call_operand.vmem [shape: f32[160,80], index: 7, kind: input, shape index: {}]
  %s8 = inlined_call_operand.vmem [shape: f32[5,10], index: 8, kind: input, shape index: {}]
  %s9 = inlined_call_operand.vmem [shape: f32[5,80,128], index: 9, kind: input, shape index: {}]
  %s10 = inlined_call_operand.vmem [shape: f32[1,128], index: 10, kind: input, shape index: {}]
  %s11 = inlined_call_operand.vmem [shape: f32[128,128], index: 11, kind: input, shape index: {}]
  %s12 = inlined_call_operand.vmem [shape: f32[1,128], index: 12, kind: input, shape index: {}]
  %s13 = inlined_call_operand.vmem [shape: f32[128,10], index: 13, kind: input, shape index: {}]
  %s14 = inlined_call_operand.vmem [shape: f32[1,10], index: 14, kind: input, shape index: {}]
  %s15 = inlined_call_operand.hbm [shape: f32[2,1,10], index: 15, kind: output, shape index: {}]
  %s16 = sld [smem:[#allocation0]]
  $region93: #{lenet_forward.1} parent=0
    _
  %s18 = ssub.s32 1, %s16
  %s19 = scalar_select 0, %s18, %s16
  $region1: #{lenet_forward.1} parent=0
    #allocation4 [shape = 'u8[1024]{0}', space=vmem, size = 0x400, scoped, tag = 'output window, operand 0']
    #allocation5 [shape = 's32[2]{0}', space=sflag, size = 0x8, scoped, tag = 'scoped memory for lenet_forward.1']
    %20 = vsyncpa [#allocation5], 0
    %s21 = scalar_lea.sflag [#allocation5], 1
    %22 = vsyncpa %s21, 0
    loop: start=0, step=1, limit=4
    $region2: #{lenet_forward.1} parent=1 // loop_pre_header
      _
    $region3: #{lenet_forward.1} parent=1 // loop_header
      %s24 = sphi 0, %s28
      %p25 = scmp.ge.s32.totalorder %s24, 4
      %s34 = sphi 0, %s36
      %s37 = sphi 0, %s34
      %s38 = sphi 0, %s37
      %s54 = sphi 0, %s38
      %s58 = sphi 0, %s58
      %s60 = sphi 0, %s58
      %s61 = sphi 0, %s60
      %s75 = sphi 0, %s61
      %s79 = sphi 0, %s79
      %s81 = sphi 0, %s79
      %s82 = sphi 0, %s81
      %s96 = sphi 0, %s82
      %s100 = sphi 0, %s100
      %s102 = sphi 0, %s100
      %s103 = sphi 0, %s102
      %s117 = sphi 0, %s103
      %s121 = sphi 0, %s121
      %s123 = sphi 0, %s121
      %s124 = sphi 0, %s123
      %s138 = sphi 0, %s124
      %s142 = sphi 0, %s142
      %s144 = sphi 0, %s142
      %s145 = sphi 0, %s144
      %s159 = sphi 0, %s145
      %s163 = sphi 0, %s163
      %s165 = sphi 0, %s163
      %s166 = sphi 0, %s165
      %s180 = sphi 0, %s166
      %s184 = sphi 0, %s184
      %s186 = sphi 0, %s184
      %s187 = sphi 0, %s186
      %s201 = sphi 0, %s187
      %s205 = sphi 0, %s205
      %s207 = sphi 0, %s205
      %s208 = sphi 0, %s207
      %s222 = sphi 0, %s208
      %s226 = sphi 0, %s226
      %s228 = sphi 0, %s226
      %s229 = sphi 0, %s228
      %s243 = sphi 0, %s229
      %s247 = sphi 0, %s247
      %s249 = sphi 0, %s247
      %s250 = sphi 0, %s249
      %s264 = sphi 0, %s250
      %s268 = sphi 0, %s268
      %s270 = sphi 0, %s268
      %s271 = sphi 0, %s270
      %s285 = sphi 0, %s271
      %s289 = sphi 0, %s289
      %s291 = sphi 0, %s289
      %s292 = sphi 0, %s291
      %s306 = sphi 0, %s292
      %s310 = sphi 0, %s310
      %s312 = sphi 0, %s310
      %s313 = sphi 0, %s312
      %s327 = sphi 0, %s313
      %s331 = sphi 0, %s331
      %s333 = sphi 0, %s331
      %s334 = sphi 0, %s333
      %s348 = sphi 0, %s334
      %s354 = sphi 0, %s356
      %s357 = sphi 0, %s354
      %s358 = sphi 0, %s357
      %s374 = sphi 0, %s358
    $region4: #{lenet_forward.1} parent=1 // loop_header_branch
      %27 = sbr.rel (%p25) target = $region8
    $region5: #{lenet_forward.1} parent=1 // loop_body
      %s29 = ssub.s32 %s24, 1
      %s30 = ssub.s32 %s24, 2
      %s31 = sadd.s32 %s24, 1
      %s32 = ssub.s32 %s24, %s31
      %p33 = scmp.eq.s32.totalorder %s32, 0
      %s35 = sadd.s32 %s34, 1
      %s36 = scalar_select %p33, %s34, %s35
      %p39 = pneg %p33
      %p40 = scmp.eq.s32.totalorder %s24, 1
      %p41 = por %p39, %p40
      %p42 = scmp.ne.s32.totalorder %s34, %s37
      %p43 = scmp.eq.s32.totalorder %s24, 0
      %p44 = por %p42, %p43
      %p45 = scmp.ne.s32.totalorder %s34, %s37
      %p46 = scmp.eq.s32.totalorder %s29, 1
      %p47 = por %p45, %p46
      %p48 = scmp.ne.s32.totalorder %s37, %s38
      %p49 = scmp.eq.s32.totalorder %s29, 0
      %p50 = por %p48, %p49
      %p51 = scmp.ne.s32.totalorder %s37, %s38
      %p52 = scmp.eq.s32.totalorder %s30, 1
      %p53 = por %p51, %p52
      %p55 = scmp.ne.s32.totalorder %s38, %s54
      %p56 = scmp.eq.s32.totalorder %s30, 0
      %p57 = por %p55, %p56
      %s59 = sadd.s32 %s58, 1
      %p62 = scmp.eq.s32.totalorder %s24, 1
      %p63 = scmp.ne.s32.totalorder %s58, %s60
      %p64 = scmp.eq.s32.totalorder %s24, 0
      %p65 = por %p63, %p64
      %p66 = scmp.ne.s32.totalorder %s58, %s60
      %p67 = scmp.eq.s32.totalorder %s29, 1
      %p68 = por %p66, %p67
      %p69 = scmp.ne.s32.totalorder %s60, %s61
      %p70 = scmp.eq.s32.totalorder %s29, 0
      %p71 = por %p69, %p70
      %p72 = scmp.ne.s32.totalorder %s60, %s61
      %p73 = scmp.eq.s32.totalorder %s30, 1
      %p74 = por %p72, %p73
      %p76 = scmp.ne.s32.totalorder %s61, %s75
      %p77 = scmp.eq.s32.totalorder %s30, 0
      %p78 = por %p76, %p77
      %s80 = sadd.s32 %s79, 1
      %p83 = scmp.eq.s32.totalorder %s24, 1
      %p84 = scmp.ne.s32.totalorder %s79, %s81
      %p85 = scmp.eq.s32.totalorder %s24, 0
      %p86 = por %p84, %p85
      %p87 = scmp.ne.s32.totalorder %s79, %s81
      %p88 = scmp.eq.s32.totalorder %s29, 1
      %p89 = por %p87, %p88
      %p90 = scmp.ne.s32.totalorder %s81, %s82
      %p91 = scmp.eq.s32.totalorder %s29, 0
      %p92 = por %p90, %p91
      %p93 = scmp.ne.s32.totalorder %s81, %s82
      %p94 = scmp.eq.s32.totalorder %s30, 1
      %p95 = por %p93, %p94
      %p97 = scmp.ne.s32.totalorder %s82, %s96
      %p98 = scmp.eq.s32.totalorder %s30, 0
      %p99 = por %p97, %p98
      %s101 = sadd.s32 %s100, 1
      %p104 = scmp.eq.s32.totalorder %s24, 1
      %p105 = scmp.ne.s32.totalorder %s100, %s102
      %p106 = scmp.eq.s32.totalorder %s24, 0
      %p107 = por %p105, %p106
      %p108 = scmp.ne.s32.totalorder %s100, %s102
      %p109 = scmp.eq.s32.totalorder %s29, 1
      %p110 = por %p108, %p109
      %p111 = scmp.ne.s32.totalorder %s102, %s103
      %p112 = scmp.eq.s32.totalorder %s29, 0
      %p113 = por %p111, %p112
      %p114 = scmp.ne.s32.totalorder %s102, %s103
      %p115 = scmp.eq.s32.totalorder %s30, 1
      %p116 = por %p114, %p115
      %p118 = scmp.ne.s32.totalorder %s103, %s117
      %p119 = scmp.eq.s32.totalorder %s30, 0
      %p120 = por %p118, %p119
      %s122 = sadd.s32 %s121, 1
      %p125 = scmp.eq.s32.totalorder %s24, 1
      %p126 = scmp.ne.s32.totalorder %s121, %s123
      %p127 = scmp.eq.s32.totalorder %s24, 0
      %p128 = por %p126, %p127
      %p129 = scmp.ne.s32.totalorder %s121, %s123
      %p130 = scmp.eq.s32.totalorder %s29, 1
      %p131 = por %p129, %p130
      %p132 = scmp.ne.s32.totalorder %s123, %s124
      %p133 = scmp.eq.s32.totalorder %s29, 0
      %p134 = por %p132, %p133
      %p135 = scmp.ne.s32.totalorder %s123, %s124
      %p136 = scmp.eq.s32.totalorder %s30, 1
      %p137 = por %p135, %p136
      %p139 = scmp.ne.s32.totalorder %s124, %s138
      %p140 = scmp.eq.s32.totalorder %s30, 0
      %p141 = por %p139, %p140
      %s143 = sadd.s32 %s142, 1
      %p146 = scmp.eq.s32.totalorder %s24, 1
      %p147 = scmp.ne.s32.totalorder %s142, %s144
      %p148 = scmp.eq.s32.totalorder %s24, 0
      %p149 = por %p147, %p148
      %p150 = scmp.ne.s32.totalorder %s142, %s144
      %p151 = scmp.eq.s32.totalorder %s29, 1
      %p152 = por %p150, %p151
      %p153 = scmp.ne.s32.totalorder %s144, %s145
      %p154 = scmp.eq.s32.totalorder %s29, 0
      %p155 = por %p153, %p154
      %p156 = scmp.ne.s32.totalorder %s144, %s145
      %p157 = scmp.eq.s32.totalorder %s30, 1
      %p158 = por %p156, %p157
      %p160 = scmp.ne.s32.totalorder %s145, %s159
      %p161 = scmp.eq.s32.totalorder %s30, 0
      %p162 = por %p160, %p161
      %s164 = sadd.s32 %s163, 1
      %p167 = scmp.eq.s32.totalorder %s24, 1
      %p168 = scmp.ne.s32.totalorder %s163, %s165
      %p169 = scmp.eq.s32.totalorder %s24, 0
      %p170 = por %p168, %p169
      %p171 = scmp.ne.s32.totalorder %s163, %s165
      %p172 = scmp.eq.s32.totalorder %s29, 1
      %p173 = por %p171, %p172
      %p174 = scmp.ne.s32.totalorder %s165, %s166
      %p175 = scmp.eq.s32.totalorder %s29, 0
      %p176 = por %p174, %p175
      %p177 = scmp.ne.s32.totalorder %s165, %s166
      %p178 = scmp.eq.s32.totalorder %s30, 1
      %p179 = por %p177, %p178
      %p181 = scmp.ne.s32.totalorder %s166, %s180
      %p182 = scmp.eq.s32.totalorder %s30, 0
      %p183 = por %p181, %p182
      %s185 = sadd.s32 %s184, 1
      %p188 = scmp.eq.s32.totalorder %s24, 1
      %p189 = scmp.ne.s32.totalorder %s184, %s186
      %p190 = scmp.eq.s32.totalorder %s24, 0
      %p191 = por %p189, %p190
      %p192 = scmp.ne.s32.totalorder %s184, %s186
      %p193 = scmp.eq.s32.totalorder %s29, 1
      %p194 = por %p192, %p193
      %p195 = scmp.ne.s32.totalorder %s186, %s187
      %p196 = scmp.eq.s32.totalorder %s29, 0
      %p197 = por %p195, %p196
      %p198 = scmp.ne.s32.totalorder %s186, %s187
      %p199 = scmp.eq.s32.totalorder %s30, 1
      %p200 = por %p198, %p199
      %p202 = scmp.ne.s32.totalorder %s187, %s201
      %p203 = scmp.eq.s32.totalorder %s30, 0
      %p204 = por %p202, %p203
      %s206 = sadd.s32 %s205, 1
      %p209 = scmp.eq.s32.totalorder %s24, 1
      %p210 = scmp.ne.s32.totalorder %s205, %s207
      %p211 = scmp.eq.s32.totalorder %s24, 0
      %p212 = por %p210, %p211
      %p213 = scmp.ne.s32.totalorder %s205, %s207
      %p214 = scmp.eq.s32.totalorder %s29, 1
      %p215 = por %p213, %p214
      %p216 = scmp.ne.s32.totalorder %s207, %s208
      %p217 = scmp.eq.s32.totalorder %s29, 0
      %p218 = por %p216, %p217
      %p219 = scmp.ne.s32.totalorder %s207, %s208
      %p220 = scmp.eq.s32.totalorder %s30, 1
      %p221 = por %p219, %p220
      %p223 = scmp.ne.s32.totalorder %s208, %s222
      %p224 = scmp.eq.s32.totalorder %s30, 0
      %p225 = por %p223, %p224
      %s227 = sadd.s32 %s226, 1
      %p230 = scmp.eq.s32.totalorder %s24, 1
      %p231 = scmp.ne.s32.totalorder %s226, %s228
      %p232 = scmp.eq.s32.totalorder %s24, 0
      %p233 = por %p231, %p232
      %p234 = scmp.ne.s32.totalorder %s226, %s228
      %p235 = scmp.eq.s32.totalorder %s29, 1
      %p236 = por %p234, %p235
      %p237 = scmp.ne.s32.totalorder %s228, %s229
      %p238 = scmp.eq.s32.totalorder %s29, 0
      %p239 = por %p237, %p238
      %p240 = scmp.ne.s32.totalorder %s228, %s229
      %p241 = scmp.eq.s32.totalorder %s30, 1
      %p242 = por %p240, %p241
      %p244 = scmp.ne.s32.totalorder %s229, %s243
      %p245 = scmp.eq.s32.totalorder %s30, 0
      %p246 = por %p244, %p245
      %s248 = sadd.s32 %s247, 1
      %p251 = scmp.eq.s32.totalorder %s24, 1
      %p252 = scmp.ne.s32.totalorder %s247, %s249
      %p253 = scmp.eq.s32.totalorder %s24, 0
      %p254 = por %p252, %p253
      %p255 = scmp.ne.s32.totalorder %s247, %s249
      %p256 = scmp.eq.s32.totalorder %s29, 1
      %p257 = por %p255, %p256
      %p258 = scmp.ne.s32.totalorder %s249, %s250
      %p259 = scmp.eq.s32.totalorder %s29, 0
      %p260 = por %p258, %p259
      %p261 = scmp.ne.s32.totalorder %s249, %s250
      %p262 = scmp.eq.s32.totalorder %s30, 1
      %p263 = por %p261, %p262
      %p265 = scmp.ne.s32.totalorder %s250, %s264
      %p266 = scmp.eq.s32.totalorder %s30, 0
      %p267 = por %p265, %p266
      %s269 = sadd.s32 %s268, 1
      %p272 = scmp.eq.s32.totalorder %s24, 1
      %p273 = scmp.ne.s32.totalorder %s268, %s270
      %p274 = scmp.eq.s32.totalorder %s24, 0
      %p275 = por %p273, %p274
      %p276 = scmp.ne.s32.totalorder %s268, %s270
      %p277 = scmp.eq.s32.totalorder %s29, 1
      %p278 = por %p276, %p277
      %p279 = scmp.ne.s32.totalorder %s270, %s271
      %p280 = scmp.eq.s32.totalorder %s29, 0
      %p281 = por %p279, %p280
      %p282 = scmp.ne.s32.totalorder %s270, %s271
      %p283 = scmp.eq.s32.totalorder %s30, 1
      %p284 = por %p282, %p283
      %p286 = scmp.ne.s32.totalorder %s271, %s285
      %p287 = scmp.eq.s32.totalorder %s30, 0
      %p288 = por %p286, %p287
      %s290 = sadd.s32 %s289, 1
      %p293 = scmp.eq.s32.totalorder %s24, 1
      %p294 = scmp.ne.s32.totalorder %s289, %s291
      %p295 = scmp.eq.s32.totalorder %s24, 0
      %p296 = por %p294, %p295
      %p297 = scmp.ne.s32.totalorder %s289, %s291
      %p298 = scmp.eq.s32.totalorder %s29, 1
      %p299 = por %p297, %p298
      %p300 = scmp.ne.s32.totalorder %s291, %s292
      %p301 = scmp.eq.s32.totalorder %s29, 0
      %p302 = por %p300, %p301
      %p303 = scmp.ne.s32.totalorder %s291, %s292
      %p304 = scmp.eq.s32.totalorder %s30, 1
      %p305 = por %p303, %p304
      %p307 = scmp.ne.s32.totalorder %s292, %s306
      %p308 = scmp.eq.s32.totalorder %s30, 0
      %p309 = por %p307, %p308
      %s311 = sadd.s32 %s310, 1
      %p314 = scmp.eq.s32.totalorder %s24, 1
      %p315 = scmp.ne.s32.totalorder %s310, %s312
      %p316 = scmp.eq.s32.totalorder %s24, 0
      %p317 = por %p315, %p316
      %p318 = scmp.ne.s32.totalorder %s310, %s312
      %p319 = scmp.eq.s32.totalorder %s29, 1
      %p320 = por %p318, %p319
      %p321 = scmp.ne.s32.totalorder %s312, %s313
      %p322 = scmp.eq.s32.totalorder %s29, 0
      %p323 = por %p321, %p322
      %p324 = scmp.ne.s32.totalorder %s312, %s313
      %p325 = scmp.eq.s32.totalorder %s30, 1
      %p326 = por %p324, %p325
      %p328 = scmp.ne.s32.totalorder %s313, %s327
      %p329 = scmp.eq.s32.totalorder %s30, 0
      %p330 = por %p328, %p329
      %s332 = sadd.s32 %s331, 1
      %p335 = scmp.eq.s32.totalorder %s24, 1
      %p336 = scmp.ne.s32.totalorder %s331, %s333
      %p337 = scmp.eq.s32.totalorder %s24, 0
      %p338 = por %p336, %p337
      %p339 = scmp.ne.s32.totalorder %s331, %s333
      %p340 = scmp.eq.s32.totalorder %s29, 1
      %p341 = por %p339, %p340
      %p342 = scmp.ne.s32.totalorder %s333, %s334
      %p343 = scmp.eq.s32.totalorder %s29, 0
      %p344 = por %p342, %p343
      %p345 = scmp.ne.s32.totalorder %s333, %s334
      %p346 = scmp.eq.s32.totalorder %s30, 1
      %p347 = por %p345, %p346
      %p349 = scmp.ne.s32.totalorder %s334, %s348
      %p350 = scmp.eq.s32.totalorder %s30, 0
      %p351 = por %p349, %p350
      %s352 = ssub.s32 %s24, %s31
      %p353 = scmp.eq.s32.totalorder %s352, 0
      %s355 = sadd.s32 %s354, 1
      %s356 = scalar_select %p353, %s354, %s355
      %p359 = pneg %p353
      %p360 = scmp.eq.s32.totalorder %s24, 1
      %p361 = por %p359, %p360
      %p362 = scmp.ne.s32.totalorder %s354, %s357
      %p363 = scmp.eq.s32.totalorder %s24, 0
      %p364 = por %p362, %p363
      %p365 = scmp.ne.s32.totalorder %s354, %s357
      %p366 = scmp.eq.s32.totalorder %s29, 1
      %p367 = por %p365, %p366
      %p368 = scmp.ne.s32.totalorder %s357, %s358
      %p369 = scmp.eq.s32.totalorder %s29, 0
      %p370 = por %p368, %p369
      %p371 = scmp.ne.s32.totalorder %s357, %s358
      %p372 = scmp.eq.s32.totalorder %s30, 1
      %p373 = por %p371, %p372
      %p375 = scmp.ne.s32.totalorder %s358, %s374
      %p376 = scmp.eq.s32.totalorder %s30, 0
      %p377 = por %p375, %p376
      %p378 = scmp.le.s32.totalorder 1, %s24
      %p379 = scmp.lt.s32.totalorder %s24, 3
      %p380 = pnand %p378, %p379
      %p381 = pneg %p380
      // Predicated region
      $region9: #{lenet_forward.1} parent=5 // pred_check
        _
      $region10: #{lenet_forward.1} parent=5 // pred_check_branch
        %383 = sbr.rel (%p380) target = $region12
      $region11: #{lenet_forward.1} parent=5 // pred_region
        %s384 = ssub.s32 %s24, 1
        // Predicated region
        $region13: #{lenet_forward.1} parent=11 // pred_check
          %p385 = pneg %p71
        $region14: #{lenet_forward.1} parent=11 // pred_check_branch
          %387 = sbr.rel (%p385) target = $region16
        $region15: #{lenet_forward.1} parent=11 // pred_region
          _
        $region16: #{lenet_forward.1} parent=11 // pred_fallthru
          _
        // Predicated region
        $region17: #{lenet_forward.1} parent=11 // pred_check
          %p388 = pneg %p92
        $region18: #{lenet_forward.1} parent=11 // pred_check_branch
          %390 = sbr.rel (%p388) target = $region20
        $region19: #{lenet_forward.1} parent=11 // pred_region
          _
        $region20: #{lenet_forward.1} parent=11 // pred_fallthru
          _
        // Predicated region
        $region21: #{lenet_forward.1} parent=11 // pred_check
          %p391 = pneg %p113
        $region22: #{lenet_forward.1} parent=11 // pred_check_branch
          %393 = sbr.rel (%p391) target = $region24
        $region23: #{lenet_forward.1} parent=11 // pred_region
          _
        $region24: #{lenet_forward.1} parent=11 // pred_fallthru
          _
        // Predicated region
        $region25: #{lenet_forward.1} parent=11 // pred_check
          %p394 = pneg %p134
        $region26: #{lenet_forward.1} parent=11 // pred_check_branch
          %396 = sbr.rel (%p394) target = $region28
        $region27: #{lenet_forward.1} parent=11 // pred_region
          _
        $region28: #{lenet_forward.1} parent=11 // pred_fallthru
          _
        // Predicated region
        $region29: #{lenet_forward.1} parent=11 // pred_check
          %p397 = pneg %p155
        $region30: #{lenet_forward.1} parent=11 // pred_check_branch
          %399 = sbr.rel (%p397) target = $region32
        $region31: #{lenet_forward.1} parent=11 // pred_region
          _
        $region32: #{lenet_forward.1} parent=11 // pred_fallthru
          _
        // Predicated region
        $region33: #{lenet_forward.1} parent=11 // pred_check
          %p400 = pneg %p176
        $region34: #{lenet_forward.1} parent=11 // pred_check_branch
          %402 = sbr.rel (%p400) target = $region36
        $region35: #{lenet_forward.1} parent=11 // pred_region
          _
        $region36: #{lenet_forward.1} parent=11 // pred_fallthru
          _
        // Predicated region
        $region37: #{lenet_forward.1} parent=11 // pred_check
          %p403 = pneg %p197
        $region38: #{lenet_forward.1} parent=11 // pred_check_branch
          %405 = sbr.rel (%p403) target = $region40
        $region39: #{lenet_forward.1} parent=11 // pred_region
          _
        $region40: #{lenet_forward.1} parent=11 // pred_fallthru
          _
        // Predicated region
        $region41: #{lenet_forward.1} parent=11 // pred_check
          %p406 = pneg %p218
        $region42: #{lenet_forward.1} parent=11 // pred_check_branch
          %408 = sbr.rel (%p406) target = $region44
        $region43: #{lenet_forward.1} parent=11 // pred_region
          _
        $region44: #{lenet_forward.1} parent=11 // pred_fallthru
          _
        // Predicated region
        $region45: #{lenet_forward.1} parent=11 // pred_check
          %p409 = pneg %p239
        $region46: #{lenet_forward.1} parent=11 // pred_check_branch
          %411 = sbr.rel (%p409) target = $region48
        $region47: #{lenet_forward.1} parent=11 // pred_region
          _
        $region48: #{lenet_forward.1} parent=11 // pred_fallthru
          _
        // Predicated region
        $region49: #{lenet_forward.1} parent=11 // pred_check
          %p412 = pneg %p260
        $region50: #{lenet_forward.1} parent=11 // pred_check_branch
          %414 = sbr.rel (%p412) target = $region52
        $region51: #{lenet_forward.1} parent=11 // pred_region
          _
        $region52: #{lenet_forward.1} parent=11 // pred_fallthru
          _
        // Predicated region
        $region53: #{lenet_forward.1} parent=11 // pred_check
          %p415 = pneg %p281
        $region54: #{lenet_forward.1} parent=11 // pred_check_branch
          %417 = sbr.rel (%p415) target = $region56
        $region55: #{lenet_forward.1} parent=11 // pred_region
          _
        $region56: #{lenet_forward.1} parent=11 // pred_fallthru
          _
        // Predicated region
        $region57: #{lenet_forward.1} parent=11 // pred_check
          %p418 = pneg %p302
        $region58: #{lenet_forward.1} parent=11 // pred_check_branch
          %420 = sbr.rel (%p418) target = $region60
        $region59: #{lenet_forward.1} parent=11 // pred_region
          _
        $region60: #{lenet_forward.1} parent=11 // pred_fallthru
          _
        // Predicated region
        $region61: #{lenet_forward.1} parent=11 // pred_check
          %p421 = pneg %p323
        $region62: #{lenet_forward.1} parent=11 // pred_check_branch
          %423 = sbr.rel (%p421) target = $region64
        $region63: #{lenet_forward.1} parent=11 // pred_region
          _
        $region64: #{lenet_forward.1} parent=11 // pred_fallthru
          _
        // Predicated region
        $region65: #{lenet_forward.1} parent=11 // pred_check
          %p424 = pneg %p344
        $region66: #{lenet_forward.1} parent=11 // pred_check_branch
          %426 = sbr.rel (%p424) target = $region68
        $region67: #{lenet_forward.1} parent=11 // pred_region
          _
        $region68: #{lenet_forward.1} parent=11 // pred_fallthru
          _
      $region12: #{lenet_forward.1} parent=5 // pred_fallthru
        _
      %p427 = scmp.lt.s32.totalorder %s24, 2
      // Predicated region
      $region69: #{lenet_forward.1} parent=5 // pred_check
        %p428 = pneg %p427
      $region70: #{lenet_forward.1} parent=5 // pred_check_branch
        %430 = sbr.rel (%p428) target = $region72
      $region71: #{lenet_forward.1} parent=5 // pred_region
        // Predicated region
        $region73: #{lenet_forward.1} parent=71 // pred_check
          %p431 = pneg %p44
        $region74: #{lenet_forward.1} parent=71 // pred_check_branch
          %433 = sbr.rel (%p431) target = $region76
        $region75: #{lenet_forward.1} parent=71 // pred_region
          %p434 = scmp.lt.s32.totalorder %s24, 1
          %s435 = scalar_select %p434, %s24, 1
          %s436 = smul.addr %s435, 4
          %s437 = smul.addr %s436, 8
          %s438 = scalar_lea.vmem %s0, %s437
        $region76: #{lenet_forward.1} parent=71 // pred_fallthru
          _
      $region72: #{lenet_forward.1} parent=5 // pred_fallthru
        _
      %p439 = scmp.le.s32.totalorder 1, %s24
      %p440 = scmp.lt.s32.totalorder %s24, 3
      %p441 = pnand %p439, %p440
      %p442 = pneg %p441
      // Predicated region
      $region77: #{lenet_forward.1} parent=5 // pred_check
        _
      $region78: #{lenet_forward.1} parent=5 // pred_check_branch
        %444 = sbr.rel (%p441) target = $region80
      $region79: #{lenet_forward.1} parent=5 // pred_region
        %s445 = ssub.s32 %s24, 1
        %p446 = scmp.lt.s32.totalorder %s29, 1
        %s447 = scalar_select %p446, %s29, 1
        %s448 = smul.addr %s447, 4
        %s449 = smul.addr %s448, 8
        %s450 = scalar_lea.vmem %s0, %s449
        %p451 = pneg %p50
        %p452 = pneg %p47
        %p453 = pneg %p71
        %p454 = pneg %p68
        %p455 = pneg %p92
        %p456 = pneg %p89
        %p457 = pneg %p113
        %p458 = pneg %p110
        %p459 = pneg %p134
        %p460 = pneg %p131
        %p461 = pneg %p155
        %p462 = pneg %p152
        %p463 = pneg %p176
        %p464 = pneg %p173
        %p465 = pneg %p197
        %p466 = pneg %p194
        %p467 = pneg %p218
        %p468 = pneg %p215
        %p469 = pneg %p239
        %p470 = pneg %p236
        %p471 = pneg %p260
        %p472 = pneg %p257
        %p473 = pneg %p281
        %p474 = pneg %p278
        %p475 = pneg %p302
        %p476 = pneg %p299
        %p477 = pneg %p323
        %p478 = pneg %p320
        %p479 = pneg %p344
        %p480 = pneg %p341
        %p481 = pneg %p370
        %p482 = pneg %p367
        %s483 = sand.u32 %s357, 1
        %s484 = scalar_lea.sflag [#allocation5], %s483
        %s485 = sand.u32 %s357, 1
        %s486 = scalar_lea.vmem [#allocation4], %s485
        %p487 = scmp.lt.s32.totalorder %s29, 1
        %s488 = scalar_select %p487, %s29, 1
        %s489 = smul.addr %s488, 4
        %s490 = smul.addr %s489, 8
        %s491 = scalar_lea.vmem %s0, %s490
        %v492 = vld [vmem:[%s491] sm:$0xff]
        %v493 = vld [vmem:[%s491 + $0x8] sm:$0xff]
        %v494 = vld [vmem:[%s491 + $0x10] sm:$0xff]
        %v495 = vld [vmem:[%s491 + $0x18] sm:$0xf]
        %v496 = vld [vmem:[%s1] sm:$0xff]
        %v497 = vld [vmem:[%s1 + $0x8] sm:$0xff]
        %v498 = vld [vmem:[%s1 + $0x10] sm:$0xff]
        %v499 = vld [vmem:[%s1 + $0x18] sm:$0xff]
        %v500 = vld [vmem:[%s1 + $0x20] sm:$0xff]
        %v501 = vld [vmem:[%s1 + $0x28] sm:$0xff]
        %v502 = vld [vmem:[%s1 + $0x30] sm:$0xff]
        %v503 = vld [vmem:[%s1 + $0x38] sm:$0xff]
        %v504 = vld [vmem:[%s491 + $0x1] sm:$0xff]
        %v505 = vld [vmem:[%s491 + $0x9] sm:$0xff]
        %v506 = vld [vmem:[%s491 + $0x11] sm:$0xff]
        %v507 = vld [vmem:[%s491 + $0x19] sm:$0xf]
        %s508 = scalar_lea.vmem %s1, 64
        %v509 = vld [vmem:[%s508] sm:$0xff]
        %v510 = vld [vmem:[%s508 + $0x8] sm:$0xff]
        %v511 = vld [vmem:[%s508 + $0x10] sm:$0xff]
        %v512 = vld [vmem:[%s508 + $0x18] sm:$0xff]
        %v513 = vld [vmem:[%s508 + $0x20] sm:$0xff]
        %v514 = vld [vmem:[%s508 + $0x28] sm:$0xff]
        %v515 = vld [vmem:[%s508 + $0x30] sm:$0xff]
        %v516 = vld [vmem:[%s508 + $0x38] sm:$0xff]
        %vm517 = vcmask 261120
        %v519 = vsel %vm517, %v504, 0
        %v522 = vsel %vm517, %v505, 0
        %v525 = vsel %vm517, %v506, 0
        %v528 = vsel %vm517, %v507, 0
        %530 = vmatprep.subr.mxu0 %v510
        %531 = vmatpush1.msra.mxu0 %v509
        %532 = vmatprep.subr.mxu0 %v512
        %533 = vmatpush1.msra.mxu0 %v511
        %534 = vmatprep.subr.mxu0 %v514
        %535 = vmatpush1.msra.mxu0 %v513
        %536 = vmatprep.subr.mxu0 %v516
        %537 = vmatpush1.msra.mxu0 %v515
        %538 = vmatprep.subr.mxu0 0.0
        %539 = vmatpush1.msra.mxu0 0.0
        %540 = vmatprep.subr.mxu0 0.0
        %541 = vmatpush1.msra.mxu0 0.0
        %542 = vmatprep.subr.mxu0 0.0
        %543 = vmatpush1.msra.mxu0 0.0
        %544 = vmatprep.subr.mxu0 0.0
        %545 = vmatpush1.msra.mxu0 0.0
        %546 = vmatprep.subr.mxu0 0.0
        %547 = vmatpush1.msra.mxu0 0.0
        %548 = vmatprep.subr.mxu0 0.0
        %549 = vmatpush1.msra.mxu0 0.0
        %550 = vmatprep.subr.mxu0 0.0
        %551 = vmatpush1.msra.mxu0 0.0
        %552 = vmatprep.subr.mxu0 0.0
        %553 = vmatpush1.msra.mxu0 0.0
        %554 = vmatprep.subr.mxu0 0.0
        %555 = vmatpush1.msra.mxu0 0.0
        %556 = vmatprep.subr.mxu0 0.0
        %557 = vmatpush1.msra.mxu0 0.0
        %558 = vmatprep.subr.mxu0 0.0
        %559 = vmatpush1.msra.mxu0 0.0
        %560 = vmatprep.subr.mxu0 0.0
        %561 = vmatpush1.msra.mxu0 0.0
        %562 = vmatprep.subr.mxu0 0.0
        %563 = vmatpush1.msra.mxu0 0.0
        %564 = vmatprep.subr.mxu0 0.0
        %565 = vmatpush1.msra.mxu0 0.0
        %566 = vmatprep.subr.mxu0 0.0
        %567 = vmatpush1.msra.mxu0 0.0
        %568 = vmatprep.subr.mxu0 0.0
        %569 = vmatpush1.msra.mxu0 0.0
        %570 = vmatprep.subr.mxu0 0.0
        %571 = vmatpush1.msra.mxu0 0.0
        %572 = vmatprep.subr.mxu0 0.0
        %573 = vmatpush1.msra.mxu0 0.0
        %574 = vmatprep.subr.mxu0 0.0
        %575 = vmatpush1.msra.mxu0 0.0
        %576 = vmatprep.subr.mxu0 0.0
        %577 = vmatpush1.msra.mxu0 0.0
        %578 = vmatprep.subr.mxu0 0.0
        %579 = vmatpush1.msra.mxu0 0.0
        %580 = vmatprep.subr.mxu0 0.0
        %581 = vmatpush1.msra.mxu0 0.0
        %582 = vmatprep.subr.mxu0 0.0
        %583 = vmatpush1.msra.mxu0 0.0
        %584 = vmatprep.subr.mxu0 0.0
        %585 = vmatpush1.msra.mxu0 0.0
        %586 = vmatprep.subr.mxu0 0.0
        %587 = vmatpush1.msra.mxu0 0.0
        %588 = vmatprep.subr.mxu0 0.0
        %589 = vmatpush1.msra.mxu0 0.0
        %590 = vmatprep.subr.mxu0 0.0
        %591 = vmatpush1.msra.mxu0 0.0
        %592 = vmatprep.subr.mxu0 0.0
        %593 = vmatpush1.msra.mxu0 0.0
        %594 = vmatprep.mubr.f32.mxu0 0.0
        %595 = vmatmul.mubr.f32.gmra.mrb[0].mxu0 %v519
        %v596 = vpop.f32.mrb[0].mxu0
        %v597 = vadd.f32 0.0, %v596
        %v598 = vpop.f32.mrb[0].mxu0
        %v599 = vadd.f32 0.0, %v598
        %600 = vmatprep.mubr.f32.mxu0 0.0
        %601 = vmatmul.mubr.f32.gmra.mrb[0].mxu0 %v522
        %v602 = vpop.f32.mrb[0].mxu0
        %v603 = vadd.f32 0.0, %v602
        %v604 = vpop.f32.mrb[0].mxu0
        %v605 = vadd.f32 0.0, %v604
        %606 = vmatprep.mubr.f32.mxu0 0.0
        %607 = vmatmul.mubr.f32.gmra.mrb[0].mxu0 %v525
        %v608 = vpop.f32.mrb[0].mxu0
        %v609 = vadd.f32 0.0, %v608
        %v610 = vpop.f32.mrb[0].mxu0
        %v611 = vadd.f32 0.0, %v610
        %612 = vmatprep.mubr.f32.mxu0 0.0
        %613 = vmatmul.mubr.f32.gmra.mrb[0].mxu0 %v528
        %v614 = vpop.f32.mrb[0].mxu0
        %v615 = vadd.f32 0.0, %v614
        %v616 = vpop.f32.mrb[0].mxu0
        %v617 = vadd.f32 0.0, %v616
        %618 = vdwg.mxu0
        %v620 = vsel %vm517, %v492, 0
        %v623 = vsel %vm517, %v493, 0
        %v626 = vsel %vm517, %v494, 0
        %v629 = vsel %vm517, %v495, 0
        %631 = vmatprep.subr.mxu0 %v497
        %632 = vmatpush1.msra.mxu0 %v496
        %633 = vmatprep.subr.mxu0 %v499
        %634 = vmatpush1.msra.mxu0 %v498
        %635 = vmatprep.subr.mxu0 %v501
        %636 = vmatpush1.msra.mxu0 %v500
        %637 = vmatprep.subr.mxu0 %v503
        %638 = vmatpush1.msra.mxu0 %v502
        %639 = vmatprep.subr.mxu0 0.0
        %640 = vmatpush1.msra.mxu0 0.0
        %641 = vmatprep.subr.mxu0 0.0
        %642 = vmatpush1.msra.mxu0 0.0
        %643 = vmatprep.subr.mxu0 0.0
        %644 = vmatpush1.msra.mxu0 0.0
        %645 = vmatprep.subr.mxu0 0.0
        %646 = vmatpush1.msra.mxu0 0.0
        %647 = vmatprep.subr.mxu0 0.0
        %648 = vmatpush1.msra.mxu0 0.0
        %649 = vmatprep.subr.mxu0 0.0
        %650 = vmatpush1.msra.mxu0 0.0
        %651 = vmatprep.subr.mxu0 0.0
        %652 = vmatpush1.msra.mxu0 0.0
        %653 = vmatprep.subr.mxu0 0.0
        %654 = vmatpush1.msra.mxu0 0.0
        %655 = vmatprep.subr.mxu0 0.0
        %656 = vmatpush1.msra.mxu0 0.0
        %657 = vmatprep.subr.mxu0 0.0
        %658 = vmatpush1.msra.mxu0 0.0
        %659 = vmatprep.subr.mxu0 0.0
        %660 = vmatpush1.msra.mxu0 0.0
        %661 = vmatprep.subr.mxu0 0.0
        %662 = vmatpush1.msra.mxu0 0.0
        %663 = vmatprep.subr.mxu0 0.0
        %664 = vmatpush1.msra.mxu0 0.0
        %665 = vmatprep.subr.mxu0 0.0
        %666 = vmatpush1.msra.mxu0 0.0
        %667 = vmatprep.subr.mxu0 0.0
        %668 = vmatpush1.msra.mxu0 0.0
        %669 = vmatprep.subr.mxu0 0.0
        %670 = vmatpush1.msra.mxu0 0.0
        %671 = vmatprep.subr.mxu0 0.0
        %672 = vmatpush1.msra.mxu0 0.0
        %673 = vmatprep.subr.mxu0 0.0
        %674 = vmatpush1.msra.mxu0 0.0
        %675 = vmatprep.subr.mxu0 0.0
        %676 = vmatpush1.msra.mxu0 0.0
        %677 = vmatprep.subr.mxu0 0.0
        %678 = vmatpush1.msra.mxu0 0.0
        %679 = vmatprep.subr.mxu0 0.0
        %680 = vmatpush1.msra.mxu0 0.0
        %681 = vmatprep.subr.mxu0 0.0
        %682 = vmatpush1.msra.mxu0 0.0
        %683 = vmatprep.subr.mxu0 0.0
        %684 = vmatpush1.msra.mxu0 0.0
        %685 = vmatprep.subr.mxu0 0.0
        %686 = vmatpush1.msra.mxu0 0.0
        %687 = vmatprep.subr.mxu0 0.0
        %688 = vmatpush1.msra.mxu0 0.0
        %689 = vmatprep.subr.mxu0 0.0
        %690 = vmatpush1.msra.mxu0 0.0
        %691 = vmatprep.subr.mxu0 0.0
        %692 = vmatpush1.msra.mxu0 0.0
        %693 = vmatprep.subr.mxu0 0.0
        %694 = vmatpush1.msra.mxu0 0.0
        %695 = vmatprep.mubr.f32.mxu0 0.0
        %696 = vmatmul.mubr.f32.gmra.mrb[0].mxu0 %v620
        %v697 = vpop.f32.mrb[0].mxu0
        %v698 = vadd.f32 %v597, %v697
        %v699 = vpop.f32.mrb[0].mxu0
        %v700 = vadd.f32 %v599, %v699
        %701 = vmatprep.mubr.f32.mxu0 0.0
        %702 = vmatmul.mubr.f32.gmra.mrb[0].mxu0 %v623
        %v703 = vpop.f32.mrb[0].mxu0
        %v704 = vadd.f32 %v603, %v703
        %v705 = vpop.f32.mrb[0].mxu0
        %v706 = vadd.f32 %v605, %v705
        %707 = vmatprep.mubr.f32.mxu0 0.0
        %708 = vmatmul.mubr.f32.gmra.mrb[0].mxu0 %v626
        %v709 = vpop.f32.mrb[0].mxu0
        %v710 = vadd.f32 %v609, %v709
        %v711 = vpop.f32.mrb[0].mxu0
        %v712 = vadd.f32 %v611, %v711
        %713 = vmatprep.mubr.f32.mxu0 0.0
        %714 = vmatmul.mubr.f32.gmra.mrb[0].mxu0 %v629
        %v715 = vpop.f32.mrb[0].mxu0
        %v716 = vadd.f32 %v615, %v715
        %v717 = vpop.f32.mrb[0].mxu0
        %v718 = vadd.f32 %v617, %v717
        %719 = vdwg.mxu0
        %v720 = vld [vmem:[%s491 + $0x2] sm:$0xff]
        %v721 = vld [vmem:[%s491 + $0xa] sm:$0xff]
        %v722 = vld [vmem:[%s491 + $0x12] sm:$0xff]
        %v723 = vld [vmem:[%s491 + $0x1a] sm:$0xf]
        %s724 = scalar_lea.vmem %s1, 128
        %v725 = vld [vmem:[%s724] sm:$0xff]
        %v726 = vld [vmem:[%s724 + $0x8] sm:$0xff]
        %v727 = vld [vmem:[%s724 + $0x10] sm:$0xff]
        %v728 = vld [vmem:[%s724 + $0x18] sm:$0xff]
        %v729 = vld [vmem:[%s724 + $0x20] sm:$0xff]
        %v730 = vld [vmem:[%s724 + $0x28] sm:$0xff]
        %v731 = vld [vmem:[%s724 + $0x30] sm:$0xff]
        %v732 = vld [vmem:[%s724 + $0x38] sm:$0xff]
        %v734 = vsel %vm517, %v720, 0
        %v737 = vsel %vm517, %v721, 0
        %v740 = vsel %vm517, %v722, 0
        %v743 = vsel %vm517, %v723, 0
        %745 = vmatprep.subr.mxu0 %v726
        %746 = vmatpush1.msra.mxu0 %v725
        %747 = vmatprep.subr.mxu0 %v728
        %748 = vmatpush1.msra.mxu0 %v727
        %749 = vmatprep.subr.mxu0 %v730
        %750 = vmatpush1.msra.mxu0 %v729
        %751 = vmatprep.subr.mxu0 %v732
        %752 = vmatpush1.msra.mxu0 %v731
        %753 = vmatprep.subr.mxu0 0.0
        %754 = vmatpush1.msra.mxu0 0.0
        %755 = vmatprep.subr.mxu0 0.0
        %756 = vmatpush1.msra.mxu0 0.0
        %757 = vmatprep.subr.mxu0 0.0
        %758 = vmatpush1.msra.mxu0 0.0
        %759 = vmatprep.subr.mxu0 0.0
        %760 = vmatpush1.msra.mxu0 0.0
        %761 = vmatprep.subr.mxu0 0.0
        %762 = vmatpush1.msra.mxu0 0.0
        %763 = vmatprep.subr.mxu0 0.0
        %764 = vmatpush1.msra.mxu0 0.0
        %765 = vmatprep.subr.mxu0 0.0
        %766 = vmatpush1.msra.mxu0 0.0
        %767 = vmatprep.subr.mxu0 0.0
        %768 = vmatpush1.msra.mxu0 0.0
        %769 = vmatprep.subr.mxu0 0.0
        %770 = vmatpush1.msra.mxu0 0.0
        %771 = vmatprep.subr.mxu0 0.0
        %772 = vmatpush1.msra.mxu0 0.0
        %773 = vmatprep.subr.mxu0 0.0
        %774 = vmatpush1.msra.mxu0 0.0
        %775 = vmatprep.subr.mxu0 0.0
        %776 = vmatpush1.msra.mxu0 0.0
        %777 = vmatprep.subr.mxu0 0.0
        %778 = vmatpush1.msra.mxu0 0.0
        %779 = vmatprep.subr.mxu0 0.0
        %780 = vmatpush1.msra.mxu0 0.0
        %781 = vmatprep.subr.mxu0 0.0
        %782 = vmatpush1.msra.mxu0 0.0
        %783 = vmatprep.subr.mxu0 0.0
        %784 = vmatpush1.msra.mxu0 0.0
        %785 = vmatprep.subr.mxu0 0.0
        %786 = vmatpush1.msra.mxu0 0.0
        %787 = vmatprep.subr.mxu0 0.0
        %788 = vmatpush1.msra.mxu0 0.0
        %789 = vmatprep.subr.mxu0 0.0
        %790 = vmatpush1.msra.mxu0 0.0
        %791 = vmatprep.subr.mxu0 0.0
        %792 = vmatpush1.msra.mxu0 0.0
        %793 = vmatprep.subr.mxu0 0.0
        %794 = vmatpush1.msra.mxu0 0.0
        %795 = vmatprep.subr.mxu0 0.0
        %796 = vmatpush1.msra.mxu0 0.0
        %797 = vmatprep.subr.mxu0 0.0
        %798 = vmatpush1.msra.mxu0 0.0
        %799 = vmatprep.subr.mxu0 0.0
        %800 = vmatpush1.msra.mxu0 0.0
        %801 = vmatprep.subr.mxu0 0.0
        %802 = vmatpush1.msra.mxu0 0.0
        %803 = vmatprep.subr.mxu0 0.0
        %804 = vmatpush1.msra.mxu0 0.0
        %805 = vmatprep.subr.mxu0 0.0
        %806 = vmatpush1.msra.mxu0 0.0
        %807 = vmatprep.subr.mxu0 0.0
        %808 = vmatpush1.msra.mxu0 0.0
        %809 = vmatprep.mubr.f32.mxu0 0.0
        %810 = vmatmul.mubr.f32.gmra.mrb[0].mxu0 %v734
        %v811 = vpop.f32.mrb[0].mxu0
        %v812 = vadd.f32 0.0, %v811
        %v813 = vpop.f32.mrb[0].mxu0
        %v814 = vadd.f32 0.0, %v813
        %815 = vmatprep.mubr.f32.mxu0 0.0
        %816 = vmatmul.mubr.f32.gmra.mrb[0].mxu0 %v737
        %v817 = vpop.f32.mrb[0].mxu0
        %v818 = vadd.f32 0.0, %v817
        %v819 = vpop.f32.mrb[0].mxu0
        %v820 = vadd.f32 0.0, %v819
        %821 = vmatprep.mubr.f32.mxu0 0.0
        %822 = vmatmul.mubr.f32.gmra.mrb[0].mxu0 %v740
        %v823 = vpop.f32.mrb[0].mxu0
        %v824 = vadd.f32 0.0, %v823
        %v825 = vpop.f32.mrb[0].mxu0
        %v826 = vadd.f32 0.0, %v825
        %827 = vmatprep.mubr.f32.mxu0 0.0
        %828 = vmatmul.mubr.f32.gmra.mrb[0].mxu0 %v743
        %v829 = vpop.f32.mrb[0].mxu0
        %v830 = vadd.f32 0.0, %v829
        %v831 = vpop.f32.mrb[0].mxu0
        %v832 = vadd.f32 0.0, %v831
        %833 = vdwg.mxu0
        %v834 = vadd.f32 %v698, %v812
        %v835 = vadd.f32 %v700, %v814
        %v836 = vadd.f32 %v704, %v818
        %v837 = vadd.f32 %v706, %v820
        %v838 = vadd.f32 %v710, %v824
        %v839 = vadd.f32 %v712, %v826
        %v840 = vadd.f32 %v716, %v830
        %v841 = vadd.f32 %v718, %v832
        %v842 = vld [vmem:[%s491 + $0x3] sm:$0xff]
        %v843 = vld [vmem:[%s491 + $0xb] sm:$0xff]
        %v844 = vld [vmem:[%s491 + $0x13] sm:$0xff]
        %v845 = vld [vmem:[%s491 + $0x1b] sm:$0xf]
        %s846 = scalar_lea.vmem %s1, 192
        %v847 = vld [vmem:[%s846] sm:$0xff]
        %v848 = vld [vmem:[%s846 + $0x8] sm:$0xff]
        %v849 = vld [vmem:[%s846 + $0x10] sm:$0xff]
        %v850 = vld [vmem:[%s846 + $0x18] sm:$0xff]
        %v851 = vld [vmem:[%s846 + $0x20] sm:$0xff]
        %v852 = vld [vmem:[%s846 + $0x28] sm:$0xff]
        %v853 = vld [vmem:[%s846 + $0x30] sm:$0xff]
        %v854 = vld [vmem:[%s846 + $0x38] sm:$0xff]
        %v856 = vsel %vm517, %v842, 0
        %v859 = vsel %vm517, %v843, 0
        %v862 = vsel %vm517, %v844, 0
        %v865 = vsel %vm517, %v845, 0
        %867 = vmatprep.subr.mxu0 %v848
        %868 = vmatpush1.msra.mxu0 %v847
        %869 = vmatprep.subr.mxu0 %v850
        %870 = vmatpush1.msra.mxu0 %v849
        %871 = vmatprep.subr.mxu0 %v852
        %872 = vmatpush1.msra.mxu0 %v851
        %873 = vmatprep.subr.mxu0 %v854
        %874 = vmatpush1.msra.mxu0 %v853
        %875 = vmatprep.subr.mxu0 0.0
        %876 = vmatpush1.msra.mxu0 0.0
        %877 = vmatprep.subr.mxu0 0.0
        %878 = vmatpush1.msra.mxu0 0.0
        %879 = vmatprep.subr.mxu0 0.0
        %880 = vmatpush1.msra.mxu0 0.0
        %881 = vmatprep.subr.mxu0 0.0
        %882 = vmatpush1.msra.mxu0 0.0
        %883 = vmatprep.subr.mxu0 0.0
        %884 = vmatpush1.msra.mxu0 0.0
        %885 = vmatprep.subr.mxu0 0.0
        %886 = vmatpush1.msra.mxu0 0.0
        %887 = vmatprep.subr.mxu0 0.0
        %888 = vmatpush1.msra.mxu0 0.0
        %889 = vmatprep.subr.mxu0 0.0
        %890 = vmatpush1.msra.mxu0 0.0
        %891 = vmatprep.subr.mxu0 0.0
        %892 = vmatpush1.msra.mxu0 0.0
        %893 = vmatprep.subr.mxu0 0.0
        %894 = vmatpush1.msra.mxu0 0.0
        %895 = vmatprep.subr.mxu0 0.0
        %896 = vmatpush1.msra.mxu0 0.0
        %897 = vmatprep.subr.mxu0 0.0
        %898 = vmatpush1.msra.mxu0 0.0
        %899 = vmatprep.subr.mxu0 0.0
        %900 = vmatpush1.msra.mxu0 0.0
        %901 = vmatprep.subr.mxu0 0.0
        %902 = vmatpush1.msra.mxu0 0.0
        %903 = vmatprep.subr.mxu0 0.0
        %904 = vmatpush1.msra.mxu0 0.0
        %905 = vmatprep.subr.mxu0 0.0
        %906 = vmatpush1.msra.mxu0 0.0
        %907 = vmatprep.subr.mxu0 0.0
        %908 = vmatpush1.msra.mxu0 0.0
        %909 = vmatprep.subr.mxu0 0.0
        %910 = vmatpush1.msra.mxu0 0.0
        %911 = vmatprep.subr.mxu0 0.0
        %912 = vmatpush1.msra.mxu0 0.0
        %913 = vmatprep.subr.mxu0 0.0
        %914 = vmatpush1.msra.mxu0 0.0
        %915 = vmatprep.subr.mxu0 0.0
        %916 = vmatpush1.msra.mxu0 0.0
        %917 = vmatprep.subr.mxu0 0.0
        %918 = vmatpush1.msra.mxu0 0.0
        %919 = vmatprep.subr.mxu0 0.0
        %920 = vmatpush1.msra.mxu0 0.0
        %921 = vmatprep.subr.mxu0 0.0
        %922 = vmatpush1.msra.mxu0 0.0
        %923 = vmatprep.subr.mxu0 0.0
        %924 = vmatpush1.msra.mxu0 0.0
        %925 = vmatprep.subr.mxu0 0.0
        %926 = vmatpush1.msra.mxu0 0.0
        %927 = vmatprep.subr.mxu0 0.0
        %928 = vmatpush1.msra.mxu0 0.0
        %929 = vmatprep.subr.mxu0 0.0
        %930 = vmatpush1.msra.mxu0 0.0
        %931 = vmatprep.mubr.f32.mxu0 0.0
        %932 = vmatmul.mubr.f32.gmra.mrb[0].mxu0 %v856
        %v933 = vpop.f32.mrb[0].mxu0
        %v934 = vadd.f32 0.0, %v933
        %v935 = vpop.f32.mrb[0].mxu0
        %v936 = vadd.f32 0.0, %v935
        %937 = vmatprep.mubr.f32.mxu0 0.0
        %938 = vmatmul.mubr.f32.gmra.mrb[0].mxu0 %v859
        %v939 = vpop.f32.mrb[0].mxu0
        %v940 = vadd.f32 0.0, %v939
        %v941 = vpop.f32.mrb[0].mxu0
        %v942 = vadd.f32 0.0, %v941
        %943 = vmatprep.mubr.f32.mxu0 0.0
        %944 = vmatmul.mubr.f32.gmra.mrb[0].mxu0 %v862
        %v945 = vpop.f32.mrb[0].mxu0
        %v946 = vadd.f32 0.0, %v945
        %v947 = vpop.f32.mrb[0].mxu0
        %v948 = vadd.f32 0.0, %v947
        %949 = vmatprep.mubr.f32.mxu0 0.0
        %950 = vmatmul.mubr.f32.gmra.mrb[0].mxu0 %v865
        %v951 = vpop.f32.mrb[0].mxu0
        %v952 = vadd.f32 0.0, %v951
        %v953 = vpop.f32.mrb[0].mxu0
        %v954 = vadd.f32 0.0, %v953
        %955 = vdwg.mxu0
        %v956 = vadd.f32 %v834, %v934
        %v957 = vadd.f32 %v835, %v936
        %v958 = vadd.f32 %v836, %v940
        %v959 = vadd.f32 %v837, %v942
        %v960 = vadd.f32 %v838, %v946
        %v961 = vadd.f32 %v839, %v948
        %v962 = vadd.f32 %v840, %v952
        %v963 = vadd.f32 %v841, %v954
        %v964 = vld [vmem:[%s491 + $0x4] sm:$0xff]
        %v965 = vld [vmem:[%s491 + $0xc] sm:$0xff]
        %v966 = vld [vmem:[%s491 + $0x14] sm:$0xff]
        %v967 = vld [vmem:[%s491 + $0x1c] sm:$0xf]
        %s968 = scalar_lea.vmem %s1, 256
        %v969 = vld [vmem:[%s968] sm:$0xff]
        %v970 = vld [vmem:[%s968 + $0x8] sm:$0xff]
        %v971 = vld [vmem:[%s968 + $0x10] sm:$0xff]
        %v972 = vld [vmem:[%s968 + $0x18] sm:$0xff]
        %v973 = vld [vmem:[%s968 + $0x20] sm:$0xff]
        %v974 = vld [vmem:[%s968 + $0x28] sm:$0xff]
        %v975 = vld [vmem:[%s968 + $0x30] sm:$0xff]
        %v976 = vld [vmem:[%s968 + $0x38] sm:$0xff]
        %v978 = vsel %vm517, %v964, 0
        %v981 = vsel %vm517, %v965, 0
        %v984 = vsel %vm517, %v966, 0
        %v987 = vsel %vm517, %v967, 0
        %989 = vmatprep.subr.mxu0 %v970
        %990 = vmatpush1.msra.mxu0 %v969
        %991 = vmatprep.subr.mxu0 %v972
        %992 = vmatpush1.msra.mxu0 %v971
        %993 = vmatprep.subr.mxu0 %v974
        %994 = vmatpush1.msra.mxu0 %v973
        %995 = vmatprep.subr.mxu0 %v976
        %996 = vmatpush1.msra.mxu0 %v975
        %997 = vmatprep.subr.mxu0 0.0
        %998 = vmatpush1.msra.mxu0 0.0
        %999 = vmatprep.subr.mxu0 0.0
        %1000 = vmatpush1.msra.mxu0 0.0
        %1001 = vmatprep.subr.mxu0 0.0
        %1002 = vmatpush1.msra.mxu0 0.0
        %1003 = vmatprep.subr.mxu0 0.0
        %1004 = vmatpush1.msra.mxu0 0.0
        %1005 = vmatprep.subr.mxu0 0.0
        %1006 = vmatpush1.msra.mxu0 0.0
        %1007 = vmatprep.subr.mxu0 0.0
        %1008 = vmatpush1.msra.mxu0 0.0
        %1009 = vmatprep.subr.mxu0 0.0
        %1010 = vmatpush1.msra.mxu0 0.0
        %1011 = vmatprep.subr.mxu0 0.0
        %1012 = vmatpush1.msra.mxu0 0.0
        %1013 = vmatprep.subr.mxu0 0.0
        %1014 = vmatpush1.msra.mxu0 0.0
        %1015 = vmatprep.subr.mxu0 0.0
        %1016 = vmatpush1.msra.mxu0 0.0
        %1017 = vmatprep.subr.mxu0 0.0
        %1018 = vmatpush1.msra.mxu0 0.0
        %1019 = vmatprep.subr.mxu0 0.0
        %1020 = vmatpush1.msra.mxu0 0.0
        %1021 = vmatprep.subr.mxu0 0.0
        %1022 = vmatpush1.msra.mxu0 0.0
        %1023 = vmatprep.subr.mxu0 0.0
        %1024 = vmatpush1.msra.mxu0 0.0
        %1025 = vmatprep.subr.mxu0 0.0
        %1026 = vmatpush1.msra.mxu0 0.0
        %1027 = vmatprep.subr.mxu0 0.0
        %1028 = vmatpush1.msra.mxu0 0.0
        %1029 = vmatprep.subr.mxu0 0.0
        %1030 = vmatpush1.msra.mxu0 0.0
        %1031 = vmatprep.subr.mxu0 0.0
        %1032 = vmatpush1.msra.mxu0 0.0
        %1033 = vmatprep.subr.mxu0 0.0
        %1034 = vmatpush1.msra.mxu0 0.0
        %1035 = vmatprep.subr.mxu0 0.0
        %1036 = vmatpush1.msra.mxu0 0.0
        %1037 = vmatprep.subr.mxu0 0.0
        %1038 = vmatpush1.msra.mxu0 0.0
        %1039 = vmatprep.subr.mxu0 0.0
        %1040 = vmatpush1.msra.mxu0 0.0
        %1041 = vmatprep.subr.mxu0 0.0
        %1042 = vmatpush1.msra.mxu0 0.0
        %1043 = vmatprep.subr.mxu0 0.0
        %1044 = vmatpush1.msra.mxu0 0.0
        %1045 = vmatprep.subr.mxu0 0.0
        %1046 = vmatpush1.msra.mxu0 0.0
        %1047 = vmatprep.subr.mxu0 0.0
        %1048 = vmatpush1.msra.mxu0 0.0
        %1049 = vmatprep.subr.mxu0 0.0
        %1050 = vmatpush1.msra.mxu0 0.0
        %1051 = vmatprep.subr.mxu0 0.0
        %1052 = vmatpush1.msra.mxu0 0.0
        %1053 = vmatprep.mubr.f32.mxu0 0.0
        %1054 = vmatmul.mubr.f32.gmra.mrb[0].mxu0 %v978
        %v1055 = vpop.f32.mrb[0].mxu0
        %v1056 = vadd.f32 0.0, %v1055
        %v1057 = vpop.f32.mrb[0].mxu0
        %v1058 = vadd.f32 0.0, %v1057
        %1059 = vmatprep.mubr.f32.mxu0 0.0
        %1060 = vmatmul.mubr.f32.gmra.mrb[0].mxu0 %v981
        %v1061 = vpop.f32.mrb[0].mxu0
        %v1062 = vadd.f32 0.0, %v1061
        %v1063 = vpop.f32.mrb[0].mxu0
        %v1064 = vadd.f32 0.0, %v1063
        %1065 = vmatprep.mubr.f32.mxu0 0.0
        %1066 = vmatmul.mubr.f32.gmra.mrb[0].mxu0 %v984
        %v1067 = vpop.f32.mrb[0].mxu0
        %v1068 = vadd.f32 0.0, %v1067
        %v1069 = vpop.f32.mrb[0].mxu0
        %v1070 = vadd.f32 0.0, %v1069
        %1071 = vmatprep.mubr.f32.mxu0 0.0
        %1072 = vmatmul.mubr.f32.gmra.mrb[0].mxu0 %v987
        %v1073 = vpop.f32.mrb[0].mxu0
        %v1074 = vadd.f32 0.0, %v1073
        %v1075 = vpop.f32.mrb[0].mxu0
        %v1076 = vadd.f32 0.0, %v1075
        %1077 = vdwg.mxu0
        %v1078 = vadd.f32 %v956, %v1056
        %v1079 = vadd.f32 %v957, %v1058
        %v1080 = vadd.f32 %v958, %v1062
        %v1081 = vadd.f32 %v959, %v1064
        %v1082 = vadd.f32 %v960, %v1068
        %v1083 = vadd.f32 %v961, %v1070
        %v1084 = vadd.f32 %v962, %v1074
        %v1085 = vadd.f32 %v963, %v1076
        %v1086 = vld [vmem:[%s2] sm:$0x3]
        %v1088 = vlaneseq
        %v1089 = vshrl.u32 %v1088, 7
        %v1090 = vsub.s32 0, %v1089
        %v1091 = vrot.slane %v1086, %v1090
        %v1092 = vlaneseq
        %v1093 = vshrl.u32 %v1092, 7
        %v1094 = vsub.s32 1, %v1093
        %v1095 = vrot.slane %v1086, %v1094
        %v1098 = vadd.f32 %v1078, %v1091
        %v1099 = vadd.f32 %v1079, %v1095
        %v1100 = vadd.f32 %v1080, %v1091
        %v1101 = vadd.f32 %v1081, %v1095
        %v1102 = vadd.f32 %v1082, %v1091
        %v1103 = vadd.f32 %v1083, %v1095
        %v1104 = vadd.f32 %v1084, %v1091
        %v1105 = vadd.f32 %v1085, %v1095
        %v1106 = vmax.f32 %v1098, 0.0
        %v1107 = vmax.f32 %v1099, 0.0
        %v1108 = vmax.f32 %v1100, 0.0
        %v1109 = vmax.f32 %v1101, 0.0
        %v1110 = vmax.f32 %v1102, 0.0
        %v1111 = vmax.f32 %v1103, 0.0
        %v1112 = vmax.f32 %v1104, 0.0
        %v1113 = vmax.f32 %v1105, 0.0
        %v1114 = vld [vmem:[%s4] sm:$0xff]
        %v1115 = vld [vmem:[%s4 + $0x8] sm:$0x3f]
        %v1116 = vld [vmem:[%s3] sm:$0xff]
        %v1117 = vld [vmem:[%s3 + $0x8] sm:$0xff]
        %v1118 = vld [vmem:[%s3 + $0x10] sm:$0xff]
        %v1119 = vld [vmem:[%s3 + $0x18] sm:$0xff]
        %v1120 = vld [vmem:[%s3 + $0x20] sm:$0xff]
        %v1121 = vld [vmem:[%s3 + $0x28] sm:$0xff]
        %v1122 = vld [vmem:[%s3 + $0x30] sm:$0xff]
        %v1123 = vld [vmem:[%s3 + $0x38] sm:$0xff]
        %v1124 = vld [vmem:[%s3 + $0x40] sm:$0xff]
        %v1125 = vld [vmem:[%s3 + $0x48] sm:$0xff]
        %v1126 = vld [vmem:[%s3 + $0x50] sm:$0xff]
        %v1127 = vld [vmem:[%s3 + $0x58] sm:$0xff]
        %v1128 = vld [vmem:[%s3 + $0x60] sm:$0xff]
        %v1129 = vld [vmem:[%s3 + $0x68] sm:$0xff]
        %v1130 = vld [vmem:[%s3 + $0x70] sm:$0xff]
        %v1131 = vld [vmem:[%s3 + $0x78] sm:$0xff]
        %v1132 = vld [vmem:[%s3 + $0x80] sm:$0xff]
        %v1133 = vld [vmem:[%s3 + $0x88] sm:$0xff]
        %v1134 = vld [vmem:[%s3 + $0x90] sm:$0xff]
        %v1135 = vld [vmem:[%s3 + $0x98] sm:$0xff]
        %v1136 = vld [vmem:[%s3 + $0xa0] sm:$0xff]
        %v1137 = vld [vmem:[%s3 + $0xa8] sm:$0xff]
        %v1138 = vld [vmem:[%s3 + $0xb0] sm:$0xff]
        %v1139 = vld [vmem:[%s3 + $0xb8] sm:$0xff]
        %v1140 = vld [vmem:[%s3 + $0xc0] sm:$0xff]
        %v1141 = vld [vmem:[%s3 + $0xc8] sm:$0xff]
        %v1142 = vld [vmem:[%s3 + $0xd0] sm:$0xff]
        %v1143 = vld [vmem:[%s3 + $0xd8] sm:$0xff]
        %vm1144 = vcmask 785408
        %v1146 = vsel %vm1144, %v1107, 0
        %v1149 = vsel %vm1144, %v1109, 0
        %v1152 = vsel %vm1144, %v1111, 0
        %v1155 = vsel %vm1144, %v1113, 0
        %1157 = vmatprep.subr.mxu0 0.0
        %1158 = vmatpush1.msra.mxu0 %v1116
        %1159 = vmatprep.subr.mxu0 0.0
        %1160 = vmatpush1.msra.mxu0 %v1117
        %1161 = vmatprep.subr.mxu0 0.0
        %1162 = vmatpush1.msra.mxu0 %v1118
        %1163 = vmatprep.subr.mxu0 0.0
        %1164 = vmatpush1.msra.mxu0 %v1119
        %1165 = vmatprep.subr.mxu0 0.0
        %1166 = vmatpush1.msra.mxu0 %v1120
        %1167 = vmatprep.subr.mxu0 0.0
        %1168 = vmatpush1.msra.mxu0 %v1121
        %1169 = vmatprep.subr.mxu0 0.0
        %1170 = vmatpush1.msra.mxu0 %v1122
        %1171 = vmatprep.subr.mxu0 0.0
        %1172 = vmatpush1.msra.mxu0 %v1123
        %1173 = vmatprep.subr.mxu0 0.0
        %1174 = vmatpush1.msra.mxu0 %v1124
        %1175 = vmatprep.subr.mxu0 0.0
        %1176 = vmatpush1.msra.mxu0 %v1125
        %1177 = vmatprep.subr.mxu0 0.0
        %1178 = vmatpush1.msra.mxu0 %v1126
        %1179 = vmatprep.subr.mxu0 0.0
        %1180 = vmatpush1.msra.mxu0 %v1127
        %1181 = vmatprep.subr.mxu0 0.0
        %1182 = vmatpush1.msra.mxu0 %v1128
        %1183 = vmatprep.subr.mxu0 0.0
        %1184 = vmatpush1.msra.mxu0 %v1129
        %1185 = vmatprep.subr.mxu0 0.0
        %1186 = vmatpush1.msra.mxu0 %v1130
        %1187 = vmatprep.subr.mxu0 0.0
        %1188 = vmatpush1.msra.mxu0 %v1131
        %1189 = vmatprep.subr.mxu0 0.0
        %1190 = vmatpush1.msra.mxu0 %v1132
        %1191 = vmatprep.subr.mxu0 0.0
        %1192 = vmatpush1.msra.mxu0 %v1133
        %1193 = vmatprep.subr.mxu0 0.0
        %1194 = vmatpush1.msra.mxu0 %v1134
        %1195 = vmatprep.subr.mxu0 0.0
        %1196 = vmatpush1.msra.mxu0 %v1135
        %1197 = vmatprep.subr.mxu0 0.0
        %1198 = vmatpush1.msra.mxu0 %v1136
        %1199 = vmatprep.subr.mxu0 0.0
        %1200 = vmatpush1.msra.mxu0 %v1137
        %1201 = vmatprep.subr.mxu0 0.0
        %1202 = vmatpush1.msra.mxu0 %v1138
        %1203 = vmatprep.subr.mxu0 0.0
        %1204 = vmatpush1.msra.mxu0 %v1139
        %1205 = vmatprep.subr.mxu0 0.0
        %1206 = vmatpush1.msra.mxu0 %v1140
        %1207 = vmatprep.subr.mxu0 0.0
        %1208 = vmatpush1.msra.mxu0 %v1141
        %1209 = vmatprep.subr.mxu0 0.0
        %1210 = vmatpush1.msra.mxu0 %v1142
        %1211 = vmatprep.subr.mxu0 0.0
        %1212 = vmatpush1.msra.mxu0 %v1143
        %1213 = vmatprep.subr.mxu0 0.0
        %1214 = vmatpush1.msra.mxu0 0.0
        %1215 = vmatprep.subr.mxu0 0.0
        %1216 = vmatpush1.msra.mxu0 0.0
        %1217 = vmatprep.subr.mxu0 0.0
        %1218 = vmatpush1.msra.mxu0 0.0
        %1219 = vmatprep.subr.mxu0 0.0
        %1220 = vmatpush1.msra.mxu0 0.0
        %1221 = vmatprep.mubr.f32.mxu0 %v1146
        %1222 = vmatmul.mubr.f32.gmra.mrb[0].mxu0 %v1106
        %v1223 = vpop.f32.mrb[0].mxu0
        %v1224 = vadd.f32 0.0, %v1223
        %v1225 = vpop.f32.mrb[0].mxu0
        %1226 = vmatprep.mubr.f32.mxu0 %v1149
        %1227 = vmatmul.mubr.f32.gmra.mrb[0].mxu0 %v1108
        %v1228 = vpop.f32.mrb[0].mxu0
        %v1229 = vadd.f32 0.0, %v1228
        %v1230 = vpop.f32.mrb[0].mxu0
        %1231 = vmatprep.mubr.f32.mxu0 %v1152
        %1232 = vmatmul.mubr.f32.gmra.mrb[0].mxu0 %v1110
        %v1233 = vpop.f32.mrb[0].mxu0
        %v1234 = vadd.f32 0.0, %v1233
        %v1235 = vpop.f32.mrb[0].mxu0
        %1236 = vmatprep.mubr.f32.mxu0 %v1155
        %1237 = vmatmul.mubr.f32.gmra.mrb[0].mxu0 %v1112
        %v1238 = vpop.f32.mrb[0].mxu0
        %v1239 = vadd.f32 0.0, %v1238
        %v1240 = vpop.f32.mrb[0].mxu0
        %1241 = vdwg.mxu0
        %vm1242 = vcmask 228352
        %v1244 = vsel %vm1242, %v1114, 0
        %v1247 = vsel %vm1242, %v1115, 0
        %vm1249 = vcmask 1043456
        %v1251 = vsel %vm1249, %v1239, 0
        %1253 = vmatprep.subr.mxu0 0.0
        %1254 = vmatpush1.msra.mxu0 %v1224
        %1255 = vmatprep.subr.mxu0 0.0
        %1256 = vmatpush1.msra.mxu0 %v1229
        %1257 = vmatprep.subr.mxu0 0.0
        %1258 = vmatpush1.msra.mxu0 %v1234
        %1259 = vmatprep.subr.mxu0 0.0
        %1260 = vmatpush1.msra.mxu0 %v1251
        %1261 = vmatprep.subr.mxu0 0.0
        %1262 = vmatpush1.msra.mxu0 0.0
        %1263 = vmatprep.subr.mxu0 0.0
        %1264 = vmatpush1.msra.mxu0 0.0
        %1265 = vmatprep.subr.mxu0 0.0
        %1266 = vmatpush1.msra.mxu0 0.0
        %1267 = vmatprep.subr.mxu0 0.0
        %1268 = vmatpush1.msra.mxu0 0.0
        %1269 = vmatprep.subr.mxu0 0.0
        %1270 = vmatpush1.msra.mxu0 0.0
        %1271 = vmatprep.subr.mxu0 0.0
        %1272 = vmatpush1.msra.mxu0 0.0
        %1273 = vmatprep.subr.mxu0 0.0
        %1274 = vmatpush1.msra.mxu0 0.0
        %1275 = vmatprep.subr.mxu0 0.0
        %1276 = vmatpush1.msra.mxu0 0.0
        %1277 = vmatprep.subr.mxu0 0.0
        %1278 = vmatpush1.msra.mxu0 0.0
        %1279 = vmatprep.subr.mxu0 0.0
        %1280 = vmatpush1.msra.mxu0 0.0
        %1281 = vmatprep.subr.mxu0 0.0
        %1282 = vmatpush1.msra.mxu0 0.0
        %1283 = vmatprep.subr.mxu0 0.0
        %1284 = vmatpush1.msra.mxu0 0.0
        %1285 = vmatprep.subr.mxu0 0.0
        %1286 = vmatpush1.msra.mxu0 0.0
        %1287 = vmatprep.subr.mxu0 0.0
        %1288 = vmatpush1.msra.mxu0 0.0
        %1289 = vmatprep.subr.mxu0 0.0
        %1290 = vmatpush1.msra.mxu0 0.0
        %1291 = vmatprep.subr.mxu0 0.0
        %1292 = vmatpush1.msra.mxu0 0.0
        %1293 = vmatprep.subr.mxu0 0.0
        %1294 = vmatpush1.msra.mxu0 0.0
        %1295 = vmatprep.subr.mxu0 0.0
        %1296 = vmatpush1.msra.mxu0 0.0
        %1297 = vmatprep.subr.mxu0 0.0
        %1298 = vmatpush1.msra.mxu0 0.0
        %1299 = vmatprep.subr.mxu0 0.0
        %1300 = vmatpush1.msra.mxu0 0.0
        %1301 = vmatprep.subr.mxu0 0.0
        %1302 = vmatpush1.msra.mxu0 0.0
        %1303 = vmatprep.subr.mxu0 0.0
        %1304 = vmatpush1.msra.mxu0 0.0
        %1305 = vmatprep.subr.mxu0 0.0
        %1306 = vmatpush1.msra.mxu0 0.0
        %1307 = vmatprep.subr.mxu0 0.0
        %1308 = vmatpush1.msra.mxu0 0.0
        %1309 = vmatprep.subr.mxu0 0.0
        %1310 = vmatpush1.msra.mxu0 0.0
        %1311 = vmatprep.subr.mxu0 0.0
        %1312 = vmatpush1.msra.mxu0 0.0
        %1313 = vmatprep.subr.mxu0 0.0
        %1314 = vmatpush1.msra.mxu0 0.0
        %1315 = vmatprep.subr.mxu0 0.0
        %1316 = vmatpush1.msra.mxu0 0.0
        %1317 = vmatprep.mubr.f32.mxu0 0.0
        %1318 = vmatmul.mubr.f32.gmra.mrb[0].mxu0 %v1244
        %v1319 = vpop.f32.mrb[0].mxu0
        %v1320 = vadd.f32 0.0, %v1319
        %v1321 = vpop.f32.mrb[0].mxu0
        %1322 = vmatprep.mubr.f32.mxu0 0.0
        %1323 = vmatmul.mubr.f32.gmra.mrb[0].mxu0 %v1247
        %v1324 = vpop.f32.mrb[0].mxu0
        %v1325 = vadd.f32 0.0, %v1324
        %v1326 = vpop.f32.mrb[0].mxu0
        %1327 = vdwg.mxu0
        %vm1328 = vcmask 916480
        %1329 = vst.msk [vmem:[#allocation2] sm:$0xff] %vm1328, %v1320
        %vm1330 = vcmask 914432
        %1331 = vst.msk [vmem:[#allocation2 + $0x8] sm:$0x3f] %vm1330, %v1325
        %v1332 = vld [vmem:[#allocation2] sm:$0xff]
        %v1333 = vld [vmem:[#allocation2 + $0x8] sm:$0x3]
        %v1334 = vld [vmem:[%s5] sm:$0xff]
        %v1335 = vld [vmem:[%s5 + $0x8] sm:$0xff]
        %v1336 = vld [vmem:[%s5 + $0x10] sm:$0xff]
        %v1337 = vld [vmem:[%s5 + $0x18] sm:$0xff]
        %v1338 = vld [vmem:[%s5 + $0x20] sm:$0xff]
        %v1339 = vld [vmem:[%s5 + $0x28] sm:$0xff]
        %v1340 = vld [vmem:[%s5 + $0x30] sm:$0xff]
        %v1341 = vld [vmem:[%s5 + $0x38] sm:$0xff]
        %v1342 = vld [vmem:[%s5 + $0x40] sm:$0xff]
        %v1343 = vld [vmem:[%s5 + $0x48] sm:$0xff]
        %v1344 = vld [vmem:[%s5 + $0x50] sm:$0xff]
        %v1345 = vld [vmem:[%s5 + $0x58] sm:$0xff]
        %v1346 = vld [vmem:[%s5 + $0x60] sm:$0xff]
        %v1347 = vld [vmem:[%s5 + $0x68] sm:$0xff]
        %v1348 = vld [vmem:[%s5 + $0x70] sm:$0xff]
        %v1349 = vld [vmem:[%s5 + $0x78] sm:$0xff]
        %v1350 = vld [vmem:[%s5 + $0x80] sm:$0xff]
        %v1351 = vld [vmem:[%s5 + $0x88] sm:$0xff]
        %v1352 = vld [vmem:[%s5 + $0x90] sm:$0xff]
        %v1353 = vld [vmem:[%s5 + $0x98] sm:$0xff]
        %v1354 = vld [vmem:[%s5 + $0xa0] sm:$0xff]
        %v1355 = vld [vmem:[%s5 + $0xa8] sm:$0xff]
        %v1356 = vld [vmem:[%s5 + $0xb0] sm:$0xff]
        %v1357 = vld [vmem:[%s5 + $0xb8] sm:$0xff]
        %v1358 = vld [vmem:[%s5 + $0xc0] sm:$0xff]
        %v1359 = vld [vmem:[%s5 + $0xc8] sm:$0xff]
        %v1360 = vld [vmem:[%s5 + $0xd0] sm:$0xff]
        %v1361 = vld [vmem:[%s5 + $0xd8] sm:$0xff]
        %v1362 = vld [vmem:[#allocation2 + $0x1] sm:$0xff]
        %v1363 = vld [vmem:[#allocation2 + $0x9] sm:$0x3]
        %s1364 = scalar_lea.vmem %s5, 224
        %v1365 = vld [vmem:[%s1364] sm:$0xff]
        %v1366 = vld [vmem:[%s1364 + $0x8] sm:$0xff]
        %v1367 = vld [vmem:[%s1364 + $0x10] sm:$0xff]
        %v1368 = vld [vmem:[%s1364 + $0x18] sm:$0xff]
        %v1369 = vld [vmem:[%s1364 + $0x20] sm:$0xff]
        %v1370 = vld [vmem:[%s1364 + $0x28] sm:$0xff]
        %v1371 = vld [vmem:[%s1364 + $0x30] sm:$0xff]
        %v1372 = vld [vmem:[%s1364 + $0x38] sm:$0xff]
        %v1373 = vld [vmem:[%s1364 + $0x40] sm:$0xff]
        %v1374 = vld [vmem:[%s1364 + $0x48] sm:$0xff]
        %v1375 = vld [vmem:[%s1364 + $0x50] sm:$0xff]
        %v1376 = vld [vmem:[%s1364 + $0x58] sm:$0xff]
        %v1377 = vld [vmem:[%s1364 + $0x60] sm:$0xff]
        %v1378 = vld [vmem:[%s1364 + $0x68] sm:$0xff]
        %v1379 = vld [vmem:[%s1364 + $0x70] sm:$0xff]
        %v1380 = vld [vmem:[%s1364 + $0x78] sm:$0xff]
        %v1381 = vld [vmem:[%s1364 + $0x80] sm:$0xff]
        %v1382 = vld [vmem:[%s1364 + $0x88] sm:$0xff]
        %v1383 = vld [vmem:[%s1364 + $0x90] sm:$0xff]
        %v1384 = vld [vmem:[%s1364 + $0x98] sm:$0xff]
        %v1385 = vld [vmem:[%s1364 + $0xa0] sm:$0xff]
        %v1386 = vld [vmem:[%s1364 + $0xa8] sm:$0xff]
        %v1387 = vld [vmem:[%s1364 + $0xb0] sm:$0xff]
        %v1388 = vld [vmem:[%s1364 + $0xb8] sm:$0xff]
        %v1389 = vld [vmem:[%s1364 + $0xc0] sm:$0xff]
        %v1390 = vld [vmem:[%s1364 + $0xc8] sm:$0xff]
        %v1391 = vld [vmem:[%s1364 + $0xd0] sm:$0xff]
        %v1392 = vld [vmem:[%s1364 + $0xd8] sm:$0xff]
        %v1394 = vsel %vm1328, %v1362, 0
        %v1397 = vsel %vm1328, %v1363, 0
        %1399 = vmatprep.subr.mxu0 %v1366
        %1400 = vmatpush1.msra.mxu0 %v1365
        %1401 = vmatprep.subr.mxu0 %v1368
        %1402 = vmatpush1.msra.mxu0 %v1367
        %1403 = vmatprep.subr.mxu0 %v1370
        %1404 = vmatpush1.msra.mxu0 %v1369
        %1405 = vmatprep.subr.mxu0 %v1372
        %1406 = vmatpush1.msra.mxu0 %v1371
        %1407 = vmatprep.subr.mxu0 %v1374
        %1408 = vmatpush1.msra.mxu0 %v1373
        %1409 = vmatprep.subr.mxu0 %v1376
        %1410 = vmatpush1.msra.mxu0 %v1375
        %1411 = vmatprep.subr.mxu0 %v1378
        %1412 = vmatpush1.msra.mxu0 %v1377
        %1413 = vmatprep.subr.mxu0 %v1380
        %1414 = vmatpush1.msra.mxu0 %v1379
        %1415 = vmatprep.subr.mxu0 %v1382
        %1416 = vmatpush1.msra.mxu0 %v1381
        %1417 = vmatprep.subr.mxu0 %v1384
        %1418 = vmatpush1.msra.mxu0 %v1383
        %1419 = vmatprep.subr.mxu0 %v1386
        %1420 = vmatpush1.msra.mxu0 %v1385
        %1421 = vmatprep.subr.mxu0 %v1388
        %1422 = vmatpush1.msra.mxu0 %v1387
        %1423 = vmatprep.subr.mxu0 %v1390
        %1424 = vmatpush1.msra.mxu0 %v1389
        %1425 = vmatprep.subr.mxu0 %v1392
        %1426 = vmatpush1.msra.mxu0 %v1391
        %1427 = vmatprep.subr.mxu0 0.0
        %1428 = vmatpush1.msra.mxu0 0.0
        %1429 = vmatprep.subr.mxu0 0.0
        %1430 = vmatpush1.msra.mxu0 0.0
        %1431 = vmatprep.subr.mxu0 0.0
        %1432 = vmatpush1.msra.mxu0 0.0
        %1433 = vmatprep.subr.mxu0 0.0
        %1434 = vmatpush1.msra.mxu0 0.0
        %1435 = vmatprep.subr.mxu0 0.0
        %1436 = vmatpush1.msra.mxu0 0.0
        %1437 = vmatprep.subr.mxu0 0.0
        %1438 = vmatpush1.msra.mxu0 0.0
        %1439 = vmatprep.subr.mxu0 0.0
        %1440 = vmatpush1.msra.mxu0 0.0
        %1441 = vmatprep.subr.mxu0 0.0
        %1442 = vmatpush1.msra.mxu0 0.0
        %1443 = vmatprep.subr.mxu0 0.0
        %1444 = vmatpush1.msra.mxu0 0.0
        %1445 = vmatprep.subr.mxu0 0.0
        %1446 = vmatpush1.msra.mxu0 0.0
        %1447 = vmatprep.subr.mxu0 0.0
        %1448 = vmatpush1.msra.mxu0 0.0
        %1449 = vmatprep.subr.mxu0 0.0
        %1450 = vmatpush1.msra.mxu0 0.0
        %1451 = vmatprep.subr.mxu0 0.0
        %1452 = vmatpush1.msra.mxu0 0.0
        %1453 = vmatprep.subr.mxu0 0.0
        %1454 = vmatpush1.msra.mxu0 0.0
        %1455 = vmatprep.subr.mxu0 0.0
        %1456 = vmatpush1.msra.mxu0 0.0
        %1457 = vmatprep.subr.mxu0 0.0
        %1458 = vmatpush1.msra.mxu0 0.0
        %1459 = vmatprep.subr.mxu0 0.0
        %1460 = vmatpush1.msra.mxu0 0.0
        %1461 = vmatprep.subr.mxu0 0.0
        %1462 = vmatpush1.msra.mxu0 0.0
        %1463 = vmatprep.mubr.f32.mxu0 0.0
        %1464 = vmatmul.mubr.f32.gmra.mrb[0].mxu0 %v1394
        %v1465 = vpop.f32.mrb[0].mxu0
        %v1466 = vadd.f32 0.0, %v1465
        %v1467 = vpop.f32.mrb[0].mxu0
        %v1468 = vadd.f32 0.0, %v1467
        %1469 = vmatprep.mubr.f32.mxu0 0.0
        %1470 = vmatmul.mubr.f32.gmra.mrb[0].mxu0 %v1397
        %v1471 = vpop.f32.mrb[0].mxu0
        %v1472 = vadd.f32 0.0, %v1471
        %v1473 = vpop.f32.mrb[0].mxu0
        %v1474 = vadd.f32 0.0, %v1473
        %1475 = vdwg.mxu0
        %v1477 = vsel %vm1328, %v1332, 0
        %v1480 = vsel %vm1328, %v1333, 0
        %1482 = vmatprep.subr.mxu0 %v1335
        %1483 = vmatpush1.msra.mxu0 %v1334
        %1484 = vmatprep.subr.mxu0 %v1337
        %1485 = vmatpush1.msra.mxu0 %v1336
        %1486 = vmatprep.subr.mxu0 %v1339
        %1487 = vmatpush1.msra.mxu0 %v1338
        %1488 = vmatprep.subr.mxu0 %v1341
        %1489 = vmatpush1.msra.mxu0 %v1340
        %1490 = vmatprep.subr.mxu0 %v1343
        %1491 = vmatpush1.msra.mxu0 %v1342
        %1492 = vmatprep.subr.mxu0 %v1345
        %1493 = vmatpush1.msra.mxu0 %v1344
        %1494 = vmatprep.subr.mxu0 %v1347
        %1495 = vmatpush1.msra.mxu0 %v1346
        %1496 = vmatprep.subr.mxu0 %v1349
        %1497 = vmatpush1.msra.mxu0 %v1348
        %1498 = vmatprep.subr.mxu0 %v1351
        %1499 = vmatpush1.msra.mxu0 %v1350
        %1500 = vmatprep.subr.mxu0 %v1353
        %1501 = vmatpush1.msra.mxu0 %v1352
        %1502 = vmatprep.subr.mxu0 %v1355
        %1503 = vmatpush1.msra.mxu0 %v1354
        %1504 = vmatprep.subr.mxu0 %v1357
        %1505 = vmatpush1.msra.mxu0 %v1356
        %1506 = vmatprep.subr.mxu0 %v1359
        %1507 = vmatpush1.msra.mxu0 %v1358
        %1508 = vmatprep.subr.mxu0 %v1361
        %1509 = vmatpush1.msra.mxu0 %v1360
        %1510 = vmatprep.subr.mxu0 0.0
        %1511 = vmatpush1.msra.mxu0 0.0
        %1512 = vmatprep.subr.mxu0 0.0
        %1513 = vmatpush1.msra.mxu0 0.0
        %1514 = vmatprep.subr.mxu0 0.0
        %1515 = vmatpush1.msra.mxu0 0.0
        %1516 = vmatprep.subr.mxu0 0.0
        %1517 = vmatpush1.msra.mxu0 0.0
        %1518 = vmatprep.subr.mxu0 0.0
        %1519 = vmatpush1.msra.mxu0 0.0
        %1520 = vmatprep.subr.mxu0 0.0
        %1521 = vmatpush1.msra.mxu0 0.0
        %1522 = vmatprep.subr.mxu0 0.0
        %1523 = vmatpush1.msra.mxu0 0.0
        %1524 = vmatprep.subr.mxu0 0.0
        %1525 = vmatpush1.msra.mxu0 0.0
        %1526 = vmatprep.subr.mxu0 0.0
        %1527 = vmatpush1.msra.mxu0 0.0
        %1528 = vmatprep.subr.mxu0 0.0
        %1529 = vmatpush1.msra.mxu0 0.0
        %1530 = vmatprep.subr.mxu0 0.0
        %1531 = vmatpush1.msra.mxu0 0.0
        %1532 = vmatprep.subr.mxu0 0.0
        %1533 = vmatpush1.msra.mxu0 0.0
        %1534 = vmatprep.subr.mxu0 0.0
        %1535 = vmatpush1.msra.mxu0 0.0
        %1536 = vmatprep.subr.mxu0 0.0
        %1537 = vmatpush1.msra.mxu0 0.0
        %1538 = vmatprep.subr.mxu0 0.0
        %1539 = vmatpush1.msra.mxu0 0.0
        %1540 = vmatprep.subr.mxu0 0.0
        %1541 = vmatpush1.msra.mxu0 0.0
        %1542 = vmatprep.subr.mxu0 0.0
        %1543 = vmatpush1.msra.mxu0 0.0
        %1544 = vmatprep.subr.mxu0 0.0
        %1545 = vmatpush1.msra.mxu0 0.0
        %1546 = vmatprep.mubr.f32.mxu0 0.0
        %1547 = vmatmul.mubr.f32.gmra.mrb[0].mxu0 %v1477
        %v1548 = vpop.f32.mrb[0].mxu0
        %v1549 = vadd.f32 %v1466, %v1548
        %v1550 = vpop.f32.mrb[0].mxu0
        %v1551 = vadd.f32 %v1468, %v1550
        %1552 = vmatprep.mubr.f32.mxu0 0.0
        %1553 = vmatmul.mubr.f32.gmra.mrb[0].mxu0 %v1480
        %v1554 = vpop.f32.mrb[0].mxu0
        %v1555 = vadd.f32 %v1472, %v1554
        %v1556 = vpop.f32.mrb[0].mxu0
        %v1557 = vadd.f32 %v1474, %v1556
        %1558 = vdwg.mxu0
        %v1559 = vld [vmem:[#allocation2 + $0x2] sm:$0xff]
        %v1560 = vld [vmem:[#allocation2 + $0xa] sm:$0x3]
        %s1561 = scalar_lea.vmem %s5, 448
        %v1562 = vld [vmem:[%s1561] sm:$0xff]
        %v1563 = vld [vmem:[%s1561 + $0x8] sm:$0xff]
        %v1564 = vld [vmem:[%s1561 + $0x10] sm:$0xff]
        %v1565 = vld [vmem:[%s1561 + $0x18] sm:$0xff]
        %v1566 = vld [vmem:[%s1561 + $0x20] sm:$0xff]
        %v1567 = vld [vmem:[%s1561 + $0x28] sm:$0xff]
        %v1568 = vld [vmem:[%s1561 + $0x30] sm:$0xff]
        %v1569 = vld [vmem:[%s1561 + $0x38] sm:$0xff]
        %v1570 = vld [vmem:[%s1561 + $0x40] sm:$0xff]
        %v1571 = vld [vmem:[%s1561 + $0x48] sm:$0xff]
        %v1572 = vld [vmem:[%s1561 + $0x50] sm:$0xff]
        %v1573 = vld [vmem:[%s1561 + $0x58] sm:$0xff]
        %v1574 = vld [vmem:[%s1561 + $0x60] sm:$0xff]
        %v1575 = vld [vmem:[%s1561 + $0x68] sm:$0xff]
        %v1576 = vld [vmem:[%s1561 + $0x70] sm:$0xff]
        %v1577 = vld [vmem:[%s1561 + $0x78] sm:$0xff]
        %v1578 = vld [vmem:[%s1561 + $0x80] sm:$0xff]
        %v1579 = vld [vmem:[%s1561 + $0x88] sm:$0xff]
        %v1580 = vld [vmem:[%s1561 + $0x90] sm:$0xff]
        %v1581 = vld [vmem:[%s1561 + $0x98] sm:$0xff]
        %v1582 = vld [vmem:[%s1561 + $0xa0] sm:$0xff]
        %v1583 = vld [vmem:[%s1561 + $0xa8] sm:$0xff]
        %v1584 = vld [vmem:[%s1561 + $0xb0] sm:$0xff]
        %v1585 = vld [vmem:[%s1561 + $0xb8] sm:$0xff]
        %v1586 = vld [vmem:[%s1561 + $0xc0] sm:$0xff]
        %v1587 = vld [vmem:[%s1561 + $0xc8] sm:$0xff]
        %v1588 = vld [vmem:[%s1561 + $0xd0] sm:$0xff]
        %v1589 = vld [vmem:[%s1561 + $0xd8] sm:$0xff]
        %v1591 = vsel %vm1328, %v1559, 0
        %v1594 = vsel %vm1328, %v1560, 0
        %1596 = vmatprep.subr.mxu0 %v1563
        %1597 = vmatpush1.msra.mxu0 %v1562
        %1598 = vmatprep.subr.mxu0 %v1565
        %1599 = vmatpush1.msra.mxu0 %v1564
        %1600 = vmatprep.subr.mxu0 %v1567
        %1601 = vmatpush1.msra.mxu0 %v1566
        %1602 = vmatprep.subr.mxu0 %v1569
        %1603 = vmatpush1.msra.mxu0 %v1568
        %1604 = vmatprep.subr.mxu0 %v1571
        %1605 = vmatpush1.msra.mxu0 %v1570
        %1606 = vmatprep.subr.mxu0 %v1573
        %1607 = vmatpush1.msra.mxu0 %v1572
        %1608 = vmatprep.subr.mxu0 %v1575
        %1609 = vmatpush1.msra.mxu0 %v1574
        %1610 = vmatprep.subr.mxu0 %v1577
        %1611 = vmatpush1.msra.mxu0 %v1576
        %1612 = vmatprep.subr.mxu0 %v1579
        %1613 = vmatpush1.msra.mxu0 %v1578
        %1614 = vmatprep.subr.mxu0 %v1581
        %1615 = vmatpush1.msra.mxu0 %v1580
        %1616 = vmatprep.subr.mxu0 %v1583
        %1617 = vmatpush1.msra.mxu0 %v1582
        %1618 = vmatprep.subr.mxu0 %v1585
        %1619 = vmatpush1.msra.mxu0 %v1584
        %1620 = vmatprep.subr.mxu0 %v1587
        %1621 = vmatpush1.msra.mxu0 %v1586
        %1622 = vmatprep.subr.mxu0 %v1589
        %1623 = vmatpush1.msra.mxu0 %v1588
        %1624 = vmatprep.subr.mxu0 0.0
        %1625 = vmatpush1.msra.mxu0 0.0
        %1626 = vmatprep.subr.mxu0 0.0
        %1627 = vmatpush1.msra.mxu0 0.0
        %1628 = vmatprep.subr.mxu0 0.0
        %1629 = vmatpush1.msra.mxu0 0.0
        %1630 = vmatprep.subr.mxu0 0.0
        %1631 = vmatpush1.msra.mxu0 0.0
        %1632 = vmatprep.subr.mxu0 0.0
        %1633 = vmatpush1.msra.mxu0 0.0
        %1634 = vmatprep.subr.mxu0 0.0
        %1635 = vmatpush1.msra.mxu0 0.0
        %1636 = vmatprep.subr.mxu0 0.0
        %1637 = vmatpush1.msra.mxu0 0.0
        %1638 = vmatprep.subr.mxu0 0.0
        %1639 = vmatpush1.msra.mxu0 0.0
        %1640 = vmatprep.subr.mxu0 0.0
        %1641 = vmatpush1.msra.mxu0 0.0
        %1642 = vmatprep.subr.mxu0 0.0
        %1643 = vmatpush1.msra.mxu0 0.0
        %1644 = vmatprep.subr.mxu0 0.0
        %1645 = vmatpush1.msra.mxu0 0.0
        %1646 = vmatprep.subr.mxu0 0.0
        %1647 = vmatpush1.msra.mxu0 0.0
        %1648 = vmatprep.subr.mxu0 0.0
        %1649 = vmatpush1.msra.mxu0 0.0
        %1650 = vmatprep.subr.mxu0 0.0
        %1651 = vmatpush1.msra.mxu0 0.0
        %1652 = vmatprep.subr.mxu0 0.0
        %1653 = vmatpush1.msra.mxu0 0.0
        %1654 = vmatprep.subr.mxu0 0.0
        %1655 = vmatpush1.msra.mxu0 0.0
        %1656 = vmatprep.subr.mxu0 0.0
        %1657 = vmatpush1.msra.mxu0 0.0
        %1658 = vmatprep.subr.mxu0 0.0
        %1659 = vmatpush1.msra.mxu0 0.0
        %1660 = vmatprep.mubr.f32.mxu0 0.0
        %1661 = vmatmul.mubr.f32.gmra.mrb[0].mxu0 %v1591
        %v1662 = vpop.f32.mrb[0].mxu0
        %v1663 = vadd.f32 0.0, %v1662
        %v1664 = vpop.f32.mrb[0].mxu0
        %v1665 = vadd.f32 0.0, %v1664
        %1666 = vmatprep.mubr.f32.mxu0 0.0
        %1667 = vmatmul.mubr.f32.gmra.mrb[0].mxu0 %v1594
        %v1668 = vpop.f32.mrb[0].mxu0
        %v1669 = vadd.f32 0.0, %v1668
        %v1670 = vpop.f32.mrb[0].mxu0
        %v1671 = vadd.f32 0.0, %v1670
        %1672 = vdwg.mxu0
        %v1673 = vadd.f32 %v1549, %v1663
        %v1674 = vadd.f32 %v1551, %v1665
        %v1675 = vadd.f32 %v1555, %v1669
        %v1676 = vadd.f32 %v1557, %v1671
        %v1677 = vld [vmem:[#allocation2 + $0x3] sm:$0xff]
        %v1678 = vld [vmem:[#allocation2 + $0xb] sm:$0x3]
        %s1679 = scalar_lea.vmem %s5, 672
        %v1680 = vld [vmem:[%s1679] sm:$0xff]
        %v1681 = vld [vmem:[%s1679 + $0x8] sm:$0xff]
        %v1682 = vld [vmem:[%s1679 + $0x10] sm:$0xff]
        %v1683 = vld [vmem:[%s1679 + $0x18] sm:$0xff]
        %v1684 = vld [vmem:[%s1679 + $0x20] sm:$0xff]
        %v1685 = vld [vmem:[%s1679 + $0x28] sm:$0xff]
        %v1686 = vld [vmem:[%s1679 + $0x30] sm:$0xff]
        %v1687 = vld [vmem:[%s1679 + $0x38] sm:$0xff]
        %v1688 = vld [vmem:[%s1679 + $0x40] sm:$0xff]
        %v1689 = vld [vmem:[%s1679 + $0x48] sm:$0xff]
        %v1690 = vld [vmem:[%s1679 + $0x50] sm:$0xff]
        %v1691 = vld [vmem:[%s1679 + $0x58] sm:$0xff]
        %v1692 = vld [vmem:[%s1679 + $0x60] sm:$0xff]
        %v1693 = vld [vmem:[%s1679 + $0x68] sm:$0xff]
        %v1694 = vld [vmem:[%s1679 + $0x70] sm:$0xff]
        %v1695 = vld [vmem:[%s1679 + $0x78] sm:$0xff]
        %v1696 = vld [vmem:[%s1679 + $0x80] sm:$0xff]
        %v1697 = vld [vmem:[%s1679 + $0x88] sm:$0xff]
        %v1698 = vld [vmem:[%s1679 + $0x90] sm:$0xff]
        %v1699 = vld [vmem:[%s1679 + $0x98] sm:$0xff]
        %v1700 = vld [vmem:[%s1679 + $0xa0] sm:$0xff]
        %v1701 = vld [vmem:[%s1679 + $0xa8] sm:$0xff]
        %v1702 = vld [vmem:[%s1679 + $0xb0] sm:$0xff]
        %v1703 = vld [vmem:[%s1679 + $0xb8] sm:$0xff]
        %v1704 = vld [vmem:[%s1679 + $0xc0] sm:$0xff]
        %v1705 = vld [vmem:[%s1679 + $0xc8] sm:$0xff]
        %v1706 = vld [vmem:[%s1679 + $0xd0] sm:$0xff]
        %v1707 = vld [vmem:[%s1679 + $0xd8] sm:$0xff]
        %v1709 = vsel %vm1328, %v1677, 0
        %v1712 = vsel %vm1328, %v1678, 0
        %1714 = vmatprep.subr.mxu0 %v1681
        %1715 = vmatpush1.msra.mxu0 %v1680
        %1716 = vmatprep.subr.mxu0 %v1683
        %1717 = vmatpush1.msra.mxu0 %v1682
        %1718 = vmatprep.subr.mxu0 %v1685
        %1719 = vmatpush1.msra.mxu0 %v1684
        %1720 = vmatprep.subr.mxu0 %v1687
        %1721 = vmatpush1.msra.mxu0 %v1686
        %1722 = vmatprep.subr.mxu0 %v1689
        %1723 = vmatpush1.msra.mxu0 %v1688
        %1724 = vmatprep.subr.mxu0 %v1691
        %1725 = vmatpush1.msra.mxu0 %v1690
        %1726 = vmatprep.subr.mxu0 %v1693
        %1727 = vmatpush1.msra.mxu0 %v1692
        %1728 = vmatprep.subr.mxu0 %v1695
        %1729 = vmatpush1.msra.mxu0 %v1694
        %1730 = vmatprep.subr.mxu0 %v1697
        %1731 = vmatpush1.msra.mxu0 %v1696
        %1732 = vmatprep.subr.mxu0 %v1699
        %1733 = vmatpush1.msra.mxu0 %v1698
        %1734 = vmatprep.subr.mxu0 %v1701
        %1735 = vmatpush1.msra.mxu0 %v1700
        %1736 = vmatprep.subr.mxu0 %v1703
        %1737 = vmatpush1.msra.mxu0 %v1702
        %1738 = vmatprep.subr.mxu0 %v1705
        %1739 = vmatpush1.msra.mxu0 %v1704
        %1740 = vmatprep.subr.mxu0 %v1707
        %1741 = vmatpush1.msra.mxu0 %v1706
        %1742 = vmatprep.subr.mxu0 0.0
        %1743 = vmatpush1.msra.mxu0 0.0
        %1744 = vmatprep.subr.mxu0 0.0
        %1745 = vmatpush1.msra.mxu0 0.0
        %1746 = vmatprep.subr.mxu0 0.0
        %1747 = vmatpush1.msra.mxu0 0.0
        %1748 = vmatprep.subr.mxu0 0.0
        %1749 = vmatpush1.msra.mxu0 0.0
        %1750 = vmatprep.subr.mxu0 0.0
        %1751 = vmatpush1.msra.mxu0 0.0
        %1752 = vmatprep.subr.mxu0 0.0
        %1753 = vmatpush1.msra.mxu0 0.0
        %1754 = vmatprep.subr.mxu0 0.0
        %1755 = vmatpush1.msra.mxu0 0.0
        %1756 = vmatprep.subr.mxu0 0.0
        %1757 = vmatpush1.msra.mxu0 0.0
        %1758 = vmatprep.subr.mxu0 0.0
        %1759 = vmatpush1.msra.mxu0 0.0
        %1760 = vmatprep.subr.mxu0 0.0
        %1761 = vmatpush1.msra.mxu0 0.0
        %1762 = vmatprep.subr.mxu0 0.0
        %1763 = vmatpush1.msra.mxu0 0.0
        %1764 = vmatprep.subr.mxu0 0.0
        %1765 = vmatpush1.msra.mxu0 0.0
        %1766 = vmatprep.subr.mxu0 0.0
        %1767 = vmatpush1.msra.mxu0 0.0
        %1768 = vmatprep.subr.mxu0 0.0
        %1769 = vmatpush1.msra.mxu0 0.0
        %1770 = vmatprep.subr.mxu0 0.0
        %1771 = vmatpush1.msra.mxu0 0.0
        %1772 = vmatprep.subr.mxu0 0.0
        %1773 = vmatpush1.msra.mxu0 0.0
        %1774 = vmatprep.subr.mxu0 0.0
        %1775 = vmatpush1.msra.mxu0 0.0
        %1776 = vmatprep.subr.mxu0 0.0
        %1777 = vmatpush1.msra.mxu0 0.0
        %1778 = vmatprep.mubr.f32.mxu0 0.0
        %1779 = vmatmul.mubr.f32.gmra.mrb[0].mxu0 %v1709
        %v1780 = vpop.f32.mrb[0].mxu0
        %v1781 = vadd.f32 0.0, %v1780
        %v1782 = vpop.f32.mrb[0].mxu0
        %v1783 = vadd.f32 0.0, %v1782
        %1784 = vmatprep.mubr.f32.mxu0 0.0
        %1785 = vmatmul.mubr.f32.gmra.mrb[0].mxu0 %v1712
        %v1786 = vpop.f32.mrb[0].mxu0
        %v1787 = vadd.f32 0.0, %v1786
        %v1788 = vpop.f32.mrb[0].mxu0
        %v1789 = vadd.f32 0.0, %v1788
        %1790 = vdwg.mxu0
        %v1791 = vadd.f32 %v1673, %v1781
        %v1792 = vadd.f32 %v1674, %v1783
        %v1793 = vadd.f32 %v1675, %v1787
        %v1794 = vadd.f32 %v1676, %v1789
        %v1795 = vld [vmem:[#allocation2 + $0x4] sm:$0xff]
        %v1796 = vld [vmem:[#allocation2 + $0xc] sm:$0x3]
        %s1797 = scalar_lea.vmem %s5, 896
        %v1798 = vld [vmem:[%s1797] sm:$0xff]
        %v1799 = vld [vmem:[%s1797 + $0x8] sm:$0xff]
        %v1800 = vld [vmem:[%s1797 + $0x10] sm:$0xff]
        %v1801 = vld [vmem:[%s1797 + $0x18] sm:$0xff]
        %v1802 = vld [vmem:[%s1797 + $0x20] sm:$0xff]
        %v1803 = vld [vmem:[%s1797 + $0x28] sm:$0xff]
        %v1804 = vld [vmem:[%s1797 + $0x30] sm:$0xff]
        %v1805 = vld [vmem:[%s1797 + $0x38] sm:$0xff]
        %v1806 = vld [vmem:[%s1797 + $0x40] sm:$0xff]
        %v1807 = vld [vmem:[%s1797 + $0x48] sm:$0xff]
        %v1808 = vld [vmem:[%s1797 + $0x50] sm:$0xff]
        %v1809 = vld [vmem:[%s1797 + $0x58] sm:$0xff]
        %v1810 = vld [vmem:[%s1797 + $0x60] sm:$0xff]
        %v1811 = vld [vmem:[%s1797 + $0x68] sm:$0xff]
        %v1812 = vld [vmem:[%s1797 + $0x70] sm:$0xff]
        %v1813 = vld [vmem:[%s1797 + $0x78] sm:$0xff]
        %v1814 = vld [vmem:[%s1797 + $0x80] sm:$0xff]
        %v1815 = vld [vmem:[%s1797 + $0x88] sm:$0xff]
        %v1816 = vld [vmem:[%s1797 + $0x90] sm:$0xff]
        %v1817 = vld [vmem:[%s1797 + $0x98] sm:$0xff]
        %v1818 = vld [vmem:[%s1797 + $0xa0] sm:$0xff]
        %v1819 = vld [vmem:[%s1797 + $0xa8] sm:$0xff]
        %v1820 = vld [vmem:[%s1797 + $0xb0] sm:$0xff]
        %v1821 = vld [vmem:[%s1797 + $0xb8] sm:$0xff]
        %v1822 = vld [vmem:[%s1797 + $0xc0] sm:$0xff]
        %v1823 = vld [vmem:[%s1797 + $0xc8] sm:$0xff]
        %v1824 = vld [vmem:[%s1797 + $0xd0] sm:$0xff]
        %v1825 = vld [vmem:[%s1797 + $0xd8] sm:$0xff]
        %v1827 = vsel %vm1328, %v1795, 0
        %v1830 = vsel %vm1328, %v1796, 0
        %1832 = vmatprep.subr.mxu0 %v1799
        %1833 = vmatpush1.msra.mxu0 %v1798
        %1834 = vmatprep.subr.mxu0 %v1801
        %1835 = vmatpush1.msra.mxu0 %v1800
        %1836 = vmatprep.subr.mxu0 %v1803
        %1837 = vmatpush1.msra.mxu0 %v1802
        %1838 = vmatprep.subr.mxu0 %v1805
        %1839 = vmatpush1.msra.mxu0 %v1804
        %1840 = vmatprep.subr.mxu0 %v1807
        %1841 = vmatpush1.msra.mxu0 %v1806
        %1842 = vmatprep.subr.mxu0 %v1809
        %1843 = vmatpush1.msra.mxu0 %v1808
        %1844 = vmatprep.subr.mxu0 %v1811
        %1845 = vmatpush1.msra.mxu0 %v1810
        %1846 = vmatprep.subr.mxu0 %v1813
        %1847 = vmatpush1.msra.mxu0 %v1812
        %1848 = vmatprep.subr.mxu0 %v1815
        %1849 = vmatpush1.msra.mxu0 %v1814
        %1850 = vmatprep.subr.mxu0 %v1817
        %1851 = vmatpush1.msra.mxu0 %v1816
        %1852 = vmatprep.subr.mxu0 %v1819
        %1853 = vmatpush1.msra.mxu0 %v1818
        %1854 = vmatprep.subr.mxu0 %v1821
        %1855 = vmatpush1.msra.mxu0 %v1820
        %1856 = vmatprep.subr.mxu0 %v1823
        %1857 = vmatpush1.msra.mxu0 %v1822
        %1858 = vmatprep.subr.mxu0 %v1825
        %1859 = vmatpush1.msra.mxu0 %v1824
        %1860 = vmatprep.subr.mxu0 0.0
        %1861 = vmatpush1.msra.mxu0 0.0
        %1862 = vmatprep.subr.mxu0 0.0
        %1863 = vmatpush1.msra.mxu0 0.0
        %1864 = vmatprep.subr.mxu0 0.0
        %1865 = vmatpush1.msra.mxu0 0.0
        %1866 = vmatprep.subr.mxu0 0.0
        %1867 = vmatpush1.msra.mxu0 0.0
        %1868 = vmatprep.subr.mxu0 0.0
        %1869 = vmatpush1.msra.mxu0 0.0
        %1870 = vmatprep.subr.mxu0 0.0
        %1871 = vmatpush1.msra.mxu0 0.0
        %1872 = vmatprep.subr.mxu0 0.0
        %1873 = vmatpush1.msra.mxu0 0.0
        %1874 = vmatprep.subr.mxu0 0.0
        %1875 = vmatpush1.msra.mxu0 0.0
        %1876 = vmatprep.subr.mxu0 0.0
        %1877 = vmatpush1.msra.mxu0 0.0
        %1878 = vmatprep.subr.mxu0 0.0
        %1879 = vmatpush1.msra.mxu0 0.0
        %1880 = vmatprep.subr.mxu0 0.0
        %1881 = vmatpush1.msra.mxu0 0.0
        %1882 = vmatprep.subr.mxu0 0.0
        %1883 = vmatpush1.msra.mxu0 0.0
        %1884 = vmatprep.subr.mxu0 0.0
        %1885 = vmatpush1.msra.mxu0 0.0
        %1886 = vmatprep.subr.mxu0 0.0
        %1887 = vmatpush1.msra.mxu0 0.0
        %1888 = vmatprep.subr.mxu0 0.0
        %1889 = vmatpush1.msra.mxu0 0.0
        %1890 = vmatprep.subr.mxu0 0.0
        %1891 = vmatpush1.msra.mxu0 0.0
        %1892 = vmatprep.subr.mxu0 0.0
        %1893 = vmatpush1.msra.mxu0 0.0
        %1894 = vmatprep.subr.mxu0 0.0
        %1895 = vmatpush1.msra.mxu0 0.0
        %1896 = vmatprep.mubr.f32.mxu0 0.0
        %1897 = vmatmul.mubr.f32.gmra.mrb[0].mxu0 %v1827
        %v1898 = vpop.f32.mrb[0].mxu0
        %v1899 = vadd.f32 0.0, %v1898
        %v1900 = vpop.f32.mrb[0].mxu0
        %v1901 = vadd.f32 0.0, %v1900
        %1902 = vmatprep.mubr.f32.mxu0 0.0
        %1903 = vmatmul.mubr.f32.gmra.mrb[0].mxu0 %v1830
        %v1904 = vpop.f32.mrb[0].mxu0
        %v1905 = vadd.f32 0.0, %v1904
        %v1906 = vpop.f32.mrb[0].mxu0
        %v1907 = vadd.f32 0.0, %v1906
        %1908 = vdwg.mxu0
        %v1909 = vadd.f32 %v1791, %v1899
        %v1910 = vadd.f32 %v1792, %v1901
        %v1911 = vadd.f32 %v1793, %v1905
        %v1912 = vadd.f32 %v1794, %v1907
        %v1913 = vld [vmem:[%s6] sm:$0x3]
        %v1915 = vlaneseq
        %v1916 = vshrl.u32 %v1915, 7
        %v1917 = vsub.s32 0, %v1916
        %v1918 = vrot.slane %v1913, %v1917
        %v1919 = vlaneseq
        %v1920 = vshrl.u32 %v1919, 7
        %v1921 = vsub.s32 1, %v1920
        %v1922 = vrot.slane %v1913, %v1921
        %v1925 = vadd.f32 %v1909, %v1918
        %v1926 = vadd.f32 %v1910, %v1922
        %v1927 = vadd.f32 %v1911, %v1918
        %v1928 = vadd.f32 %v1912, %v1922
        %v1929 = vmax.f32 %v1925, 0.0
        %v1930 = vmax.f32 %v1926, 0.0
        %v1931 = vmax.f32 %v1927, 0.0
        %v1932 = vmax.f32 %v1928, 0.0
        %v1933 = vld [vmem:[%s8] sm:$0x1f]
        %v1934 = vld [vmem:[%s7] sm:$0xff]
        %v1935 = vld [vmem:[%s7 + $0x8] sm:$0xff]
        %v1936 = vld [vmem:[%s7 + $0x10] sm:$0xff]
        %v1937 = vld [vmem:[%s7 + $0x18] sm:$0xff]
        %v1938 = vld [vmem:[%s7 + $0x20] sm:$0xff]
        %v1939 = vld [vmem:[%s7 + $0x28] sm:$0xff]
        %v1940 = vld [vmem:[%s7 + $0x30] sm:$0xff]
        %v1941 = vld [vmem:[%s7 + $0x38] sm:$0xff]
        %v1942 = vld [vmem:[%s7 + $0x40] sm:$0xff]
        %v1943 = vld [vmem:[%s7 + $0x48] sm:$0xff]
        %v1944 = vld [vmem:[%s7 + $0x50] sm:$0xff]
        %v1945 = vld [vmem:[%s7 + $0x58] sm:$0xff]
        %v1946 = vld [vmem:[%s7 + $0x60] sm:$0xff]
        %v1947 = vld [vmem:[%s7 + $0x68] sm:$0xff]
        %v1948 = vld [vmem:[%s7 + $0x70] sm:$0xff]
        %v1949 = vld [vmem:[%s7 + $0x78] sm:$0xff]
        %v1950 = vld [vmem:[%s7 + $0x80] sm:$0xff]
        %v1951 = vld [vmem:[%s7 + $0x88] sm:$0xff]
        %v1952 = vld [vmem:[%s7 + $0x90] sm:$0xff]
        %v1953 = vld [vmem:[%s7 + $0x98] sm:$0xff]
        %v1955 = vsel %vm517, %v1930, 0
        %v1958 = vsel %vm517, %v1932, 0
        %1960 = vmatprep.subr.mxu0 0.0
        %1961 = vmatpush1.msra.mxu0 %v1934
        %1962 = vmatprep.subr.mxu0 0.0
        %1963 = vmatpush1.msra.mxu0 %v1935
        %1964 = vmatprep.subr.mxu0 0.0
        %1965 = vmatpush1.msra.mxu0 %v1936
        %1966 = vmatprep.subr.mxu0 0.0
        %1967 = vmatpush1.msra.mxu0 %v1937
        %1968 = vmatprep.subr.mxu0 0.0
        %1969 = vmatpush1.msra.mxu0 %v1938
        %1970 = vmatprep.subr.mxu0 0.0
        %1971 = vmatpush1.msra.mxu0 %v1939
        %1972 = vmatprep.subr.mxu0 0.0
        %1973 = vmatpush1.msra.mxu0 %v1940
        %1974 = vmatprep.subr.mxu0 0.0
        %1975 = vmatpush1.msra.mxu0 %v1941
        %1976 = vmatprep.subr.mxu0 0.0
        %1977 = vmatpush1.msra.mxu0 %v1942
        %1978 = vmatprep.subr.mxu0 0.0
        %1979 = vmatpush1.msra.mxu0 %v1943
        %1980 = vmatprep.subr.mxu0 0.0
        %1981 = vmatpush1.msra.mxu0 %v1944
        %1982 = vmatprep.subr.mxu0 0.0
        %1983 = vmatpush1.msra.mxu0 %v1945
        %1984 = vmatprep.subr.mxu0 0.0
        %1985 = vmatpush1.msra.mxu0 %v1946
        %1986 = vmatprep.subr.mxu0 0.0
        %1987 = vmatpush1.msra.mxu0 %v1947
        %1988 = vmatprep.subr.mxu0 0.0
        %1989 = vmatpush1.msra.mxu0 %v1948
        %1990 = vmatprep.subr.mxu0 0.0
        %1991 = vmatpush1.msra.mxu0 %v1949
        %1992 = vmatprep.subr.mxu0 0.0
        %1993 = vmatpush1.msra.mxu0 %v1950
        %1994 = vmatprep.subr.mxu0 0.0
        %1995 = vmatpush1.msra.mxu0 %v1951
        %1996 = vmatprep.subr.mxu0 0.0
        %1997 = vmatpush1.msra.mxu0 %v1952
        %1998 = vmatprep.subr.mxu0 0.0
        %1999 = vmatpush1.msra.mxu0 %v1953
        %2000 = vmatprep.subr.mxu0 0.0
        %2001 = vmatpush1.msra.mxu0 0.0
        %2002 = vmatprep.subr.mxu0 0.0
        %2003 = vmatpush1.msra.mxu0 0.0
        %2004 = vmatprep.subr.mxu0 0.0
        %2005 = vmatpush1.msra.mxu0 0.0
        %2006 = vmatprep.subr.mxu0 0.0
        %2007 = vmatpush1.msra.mxu0 0.0
        %2008 = vmatprep.subr.mxu0 0.0
        %2009 = vmatpush1.msra.mxu0 0.0
        %2010 = vmatprep.subr.mxu0 0.0
        %2011 = vmatpush1.msra.mxu0 0.0
        %2012 = vmatprep.subr.mxu0 0.0
        %2013 = vmatpush1.msra.mxu0 0.0
        %2014 = vmatprep.subr.mxu0 0.0
        %2015 = vmatpush1.msra.mxu0 0.0
        %2016 = vmatprep.subr.mxu0 0.0
        %2017 = vmatpush1.msra.mxu0 0.0
        %2018 = vmatprep.subr.mxu0 0.0
        %2019 = vmatpush1.msra.mxu0 0.0
        %2020 = vmatprep.subr.mxu0 0.0
        %2021 = vmatpush1.msra.mxu0 0.0
        %2022 = vmatprep.subr.mxu0 0.0
        %2023 = vmatpush1.msra.mxu0 0.0
        %2024 = vmatprep.mubr.f32.mxu0 %v1955
        %2025 = vmatmul.mubr.f32.gmra.mrb[0].mxu0 %v1929
        %v2026 = vpop.f32.mrb[0].mxu0
        %v2027 = vadd.f32 0.0, %v2026
        %v2028 = vpop.f32.mrb[0].mxu0
        %2029 = vmatprep.mubr.f32.mxu0 %v1958
        %2030 = vmatmul.mubr.f32.gmra.mrb[0].mxu0 %v1931
        %v2031 = vpop.f32.mrb[0].mxu0
        %v2032 = vadd.f32 0.0, %v2031
        %v2033 = vpop.f32.mrb[0].mxu0
        %2034 = vdwg.mxu0
        %vm2035 = vcmask 80896
        %v2037 = vsel %vm2035, %v1933, 0
        %vm2039 = vcmask 1041408
        %v2041 = vsel %vm2039, %v2032, 0
        %2043 = vmatprep.subr.mxu0 0.0
        %2044 = vmatpush1.msra.mxu0 %v2027
        %2045 = vmatprep.subr.mxu0 0.0
        %2046 = vmatpush1.msra.mxu0 %v2041
        %2047 = vmatprep.subr.mxu0 0.0
        %2048 = vmatpush1.msra.mxu0 0.0
        %2049 = vmatprep.subr.mxu0 0.0
        %2050 = vmatpush1.msra.mxu0 0.0
        %2051 = vmatprep.subr.mxu0 0.0
        %2052 = vmatpush1.msra.mxu0 0.0
        %2053 = vmatprep.subr.mxu0 0.0
        %2054 = vmatpush1.msra.mxu0 0.0
        %2055 = vmatprep.subr.mxu0 0.0
        %2056 = vmatpush1.msra.mxu0 0.0
        %2057 = vmatprep.subr.mxu0 0.0
        %2058 = vmatpush1.msra.mxu0 0.0
        %2059 = vmatprep.subr.mxu0 0.0
        %2060 = vmatpush1.msra.mxu0 0.0
        %2061 = vmatprep.subr.mxu0 0.0
        %2062 = vmatpush1.msra.mxu0 0.0
        %2063 = vmatprep.subr.mxu0 0.0
        %2064 = vmatpush1.msra.mxu0 0.0
        %2065 = vmatprep.subr.mxu0 0.0
        %2066 = vmatpush1.msra.mxu0 0.0
        %2067 = vmatprep.subr.mxu0 0.0
        %2068 = vmatpush1.msra.mxu0 0.0
        %2069 = vmatprep.subr.mxu0 0.0
        %2070 = vmatpush1.msra.mxu0 0.0
        %2071 = vmatprep.subr.mxu0 0.0
        %2072 = vmatpush1.msra.mxu0 0.0
        %2073 = vmatprep.subr.mxu0 0.0
        %2074 = vmatpush1.msra.mxu0 0.0
        %2075 = vmatprep.subr.mxu0 0.0
        %2076 = vmatpush1.msra.mxu0 0.0
        %2077 = vmatprep.subr.mxu0 0.0
        %2078 = vmatpush1.msra.mxu0 0.0
        %2079 = vmatprep.subr.mxu0 0.0
        %2080 = vmatpush1.msra.mxu0 0.0
        %2081 = vmatprep.subr.mxu0 0.0
        %2082 = vmatpush1.msra.mxu0 0.0
        %2083 = vmatprep.subr.mxu0 0.0
        %2084 = vmatpush1.msra.mxu0 0.0
        %2085 = vmatprep.subr.mxu0 0.0
        %2086 = vmatpush1.msra.mxu0 0.0
        %2087 = vmatprep.subr.mxu0 0.0
        %2088 = vmatpush1.msra.mxu0 0.0
        %2089 = vmatprep.subr.mxu0 0.0
        %2090 = vmatpush1.msra.mxu0 0.0
        %2091 = vmatprep.subr.mxu0 0.0
        %2092 = vmatpush1.msra.mxu0 0.0
        %2093 = vmatprep.subr.mxu0 0.0
        %2094 = vmatpush1.msra.mxu0 0.0
        %2095 = vmatprep.subr.mxu0 0.0
        %2096 = vmatpush1.msra.mxu0 0.0
        %2097 = vmatprep.subr.mxu0 0.0
        %2098 = vmatpush1.msra.mxu0 0.0
        %2099 = vmatprep.subr.mxu0 0.0
        %2100 = vmatpush1.msra.mxu0 0.0
        %2101 = vmatprep.subr.mxu0 0.0
        %2102 = vmatpush1.msra.mxu0 0.0
        %2103 = vmatprep.subr.mxu0 0.0
        %2104 = vmatpush1.msra.mxu0 0.0
        %2105 = vmatprep.subr.mxu0 0.0
        %2106 = vmatpush1.msra.mxu0 0.0
        %2107 = vmatprep.mubr.f32.mxu0 0.0
        %2108 = vmatmul.mubr.f32.gmra.mrb[0].mxu0 %v2037
        %v2109 = vpop.f32.mrb[0].mxu0
        %v2110 = vadd.f32 0.0, %v2109
        %v2111 = vpop.f32.mrb[0].mxu0
        %2112 = vdwg.mxu0
        %vm2113 = vcmask 651264
        %2114 = vst.msk [vmem:[#allocation3] sm:$0x1f] %vm2113, %v2110
        %v2115 = vld [vmem:[#allocation3] sm:$0x1]
        %v2116 = vld [vmem:[%s9] sm:$0xff]
        %v2117 = vld [vmem:[%s9 + $0x8] sm:$0xff]
        %v2118 = vld [vmem:[%s9 + $0x10] sm:$0xff]
        %v2119 = vld [vmem:[%s9 + $0x18] sm:$0xff]
        %v2120 = vld [vmem:[%s9 + $0x20] sm:$0xff]
        %v2121 = vld [vmem:[%s9 + $0x28] sm:$0xff]
        %v2122 = vld [vmem:[%s9 + $0x30] sm:$0xff]
        %v2123 = vld [vmem:[%s9 + $0x38] sm:$0xff]
        %v2124 = vld [vmem:[%s9 + $0x40] sm:$0xff]
        %v2125 = vld [vmem:[%s9 + $0x48] sm:$0xff]
        %v2126 = vld [vmem:[#allocation3 + $0x1] sm:$0x1]
        %s2127 = scalar_lea.vmem %s9, 80
        %v2128 = vld [vmem:[%s2127] sm:$0xff]
        %v2129 = vld [vmem:[%s2127 + $0x8] sm:$0xff]
        %v2130 = vld [vmem:[%s2127 + $0x10] sm:$0xff]
        %v2131 = vld [vmem:[%s2127 + $0x18] sm:$0xff]
        %v2132 = vld [vmem:[%s2127 + $0x20] sm:$0xff]
        %v2133 = vld [vmem:[%s2127 + $0x28] sm:$0xff]
        %v2134 = vld [vmem:[%s2127 + $0x30] sm:$0xff]
        %v2135 = vld [vmem:[%s2127 + $0x38] sm:$0xff]
        %v2136 = vld [vmem:[%s2127 + $0x40] sm:$0xff]
        %v2137 = vld [vmem:[%s2127 + $0x48] sm:$0xff]
        %vm2138 = vcmask 654336
        %v2140 = vsel %vm2138, %v2126, 0
        %2142 = vmatprep.subr.mxu0 0.0
        %2143 = vmatpush1.msra.mxu0 %v2128
        %2144 = vmatprep.subr.mxu0 0.0
        %2145 = vmatpush1.msra.mxu0 %v2129
        %2146 = vmatprep.subr.mxu0 0.0
        %2147 = vmatpush1.msra.mxu0 %v2130
        %2148 = vmatprep.subr.mxu0 0.0
        %2149 = vmatpush1.msra.mxu0 %v2131
        %2150 = vmatprep.subr.mxu0 0.0
        %2151 = vmatpush1.msra.mxu0 %v2132
        %2152 = vmatprep.subr.mxu0 0.0
        %2153 = vmatpush1.msra.mxu0 %v2133
        %2154 = vmatprep.subr.mxu0 0.0
        %2155 = vmatpush1.msra.mxu0 %v2134
        %2156 = vmatprep.subr.mxu0 0.0
        %2157 = vmatpush1.msra.mxu0 %v2135
        %2158 = vmatprep.subr.mxu0 0.0
        %2159 = vmatpush1.msra.mxu0 %v2136
        %2160 = vmatprep.subr.mxu0 0.0
        %2161 = vmatpush1.msra.mxu0 %v2137
        %2162 = vmatprep.subr.mxu0 0.0
        %2163 = vmatpush1.msra.mxu0 0.0
        %2164 = vmatprep.subr.mxu0 0.0
        %2165 = vmatpush1.msra.mxu0 0.0
        %2166 = vmatprep.subr.mxu0 0.0
        %2167 = vmatpush1.msra.mxu0 0.0
        %2168 = vmatprep.subr.mxu0 0.0
        %2169 = vmatpush1.msra.mxu0 0.0
        %2170 = vmatprep.subr.mxu0 0.0
        %2171 = vmatpush1.msra.mxu0 0.0
        %2172 = vmatprep.subr.mxu0 0.0
        %2173 = vmatpush1.msra.mxu0 0.0
        %2174 = vmatprep.subr.mxu0 0.0
        %2175 = vmatpush1.msra.mxu0 0.0
        %2176 = vmatprep.subr.mxu0 0.0
        %2177 = vmatpush1.msra.mxu0 0.0
        %2178 = vmatprep.subr.mxu0 0.0
        %2179 = vmatpush1.msra.mxu0 0.0
        %2180 = vmatprep.subr.mxu0 0.0
        %2181 = vmatpush1.msra.mxu0 0.0
        %2182 = vmatprep.subr.mxu0 0.0
        %2183 = vmatpush1.msra.mxu0 0.0
        %2184 = vmatprep.subr.mxu0 0.0
        %2185 = vmatpush1.msra.mxu0 0.0
        %2186 = vmatprep.subr.mxu0 0.0
        %2187 = vmatpush1.msra.mxu0 0.0
        %2188 = vmatprep.subr.mxu0 0.0
        %2189 = vmatpush1.msra.mxu0 0.0
        %2190 = vmatprep.subr.mxu0 0.0
        %2191 = vmatpush1.msra.mxu0 0.0
        %2192 = vmatprep.subr.mxu0 0.0
        %2193 = vmatpush1.msra.mxu0 0.0
        %2194 = vmatprep.subr.mxu0 0.0
        %2195 = vmatpush1.msra.mxu0 0.0
        %2196 = vmatprep.subr.mxu0 0.0
        %2197 = vmatpush1.msra.mxu0 0.0
        %2198 = vmatprep.subr.mxu0 0.0
        %2199 = vmatpush1.msra.mxu0 0.0
        %2200 = vmatprep.subr.mxu0 0.0
        %2201 = vmatpush1.msra.mxu0 0.0
        %2202 = vmatprep.subr.mxu0 0.0
        %2203 = vmatpush1.msra.mxu0 0.0
        %2204 = vmatprep.subr.mxu0 0.0
        %2205 = vmatpush1.msra.mxu0 0.0
        %2206 = vmatprep.mubr.f32.mxu0 0.0
        %2207 = vmatmul.mubr.f32.gmra.mrb[0].mxu0 %v2140
        %v2208 = vpop.f32.mrb[0].mxu0
        %v2209 = vadd.f32 0.0, %v2208
        %v2210 = vpop.f32.mrb[0].mxu0
        %2211 = vdwg.mxu0
        %v2213 = vsel %vm2138, %v2115, 0
        %2215 = vmatprep.subr.mxu0 0.0
        %2216 = vmatpush1.msra.mxu0 %v2116
        %2217 = vmatprep.subr.mxu0 0.0
        %2218 = vmatpush1.msra.mxu0 %v2117
        %2219 = vmatprep.subr.mxu0 0.0
        %2220 = vmatpush1.msra.mxu0 %v2118
        %2221 = vmatprep.subr.mxu0 0.0
        %2222 = vmatpush1.msra.mxu0 %v2119
        %2223 = vmatprep.subr.mxu0 0.0
        %2224 = vmatpush1.msra.mxu0 %v2120
        %2225 = vmatprep.subr.mxu0 0.0
        %2226 = vmatpush1.msra.mxu0 %v2121
        %2227 = vmatprep.subr.mxu0 0.0
        %2228 = vmatpush1.msra.mxu0 %v2122
        %2229 = vmatprep.subr.mxu0 0.0
        %2230 = vmatpush1.msra.mxu0 %v2123
        %2231 = vmatprep.subr.mxu0 0.0
        %2232 = vmatpush1.msra.mxu0 %v2124
        %2233 = vmatprep.subr.mxu0 0.0
        %2234 = vmatpush1.msra.mxu0 %v2125
        %2235 = vmatprep.subr.mxu0 0.0
        %2236 = vmatpush1.msra.mxu0 0.0
        %2237 = vmatprep.subr.mxu0 0.0
        %2238 = vmatpush1.msra.mxu0 0.0
        %2239 = vmatprep.subr.mxu0 0.0
        %2240 = vmatpush1.msra.mxu0 0.0
        %2241 = vmatprep.subr.mxu0 0.0
        %2242 = vmatpush1.msra.mxu0 0.0
        %2243 = vmatprep.subr.mxu0 0.0
        %2244 = vmatpush1.msra.mxu0 0.0
        %2245 = vmatprep.subr.mxu0 0.0
        %2246 = vmatpush1.msra.mxu0 0.0
        %2247 = vmatprep.subr.mxu0 0.0
        %2248 = vmatpush1.msra.mxu0 0.0
        %2249 = vmatprep.subr.mxu0 0.0
        %2250 = vmatpush1.msra.mxu0 0.0
        %2251 = vmatprep.subr.mxu0 0.0
        %2252 = vmatpush1.msra.mxu0 0.0
        %2253 = vmatprep.subr.mxu0 0.0
        %2254 = vmatpush1.msra.mxu0 0.0
        %2255 = vmatprep.subr.mxu0 0.0
        %2256 = vmatpush1.msra.mxu0 0.0
        %2257 = vmatprep.subr.mxu0 0.0
        %2258 = vmatpush1.msra.mxu0 0.0
        %2259 = vmatprep.subr.mxu0 0.0
        %2260 = vmatpush1.msra.mxu0 0.0
        %2261 = vmatprep.subr.mxu0 0.0
        %2262 = vmatpush1.msra.mxu0 0.0
        %2263 = vmatprep.subr.mxu0 0.0
        %2264 = vmatpush1.msra.mxu0 0.0
        %2265 = vmatprep.subr.mxu0 0.0
        %2266 = vmatpush1.msra.mxu0 0.0
        %2267 = vmatprep.subr.mxu0 0.0
        %2268 = vmatpush1.msra.mxu0 0.0
        %2269 = vmatprep.subr.mxu0 0.0
        %2270 = vmatpush1.msra.mxu0 0.0
        %2271 = vmatprep.subr.mxu0 0.0
        %2272 = vmatpush1.msra.mxu0 0.0
        %2273 = vmatprep.subr.mxu0 0.0
        %2274 = vmatpush1.msra.mxu0 0.0
        %2275 = vmatprep.subr.mxu0 0.0
        %2276 = vmatpush1.msra.mxu0 0.0
        %2277 = vmatprep.subr.mxu0 0.0
        %2278 = vmatpush1.msra.mxu0 0.0
        %2279 = vmatprep.mubr.f32.mxu0 0.0
        %2280 = vmatmul.mubr.f32.gmra.mrb[0].mxu0 %v2213
        %v2281 = vpop.f32.mrb[0].mxu0
        %v2282 = vadd.f32 %v2209, %v2281
        %v2283 = vpop.f32.mrb[0].mxu0
        %2284 = vdwg.mxu0
        %v2285 = vld [vmem:[#allocation3 + $0x2] sm:$0x1]
        %s2286 = scalar_lea.vmem %s9, 160
        %v2287 = vld [vmem:[%s2286] sm:$0xff]
        %v2288 = vld [vmem:[%s2286 + $0x8] sm:$0xff]
        %v2289 = vld [vmem:[%s2286 + $0x10] sm:$0xff]
        %v2290 = vld [vmem:[%s2286 + $0x18] sm:$0xff]
        %v2291 = vld [vmem:[%s2286 + $0x20] sm:$0xff]
        %v2292 = vld [vmem:[%s2286 + $0x28] sm:$0xff]
        %v2293 = vld [vmem:[%s2286 + $0x30] sm:$0xff]
        %v2294 = vld [vmem:[%s2286 + $0x38] sm:$0xff]
        %v2295 = vld [vmem:[%s2286 + $0x40] sm:$0xff]
        %v2296 = vld [vmem:[%s2286 + $0x48] sm:$0xff]
        %v2298 = vsel %vm2138, %v2285, 0
        %2300 = vmatprep.subr.mxu0 0.0
        %2301 = vmatpush1.msra.mxu0 %v2287
        %2302 = vmatprep.subr.mxu0 0.0
        %2303 = vmatpush1.msra.mxu0 %v2288
        %2304 = vmatprep.subr.mxu0 0.0
        %2305 = vmatpush1.msra.mxu0 %v2289
        %2306 = vmatprep.subr.mxu0 0.0
        %2307 = vmatpush1.msra.mxu0 %v2290
        %2308 = vmatprep.subr.mxu0 0.0
        %2309 = vmatpush1.msra.mxu0 %v2291
        %2310 = vmatprep.subr.mxu0 0.0
        %2311 = vmatpush1.msra.mxu0 %v2292
        %2312 = vmatprep.subr.mxu0 0.0
        %2313 = vmatpush1.msra.mxu0 %v2293
        %2314 = vmatprep.subr.mxu0 0.0
        %2315 = vmatpush1.msra.mxu0 %v2294
        %2316 = vmatprep.subr.mxu0 0.0
        %2317 = vmatpush1.msra.mxu0 %v2295
        %2318 = vmatprep.subr.mxu0 0.0
        %2319 = vmatpush1.msra.mxu0 %v2296
        %2320 = vmatprep.subr.mxu0 0.0
        %2321 = vmatpush1.msra.mxu0 0.0
        %2322 = vmatprep.subr.mxu0 0.0
        %2323 = vmatpush1.msra.mxu0 0.0
        %2324 = vmatprep.subr.mxu0 0.0
        %2325 = vmatpush1.msra.mxu0 0.0
        %2326 = vmatprep.subr.mxu0 0.0
        %2327 = vmatpush1.msra.mxu0 0.0
        %2328 = vmatprep.subr.mxu0 0.0
        %2329 = vmatpush1.msra.mxu0 0.0
        %2330 = vmatprep.subr.mxu0 0.0
        %2331 = vmatpush1.msra.mxu0 0.0
        %2332 = vmatprep.subr.mxu0 0.0
        %2333 = vmatpush1.msra.mxu0 0.0
        %2334 = vmatprep.subr.mxu0 0.0
        %2335 = vmatpush1.msra.mxu0 0.0
        %2336 = vmatprep.subr.mxu0 0.0
        %2337 = vmatpush1.msra.mxu0 0.0
        %2338 = vmatprep.subr.mxu0 0.0
        %2339 = vmatpush1.msra.mxu0 0.0
        %2340 = vmatprep.subr.mxu0 0.0
        %2341 = vmatpush1.msra.mxu0 0.0
        %2342 = vmatprep.subr.mxu0 0.0
        %2343 = vmatpush1.msra.mxu0 0.0
        %2344 = vmatprep.subr.mxu0 0.0
        %2345 = vmatpush1.msra.mxu0 0.0
        %2346 = vmatprep.subr.mxu0 0.0
        %2347 = vmatpush1.msra.mxu0 0.0
        %2348 = vmatprep.subr.mxu0 0.0
        %2349 = vmatpush1.msra.mxu0 0.0
        %2350 = vmatprep.subr.mxu0 0.0
        %2351 = vmatpush1.msra.mxu0 0.0
        %2352 = vmatprep.subr.mxu0 0.0
        %2353 = vmatpush1.msra.mxu0 0.0
        %2354 = vmatprep.subr.mxu0 0.0
        %2355 = vmatpush1.msra.mxu0 0.0
        %2356 = vmatprep.subr.mxu0 0.0
        %2357 = vmatpush1.msra.mxu0 0.0
        %2358 = vmatprep.subr.mxu0 0.0
        %2359 = vmatpush1.msra.mxu0 0.0
        %2360 = vmatprep.subr.mxu0 0.0
        %2361 = vmatpush1.msra.mxu0 0.0
        %2362 = vmatprep.subr.mxu0 0.0
        %2363 = vmatpush1.msra.mxu0 0.0
        %2364 = vmatprep.mubr.f32.mxu0 0.0
        %2365 = vmatmul.mubr.f32.gmra.mrb[0].mxu0 %v2298
        %v2366 = vpop.f32.mrb[0].mxu0
        %v2367 = vadd.f32 0.0, %v2366
        %v2368 = vpop.f32.mrb[0].mxu0
        %2369 = vdwg.mxu0
        %v2370 = vadd.f32 %v2282, %v2367
        %v2371 = vld [vmem:[#allocation3 + $0x3] sm:$0x1]
        %s2372 = scalar_lea.vmem %s9, 240
        %v2373 = vld [vmem:[%s2372] sm:$0xff]
        %v2374 = vld [vmem:[%s2372 + $0x8] sm:$0xff]
        %v2375 = vld [vmem:[%s2372 + $0x10] sm:$0xff]
        %v2376 = vld [vmem:[%s2372 + $0x18] sm:$0xff]
        %v2377 = vld [vmem:[%s2372 + $0x20] sm:$0xff]
        %v2378 = vld [vmem:[%s2372 + $0x28] sm:$0xff]
        %v2379 = vld [vmem:[%s2372 + $0x30] sm:$0xff]
        %v2380 = vld [vmem:[%s2372 + $0x38] sm:$0xff]
        %v2381 = vld [vmem:[%s2372 + $0x40] sm:$0xff]
        %v2382 = vld [vmem:[%s2372 + $0x48] sm:$0xff]
        %v2384 = vsel %vm2138, %v2371, 0
        %2386 = vmatprep.subr.mxu0 0.0
        %2387 = vmatpush1.msra.mxu0 %v2373
        %2388 = vmatprep.subr.mxu0 0.0
        %2389 = vmatpush1.msra.mxu0 %v2374
        %2390 = vmatprep.subr.mxu0 0.0
        %2391 = vmatpush1.msra.mxu0 %v2375
        %2392 = vmatprep.subr.mxu0 0.0
        %2393 = vmatpush1.msra.mxu0 %v2376
        %2394 = vmatprep.subr.mxu0 0.0
        %2395 = vmatpush1.msra.mxu0 %v2377
        %2396 = vmatprep.subr.mxu0 0.0
        %2397 = vmatpush1.msra.mxu0 %v2378
        %2398 = vmatprep.subr.mxu0 0.0
        %2399 = vmatpush1.msra.mxu0 %v2379
        %2400 = vmatprep.subr.mxu0 0.0
        %2401 = vmatpush1.msra.mxu0 %v2380
        %2402 = vmatprep.subr.mxu0 0.0
        %2403 = vmatpush1.msra.mxu0 %v2381
        %2404 = vmatprep.subr.mxu0 0.0
        %2405 = vmatpush1.msra.mxu0 %v2382
        %2406 = vmatprep.subr.mxu0 0.0
        %2407 = vmatpush1.msra.mxu0 0.0
        %2408 = vmatprep.subr.mxu0 0.0
        %2409 = vmatpush1.msra.mxu0 0.0
        %2410 = vmatprep.subr.mxu0 0.0
        %2411 = vmatpush1.msra.mxu0 0.0
        %2412 = vmatprep.subr.mxu0 0.0
        %2413 = vmatpush1.msra.mxu0 0.0
        %2414 = vmatprep.subr.mxu0 0.0
        %2415 = vmatpush1.msra.mxu0 0.0
        %2416 = vmatprep.subr.mxu0 0.0
        %2417 = vmatpush1.msra.mxu0 0.0
        %2418 = vmatprep.subr.mxu0 0.0
        %2419 = vmatpush1.msra.mxu0 0.0
        %2420 = vmatprep.subr.mxu0 0.0
        %2421 = vmatpush1.msra.mxu0 0.0
        %2422 = vmatprep.subr.mxu0 0.0
        %2423 = vmatpush1.msra.mxu0 0.0
        %2424 = vmatprep.subr.mxu0 0.0
        %2425 = vmatpush1.msra.mxu0 0.0
        %2426 = vmatprep.subr.mxu0 0.0
        %2427 = vmatpush1.msra.mxu0 0.0
        %2428 = vmatprep.subr.mxu0 0.0
        %2429 = vmatpush1.msra.mxu0 0.0
        %2430 = vmatprep.subr.mxu0 0.0
        %2431 = vmatpush1.msra.mxu0 0.0
        %2432 = vmatprep.subr.mxu0 0.0
        %2433 = vmatpush1.msra.mxu0 0.0
        %2434 = vmatprep.subr.mxu0 0.0
        %2435 = vmatpush1.msra.mxu0 0.0
        %2436 = vmatprep.subr.mxu0 0.0
        %2437 = vmatpush1.msra.mxu0 0.0
        %2438 = vmatprep.subr.mxu0 0.0
        %2439 = vmatpush1.msra.mxu0 0.0
        %2440 = vmatprep.subr.mxu0 0.0
        %2441 = vmatpush1.msra.mxu0 0.0
        %2442 = vmatprep.subr.mxu0 0.0
        %2443 = vmatpush1.msra.mxu0 0.0
        %2444 = vmatprep.subr.mxu0 0.0
        %2445 = vmatpush1.msra.mxu0 0.0
        %2446 = vmatprep.subr.mxu0 0.0
        %2447 = vmatpush1.msra.mxu0 0.0
        %2448 = vmatprep.subr.mxu0 0.0
        %2449 = vmatpush1.msra.mxu0 0.0
        %2450 = vmatprep.mubr.f32.mxu0 0.0
        %2451 = vmatmul.mubr.f32.gmra.mrb[0].mxu0 %v2384
        %v2452 = vpop.f32.mrb[0].mxu0
        %v2453 = vadd.f32 0.0, %v2452
        %v2454 = vpop.f32.mrb[0].mxu0
        %2455 = vdwg.mxu0
        %v2456 = vadd.f32 %v2370, %v2453
        %v2457 = vld [vmem:[#allocation3 + $0x4] sm:$0x1]
        %s2458 = scalar_lea.vmem %s9, 320
        %v2459 = vld [vmem:[%s2458] sm:$0xff]
        %v2460 = vld [vmem:[%s2458 + $0x8] sm:$0xff]
        %v2461 = vld [vmem:[%s2458 + $0x10] sm:$0xff]
        %v2462 = vld [vmem:[%s2458 + $0x18] sm:$0xff]
        %v2463 = vld [vmem:[%s2458 + $0x20] sm:$0xff]
        %v2464 = vld [vmem:[%s2458 + $0x28] sm:$0xff]
        %v2465 = vld [vmem:[%s2458 + $0x30] sm:$0xff]
        %v2466 = vld [vmem:[%s2458 + $0x38] sm:$0xff]
        %v2467 = vld [vmem:[%s2458 + $0x40] sm:$0xff]
        %v2468 = vld [vmem:[%s2458 + $0x48] sm:$0xff]
        %v2470 = vsel %vm2138, %v2457, 0
        %2472 = vmatprep.subr.mxu0 0.0
        %2473 = vmatpush1.msra.mxu0 %v2459
        %2474 = vmatprep.subr.mxu0 0.0
        %2475 = vmatpush1.msra.mxu0 %v2460
        %2476 = vmatprep.subr.mxu0 0.0
        %2477 = vmatpush1.msra.mxu0 %v2461
        %2478 = vmatprep.subr.mxu0 0.0
        %2479 = vmatpush1.msra.mxu0 %v2462
        %2480 = vmatprep.subr.mxu0 0.0
        %2481 = vmatpush1.msra.mxu0 %v2463
        %2482 = vmatprep.subr.mxu0 0.0
        %2483 = vmatpush1.msra.mxu0 %v2464
        %2484 = vmatprep.subr.mxu0 0.0
        %2485 = vmatpush1.msra.mxu0 %v2465
        %2486 = vmatprep.subr.mxu0 0.0
        %2487 = vmatpush1.msra.mxu0 %v2466
        %2488 = vmatprep.subr.mxu0 0.0
        %2489 = vmatpush1.msra.mxu0 %v2467
        %2490 = vmatprep.subr.mxu0 0.0
        %2491 = vmatpush1.msra.mxu0 %v2468
        %2492 = vmatprep.subr.mxu0 0.0
        %2493 = vmatpush1.msra.mxu0 0.0
        %2494 = vmatprep.subr.mxu0 0.0
        %2495 = vmatpush1.msra.mxu0 0.0
        %2496 = vmatprep.subr.mxu0 0.0
        %2497 = vmatpush1.msra.mxu0 0.0
        %2498 = vmatprep.subr.mxu0 0.0
        %2499 = vmatpush1.msra.mxu0 0.0
        %2500 = vmatprep.subr.mxu0 0.0
        %2501 = vmatpush1.msra.mxu0 0.0
        %2502 = vmatprep.subr.mxu0 0.0
        %2503 = vmatpush1.msra.mxu0 0.0
        %2504 = vmatprep.subr.mxu0 0.0
        %2505 = vmatpush1.msra.mxu0 0.0
        %2506 = vmatprep.subr.mxu0 0.0
        %2507 = vmatpush1.msra.mxu0 0.0
        %2508 = vmatprep.subr.mxu0 0.0
        %2509 = vmatpush1.msra.mxu0 0.0
        %2510 = vmatprep.subr.mxu0 0.0
        %2511 = vmatpush1.msra.mxu0 0.0
        %2512 = vmatprep.subr.mxu0 0.0
        %2513 = vmatpush1.msra.mxu0 0.0
        %2514 = vmatprep.subr.mxu0 0.0
        %2515 = vmatpush1.msra.mxu0 0.0
        %2516 = vmatprep.subr.mxu0 0.0
        %2517 = vmatpush1.msra.mxu0 0.0
        %2518 = vmatprep.subr.mxu0 0.0
        %2519 = vmatpush1.msra.mxu0 0.0
        %2520 = vmatprep.subr.mxu0 0.0
        %2521 = vmatpush1.msra.mxu0 0.0
        %2522 = vmatprep.subr.mxu0 0.0
        %2523 = vmatpush1.msra.mxu0 0.0
        %2524 = vmatprep.subr.mxu0 0.0
        %2525 = vmatpush1.msra.mxu0 0.0
        %2526 = vmatprep.subr.mxu0 0.0
        %2527 = vmatpush1.msra.mxu0 0.0
        %2528 = vmatprep.subr.mxu0 0.0
        %2529 = vmatpush1.msra.mxu0 0.0
        %2530 = vmatprep.subr.mxu0 0.0
        %2531 = vmatpush1.msra.mxu0 0.0
        %2532 = vmatprep.subr.mxu0 0.0
        %2533 = vmatpush1.msra.mxu0 0.0
        %2534 = vmatprep.subr.mxu0 0.0
        %2535 = vmatpush1.msra.mxu0 0.0
        %2536 = vmatprep.mubr.f32.mxu0 0.0
        %2537 = vmatmul.mubr.f32.gmra.mrb[0].mxu0 %v2470
        %v2538 = vpop.f32.mrb[0].mxu0
        %v2539 = vadd.f32 0.0, %v2538
        %v2540 = vpop.f32.mrb[0].mxu0
        %2541 = vdwg.mxu0
        %v2542 = vadd.f32 %v2456, %v2539
        %v2543 = vld [vmem:[%s10] sm:$0x1]
        %v2544 = vadd.f32 %v2542, %v2543
        %v2545 = vld [vmem:[%s11] sm:$0xff]
        %v2546 = vld [vmem:[%s11 + $0x8] sm:$0xff]
        %v2547 = vld [vmem:[%s11 + $0x10] sm:$0xff]
        %v2548 = vld [vmem:[%s11 + $0x18] sm:$0xff]
        %v2549 = vld [vmem:[%s11 + $0x20] sm:$0xff]
        %v2550 = vld [vmem:[%s11 + $0x28] sm:$0xff]
        %v2551 = vld [vmem:[%s11 + $0x30] sm:$0xff]
        %v2552 = vld [vmem:[%s11 + $0x38] sm:$0xff]
        %v2553 = vld [vmem:[%s11 + $0x40] sm:$0xff]
        %v2554 = vld [vmem:[%s11 + $0x48] sm:$0xff]
        %v2555 = vld [vmem:[%s11 + $0x50] sm:$0xff]
        %v2556 = vld [vmem:[%s11 + $0x58] sm:$0xff]
        %v2557 = vld [vmem:[%s11 + $0x60] sm:$0xff]
        %v2558 = vld [vmem:[%s11 + $0x68] sm:$0xff]
        %v2559 = vld [vmem:[%s11 + $0x70] sm:$0xff]
        %v2560 = vld [vmem:[%s11 + $0x78] sm:$0xff]
        %v2561 = vld [vmem:[%s12] sm:$0x1]
        %2562 = vmatprep.subr.mxu0 0.0
        %2563 = vmatpush1.msra.mxu0 %v2545
        %2564 = vmatprep.subr.mxu0 0.0
        %2565 = vmatpush1.msra.mxu0 %v2546
        %2566 = vmatprep.subr.mxu0 0.0
        %2567 = vmatpush1.msra.mxu0 %v2547
        %2568 = vmatprep.subr.mxu0 0.0
        %2569 = vmatpush1.msra.mxu0 %v2548
        %2570 = vmatprep.subr.mxu0 0.0
        %2571 = vmatpush1.msra.mxu0 %v2549
        %2572 = vmatprep.subr.mxu0 0.0
        %2573 = vmatpush1.msra.mxu0 %v2550
        %2574 = vmatprep.subr.mxu0 0.0
        %2575 = vmatpush1.msra.mxu0 %v2551
        %2576 = vmatprep.subr.mxu0 0.0
        %2577 = vmatpush1.msra.mxu0 %v2552
        %2578 = vmatprep.subr.mxu0 0.0
        %2579 = vmatpush1.msra.mxu0 %v2553
        %2580 = vmatprep.subr.mxu0 0.0
        %2581 = vmatpush1.msra.mxu0 %v2554
        %2582 = vmatprep.subr.mxu0 0.0
        %2583 = vmatpush1.msra.mxu0 %v2555
        %2584 = vmatprep.subr.mxu0 0.0
        %2585 = vmatpush1.msra.mxu0 %v2556
        %2586 = vmatprep.subr.mxu0 0.0
        %2587 = vmatpush1.msra.mxu0 %v2557
        %2588 = vmatprep.subr.mxu0 0.0
        %2589 = vmatpush1.msra.mxu0 %v2558
        %2590 = vmatprep.subr.mxu0 0.0
        %2591 = vmatpush1.msra.mxu0 %v2559
        %2592 = vmatprep.subr.mxu0 0.0
        %2593 = vmatpush1.msra.mxu0 %v2560
        %2594 = vmatprep.subr.mxu0 0.0
        %2595 = vmatpush1.msra.mxu0 0.0
        %2596 = vmatprep.subr.mxu0 0.0
        %2597 = vmatpush1.msra.mxu0 0.0
        %2598 = vmatprep.subr.mxu0 0.0
        %2599 = vmatpush1.msra.mxu0 0.0
        %2600 = vmatprep.subr.mxu0 0.0
        %2601 = vmatpush1.msra.mxu0 0.0
        %2602 = vmatprep.subr.mxu0 0.0
        %2603 = vmatpush1.msra.mxu0 0.0
        %2604 = vmatprep.subr.mxu0 0.0
        %2605 = vmatpush1.msra.mxu0 0.0
        %2606 = vmatprep.subr.mxu0 0.0
        %2607 = vmatpush1.msra.mxu0 0.0
        %2608 = vmatprep.subr.mxu0 0.0
        %2609 = vmatpush1.msra.mxu0 0.0
        %2610 = vmatprep.subr.mxu0 0.0
        %2611 = vmatpush1.msra.mxu0 0.0
        %2612 = vmatprep.subr.mxu0 0.0
        %2613 = vmatpush1.msra.mxu0 0.0
        %2614 = vmatprep.subr.mxu0 0.0
        %2615 = vmatpush1.msra.mxu0 0.0
        %2616 = vmatprep.subr.mxu0 0.0
        %2617 = vmatpush1.msra.mxu0 0.0
        %2618 = vmatprep.subr.mxu0 0.0
        %2619 = vmatpush1.msra.mxu0 0.0
        %2620 = vmatprep.subr.mxu0 0.0
        %2621 = vmatpush1.msra.mxu0 0.0
        %2622 = vmatprep.subr.mxu0 0.0
        %2623 = vmatpush1.msra.mxu0 0.0
        %2624 = vmatprep.subr.mxu0 0.0
        %2625 = vmatpush1.msra.mxu0 0.0
        %2626 = vmatprep.mubr.f32.mxu0 0.0
        %2627 = vmatmul.mubr.f32.gmra.mrb[0].mxu0 %v2544
        %v2628 = vpop.f32.mrb[0].mxu0
        %v2629 = vadd.f32 %v2561, %v2628
        %v2630 = vpop.f32.mrb[0].mxu0
        %2631 = vdwg.mxu0
        %v2632 = vmax.f32 %v2629, 0.0
        %v2633 = vld [vmem:[%s13] sm:$0xff]
        %v2634 = vld [vmem:[%s13 + $0x8] sm:$0xff]
        %v2635 = vld [vmem:[%s13 + $0x10] sm:$0xff]
        %v2636 = vld [vmem:[%s13 + $0x18] sm:$0xff]
        %v2637 = vld [vmem:[%s13 + $0x20] sm:$0xff]
        %v2638 = vld [vmem:[%s13 + $0x28] sm:$0xff]
        %v2639 = vld [vmem:[%s13 + $0x30] sm:$0xff]
        %v2640 = vld [vmem:[%s13 + $0x38] sm:$0xff]
        %v2641 = vld [vmem:[%s13 + $0x40] sm:$0xff]
        %v2642 = vld [vmem:[%s13 + $0x48] sm:$0xff]
        %v2643 = vld [vmem:[%s13 + $0x50] sm:$0xff]
        %v2644 = vld [vmem:[%s13 + $0x58] sm:$0xff]
        %v2645 = vld [vmem:[%s13 + $0x60] sm:$0xff]
        %v2646 = vld [vmem:[%s13 + $0x68] sm:$0xff]
        %v2647 = vld [vmem:[%s13 + $0x70] sm:$0xff]
        %v2648 = vld [vmem:[%s13 + $0x78] sm:$0xff]
        %v2649 = vld [vmem:[%s14] sm:$0x1]
        %2650 = vmatprep.subr.mxu0 0.0
        %2651 = vmatpush1.msra.mxu0 %v2633
        %2652 = vmatprep.subr.mxu0 0.0
        %2653 = vmatpush1.msra.mxu0 %v2634
        %2654 = vmatprep.subr.mxu0 0.0
        %2655 = vmatpush1.msra.mxu0 %v2635
        %2656 = vmatprep.subr.mxu0 0.0
        %2657 = vmatpush1.msra.mxu0 %v2636
        %2658 = vmatprep.subr.mxu0 0.0
        %2659 = vmatpush1.msra.mxu0 %v2637
        %2660 = vmatprep.subr.mxu0 0.0
        %2661 = vmatpush1.msra.mxu0 %v2638
        %2662 = vmatprep.subr.mxu0 0.0
        %2663 = vmatpush1.msra.mxu0 %v2639
        %2664 = vmatprep.subr.mxu0 0.0
        %2665 = vmatpush1.msra.mxu0 %v2640
        %2666 = vmatprep.subr.mxu0 0.0
        %2667 = vmatpush1.msra.mxu0 %v2641
        %2668 = vmatprep.subr.mxu0 0.0
        %2669 = vmatpush1.msra.mxu0 %v2642
        %2670 = vmatprep.subr.mxu0 0.0
        %2671 = vmatpush1.msra.mxu0 %v2643
        %2672 = vmatprep.subr.mxu0 0.0
        %2673 = vmatpush1.msra.mxu0 %v2644
        %2674 = vmatprep.subr.mxu0 0.0
        %2675 = vmatpush1.msra.mxu0 %v2645
        %2676 = vmatprep.subr.mxu0 0.0
        %2677 = vmatpush1.msra.mxu0 %v2646
        %2678 = vmatprep.subr.mxu0 0.0
        %2679 = vmatpush1.msra.mxu0 %v2647
        %2680 = vmatprep.subr.mxu0 0.0
        %2681 = vmatpush1.msra.mxu0 %v2648
        %2682 = vmatprep.subr.mxu0 0.0
        %2683 = vmatpush1.msra.mxu0 0.0
        %2684 = vmatprep.subr.mxu0 0.0
        %2685 = vmatpush1.msra.mxu0 0.0
        %2686 = vmatprep.subr.mxu0 0.0
        %2687 = vmatpush1.msra.mxu0 0.0
        %2688 = vmatprep.subr.mxu0 0.0
        %2689 = vmatpush1.msra.mxu0 0.0
        %2690 = vmatprep.subr.mxu0 0.0
        %2691 = vmatpush1.msra.mxu0 0.0
        %2692 = vmatprep.subr.mxu0 0.0
        %2693 = vmatpush1.msra.mxu0 0.0
        %2694 = vmatprep.subr.mxu0 0.0
        %2695 = vmatpush1.msra.mxu0 0.0
        %2696 = vmatprep.subr.mxu0 0.0
        %2697 = vmatpush1.msra.mxu0 0.0
        %2698 = vmatprep.subr.mxu0 0.0
        %2699 = vmatpush1.msra.mxu0 0.0
        %2700 = vmatprep.subr.mxu0 0.0
        %2701 = vmatpush1.msra.mxu0 0.0
        %2702 = vmatprep.subr.mxu0 0.0
        %2703 = vmatpush1.msra.mxu0 0.0
        %2704 = vmatprep.subr.mxu0 0.0
        %2705 = vmatpush1.msra.mxu0 0.0
        %2706 = vmatprep.subr.mxu0 0.0
        %2707 = vmatpush1.msra.mxu0 0.0
        %2708 = vmatprep.subr.mxu0 0.0
        %2709 = vmatpush1.msra.mxu0 0.0
        %2710 = vmatprep.subr.mxu0 0.0
        %2711 = vmatpush1.msra.mxu0 0.0
        %2712 = vmatprep.subr.mxu0 0.0
        %2713 = vmatpush1.msra.mxu0 0.0
        %2714 = vmatprep.mubr.f32.mxu0 0.0
        %2715 = vmatmul.mubr.f32.gmra.mrb[0].mxu0 %v2632
        %v2716 = vpop.f32.mrb[0].mxu0
        %v2717 = vadd.f32 %v2649, %v2716
        %v2718 = vpop.f32.mrb[0].mxu0
        %2719 = vdwg.mxu0
        %vm2720 = vcmask 73728
        %2721 = vst.msk [vmem:[%s486] sm:$0x1] %vm2720, %v2717
        %s2722 = sand.u32 %s357, 1
        %s2723 = scalar_lea.sflag [#allocation5], %s2722
        %s2724 = sand.u32 %s357, 1
        %s2725 = scalar_lea.vmem [#allocation4], %s2724
        // Predicated region
        $region81: #{lenet_forward.1} parent=79 // pred_check
          %p2726 = pneg %p367
        $region82: #{lenet_forward.1} parent=79 // pred_check_branch
          %2728 = sbr.rel (%p2726) target = $region84
        $region83: #{lenet_forward.1} parent=79 // pred_region
          %s2730 = ssub.s32 16, 16
          %2731 = vsyncadd %s2723, %s2730
          %s2732 = smul.addr %s29, 16
          %s2733 = scalar_lea.hbm %s15, %s2732
          %s2735 = sshll.u32 %s2725, 4
          %s2736 = int_to_ptr.vmem [resolvable:$true] %s2735
          %2738 = dma.vmem_to_hbm [thread:$0]  %s2736, 16, %s2733, %s2723
        $region84: #{lenet_forward.1} parent=79 // pred_fallthru
          _
      $region80: #{lenet_forward.1} parent=5 // pred_fallthru
        _
      %p2739 = scmp.le.s32.totalorder 2, %s24
      // Predicated region
      $region85: #{lenet_forward.1} parent=5 // pred_check
        %p2740 = pneg %p2739
      $region86: #{lenet_forward.1} parent=5 // pred_check_branch
        %2742 = sbr.rel (%p2740) target = $region88
      $region87: #{lenet_forward.1} parent=5 // pred_region
        %s2743 = ssub.s32 %s24, 2
        // Predicated region
        $region89: #{lenet_forward.1} parent=87 // pred_check
          %p2744 = pneg %p373
        $region90: #{lenet_forward.1} parent=87 // pred_check_branch
          %2746 = sbr.rel (%p2744) target = $region92
        $region91: #{lenet_forward.1} parent=87 // pred_region
          %s2747 = sand.u32 %s358, 1
          %s2748 = scalar_lea.sflag [#allocation5], %s2747
          %s2749 = sand.u32 %s358, 1
          %s2750 = scalar_lea.vmem [#allocation4], %s2749
          %2751 = dma.done %s2748, 16
        $region92: #{lenet_forward.1} parent=87 // pred_fallthru
          _
      $region88: #{lenet_forward.1} parent=5 // pred_fallthru
        _
    $region6: #{lenet_forward.1} parent=1 // loop_footer
      %s28 = sadd.s32 1, %s24
    $region7: #{lenet_forward.1} parent=1 // loop_footer_branch
      %23 = sbr.rel target = $region3
    $region8: #{lenet_forward.1} parent=1 // loop_exit
      _
    %2752 = vsyncpa [#allocation5], 1
    %s2753 = scalar_lea.sflag [#allocation5], 1
    %2754 = vsyncpa %s2753, 1

</llo_original>
